<compile_context>
chip_gen: v5e
topology: v5e:2x2
jax: 0.10.0
libtpu: 0.0.40
codegen_flags: <defaults>
</compile_context>

<pallas_src>
import math
import functools

import numpy as np
import jax
import jax.numpy as jnp
from jax import lax
from jax.experimental import pallas as pl
from jax.experimental.pallas import tpu as pltpu

WS = 8                       # RelativeEmbeddings() default window size
_SHIFT = WS // 2
_SQRT_HALF = 0.7071067811865476


# ---------------------------------------------------------------------------
# Pallas kernels
# ---------------------------------------------------------------------------
def _ln_proj_kernel(x_ref, g_ref, b_ref, w_ref, bw_ref, o_ref):
    """LayerNorm (f32 stats) + folded V-projection (W1v @ W2), fused."""
    x = x_ref[...].astype(jnp.float32)
    mu = jnp.mean(x, axis=-1, keepdims=True)
    xc = x - mu
    var = jnp.mean(xc * xc, axis=-1, keepdims=True)
    ln = xc * lax.rsqrt(var + 1e-5) * g_ref[...] + b_ref[...]     # eps = 1e-5
    o_ref[...] = (
        jnp.dot(ln.astype(w_ref.dtype), w_ref[...],
                preferred_element_type=jnp.float32) + bw_ref[...]
    ).astype(o_ref.dtype)


def _win_attn_residual_kernel(p_ref, x_ref, u_ref, o_ref):
    """One 8x8 window: out = x + P @ u.  Window layout comes from the BlockSpec
    index_map (no XLA window_partition), residual add fused in."""
    C = u_ref.shape[-1]
    u = u_ref[...].reshape(WS * WS, C)
    att = jnp.dot(p_ref[...], u, preferred_element_type=jnp.float32)
    x = x_ref[...].reshape(WS * WS, C).astype(jnp.float32)
    o_ref[...] = (x + att).astype(o_ref.dtype).reshape(1, WS, WS, C)


def _mlp_residual_kernel(x_ref, w1_ref, b1_ref, w2_ref, b2_ref, o_ref):
    """MLP (C -> 4C -> C, exact GELU) + residual, full hidden dim resident."""
    x = x_ref[...]
    h = (jnp.dot(x, w1_ref[...], preferred_element_type=jnp.float32)
         + b1_ref[...])
    h = 0.5 * h * (1.0 + lax.erf(h * _SQRT_HALF))          # exact (erf) GELU
    y = jnp.dot(h.astype(w2_ref.dtype), w2_ref[...],
                preferred_element_type=jnp.float32)
    o_ref[...] = (x.astype(jnp.float32) + y + b2_ref[...]).astype(o_ref.dtype)


def _mlp_residual_acc_kernel(x_ref, w1_ref, b1_ref, w2_ref, b2_ref, o_ref,
                             acc_ref):
    """Tiled-hidden fallback (big 4C / f32 on v7x's 64 MiB VMEM)."""
    k = pl.program_id(1)

    @pl.when(k == 0)
    def _():
        acc_ref[...] = x_ref[...].astype(jnp.float32) + b2_ref[...]

    h = (jnp.dot(x_ref[...], w1_ref[...], preferred_element_type=jnp.float32)
         + b1_ref[...])
    h = 0.5 * h * (1.0 + lax.erf(h * _SQRT_HALF))
    acc_ref[...] += jnp.dot(h.astype(w2_ref.dtype), w2_ref[...],
                            preferred_element_type=jnp.float32)

    @pl.when(k == pl.num_programs(1) - 1)
    def _():
        o_ref[...] = acc_ref[...].astype(o_ref.dtype)


# ---------------------------------------------------------------------------
# pallas_call wrappers
# ---------------------------------------------------------------------------
def _row_tile(M, max_tile=512, min_grid=2):
    """Largest multiple-of-8 divisor of M that is <= max_tile while keeping the
    parallel grid >= min_grid (both v7x TensorCores busy)."""
    cap = min(max_tile, M)
    if M >= min_grid * 8:
        cap = min(cap, M // min_grid)
    cap = max(8, (cap // 8) * 8)
    for t in range(cap, 7, -8):
        if M % t == 0:
            return t
    return M


def ln_proj(x2d, gamma, beta, w, bw):
    M, C = x2d.shape
    N = w.shape[1]
    tile = _row_tile(M)
    return pl.pallas_call(
        _ln_proj_kernel,
        out_shape=jax.ShapeDtypeStruct((M, N), x2d.dtype),
        grid=(M // tile,),
        in_specs=[
            pl.BlockSpec((tile, C), lambda i: (i, 0)),
            pl.BlockSpec((1, C), lambda i: (0, 0)),
            pl.BlockSpec((1, C), lambda i: (0, 0)),
            pl.BlockSpec((C, N), lambda i: (0, 0)),
            pl.BlockSpec((1, N), lambda i: (0, 0)),
        ],
        out_specs=pl.BlockSpec((tile, N), lambda i: (i, 0)),
        compiler_params=pltpu.CompilerParams(dimension_semantics=("parallel",)),
    )(x2d, gamma, beta, w, bw)


def window_attn_residual(P, x4, u4):
    """out[b, win(i,j)] = x[b, win(i,j)] + P @ u[b, win(i,j)] — window layout is
    expressed purely through the BlockSpec index_map."""
    B, H, W, C = x4.shape
    grid = (B, H // WS, W // WS)
    blk = pl.BlockSpec((1, WS, WS, C), lambda b, i, j: (b, i, j, 0))
    return pl.pallas_call(
        _win_attn_residual_kernel,
        out_shape=jax.ShapeDtypeStruct((B, H, W, C), x4.dtype),
        grid=grid,
        in_specs=[
            pl.BlockSpec((WS * WS, WS * WS), lambda b, i, j: (0, 0)),
            blk,   # residual input
            blk,   # folded V projection
        ],
        out_specs=pl.BlockSpec((1, WS, WS, C), lambda b, i, j: (b, i, j, 0)),
        compiler_params=pltpu.CompilerParams(
            dimension_semantics=("parallel", "parallel", "parallel")),
    )(P, x4, u4)


def mlp_residual(x2d, w1, b1, w2, b2, vmem_budget=24 << 20):
    M, C = x2d.shape
    Ch = w1.shape[1]
    tile = _row_tile(M)
    bpe = jnp.dtype(x2d.dtype).itemsize

    def vmem_need(hs):
        weights = 2 * (C * hs + hs * C + hs + C) * bpe      # double-buffered slabs
        acts = 2 * (2 * tile * C) * bpe                     # x + out blocks
        interm = tile * hs * 4 + tile * C * 4               # f32 hidden + acc
        return weights + acts + interm

    # Prefer a single hidden step (no reduction axis / no acc scratch) when the
    # full weights fit the conservative budget; otherwise 128-aligned slabs.
    hs = Ch
    while (hs > 128 and hs % 2 == 0 and (hs // 2) % 128 == 0
           and vmem_need(hs) > vmem_budget):
        hs //= 2

    if hs == Ch:
        return pl.pallas_call(
            _mlp_residual_kernel,
            out_shape=jax.ShapeDtypeStruct((M, C), x2d.dtype),
            grid=(M // tile,),
            in_specs=[
                pl.BlockSpec((tile, C), lambda i: (i, 0)),
                pl.BlockSpec((C, Ch), lambda i: (0, 0)),
                pl.BlockSpec((1, Ch), lambda i: (0, 0)),
                pl.BlockSpec((Ch, C), lambda i: (0, 0)),
                pl.BlockSpec((1, C), lambda i: (0, 0)),
            ],
            out_specs=pl.BlockSpec((tile, C), lambda i: (i, 0)),
            compiler_params=pltpu.CompilerParams(
                dimension_semantics=("parallel",)),
        )(x2d, w1, b1, w2, b2)

    return pl.pallas_call(
        _mlp_residual_acc_kernel,
        out_shape=jax.ShapeDtypeStruct((M, C), x2d.dtype),
        grid=(M // tile, Ch // hs),
        in_specs=[
            pl.BlockSpec((tile, C), lambda i, k: (i, 0)),
            pl.BlockSpec((C, hs), lambda i, k: (0, k)),
            pl.BlockSpec((1, hs), lambda i, k: (0, k)),
            pl.BlockSpec((hs, C), lambda i, k: (k, 0)),
            pl.BlockSpec((1, C), lambda i, k: (0, 0)),
        ],
        out_specs=pl.BlockSpec((tile, C), lambda i, k: (i, 0)),
        scratch_shapes=[pltpu.VMEM((tile, C), jnp.float32)],
        compiler_params=pltpu.CompilerParams(
            dimension_semantics=("parallel", "arbitrary")),
    )(x2d, w1, b1, w2, b2)


# ---------------------------------------------------------------------------
# RelativeEmbeddings (exact module semantics) + one-time parameter prep
# ---------------------------------------------------------------------------
def _relative_position_index(ws=WS):
    coords = np.stack(np.meshgrid(np.arange(ws), np.arange(ws), indexing="ij"))
    flat = coords.reshape(2, -1)
    rel = flat[:, :, None] - flat[:, None, :]
    rel = rel.transpose(1, 2, 0).copy()
    rel[:, :, 0] += ws - 1
    rel[:, :, 1] += ws - 1
    rel[:, :, 0] *= 2 * ws - 1
    return rel.sum(-1)                                   # (ws^2, ws^2)


_REL_INDEX = jnp.asarray(_relative_position_index().reshape(-1))


def _relative_embeddings(table):
    """RelativeEmbeddings.forward: gather (225,1) table -> (1, 64, 64) bias."""
    bias = table[_REL_INDEX].reshape(WS * WS, WS * WS, -1)
    return jnp.transpose(bias, (2, 0, 1))


def _shifted_row_mask():
    half = WS * (WS // 2)
    m = np.zeros((WS * WS, WS * WS), np.float32)
    m[-half:, :-half] = -np.inf
    m[:-half, -half:] = -np.inf
    return jnp.asarray(m)


def _softmax_bias(table, mask=None):
    """The bias IS the attention-logits matrix here, so its softmax is
    input-independent and computed once."""
    logits = _relative_embeddings(table)[0].astype(jnp.float32)
    if mask is not None:
        logits = logits + mask
    logits = logits - jnp.max(logits, axis=-1, keepdims=True)
    p = jnp.exp(logits)
    return p / jnp.sum(p, axis=-1, keepdims=True)


def prepare_params(params, dtype=jnp.float32):
    """One-time prep: bias gather + softmax, W2 folded into the V-slice of the
    interleaved 3C projection, biases reshaped for lane broadcast."""
    C = params["ln_gamma"].shape[0]
    prep = {
        "ln_gamma": params["ln_gamma"].reshape(1, C).astype(dtype),
        "ln_beta": params["ln_beta"].reshape(1, C).astype(dtype),
        "P_la": _softmax_bias(params["la_bias_table"]).astype(dtype),
        "P_sw_nomask": _softmax_bias(params["sw_bias_table"]).astype(dtype),
        "P_sw_mask": _softmax_bias(params["sw_bias_table"],
                                   _shifted_row_mask()).astype(dtype),
    }
    for p in ("la", "sw"):
        w1v = params[f"{p}_w1"][:, 2::3].astype(jnp.float32)   # V slice of qkv
        b1v = params[f"{p}_b1"][2::3].astype(jnp.float32)
        w2 = params[f"{p}_w2"].astype(jnp.float32)
        b2 = params[f"{p}_b2"].astype(jnp.float32)
        # Fold proj2 into the V projection (softmax rows of P sum to 1; W2 acts
        # on channels):  x + P@(LN@W1v+b1v)@W2 + b2
        #            ==  x + P@(LN@(W1v@W2) + (b1v@W2 + b2))
        prep[f"{p}_wfold"] = (w1v @ w2).astype(dtype)
        prep[f"{p}_bfold"] = (b1v @ w2 + b2).reshape(1, C).astype(dtype)
    for m in ("mlp1", "mlp2"):
        prep[f"{m}_w1"] = params[f"{m}_w1"].astype(dtype)
        prep[f"{m}_b1"] = params[f"{m}_b1"].reshape(1, -1).astype(dtype)
        prep[f"{m}_w2"] = params[f"{m}_w2"].astype(dtype)
        prep[f"{m}_b2"] = params[f"{m}_b2"].reshape(1, C).astype(dtype)
    return prep


# ---------------------------------------------------------------------------
# Window layout helpers (used only by the pure-JAX reference)
# ---------------------------------------------------------------------------
def window_partition(x_bhwc, ws):
    B, H, W, C = x_bhwc.shape
    x = x_bhwc.reshape(B, H // ws, ws, W // ws, ws, C)
    x = x.transpose(0, 1, 3, 2, 4, 5)
    return x.reshape(-1, ws * ws, C)


def window_unpartition(win, ws, B, H, W, C):
    x = win.reshape(B, H // ws, W // ws, ws, ws, C)
    x = x.transpose(0, 1, 3, 2, 4, 5)
    return x.reshape(B, H, W, C)


# ---------------------------------------------------------------------------
# Forward pass (Pallas)
# ---------------------------------------------------------------------------
def swin_encoder_block(x, prep, mask=True):
    B, L, C = x.shape
    H = W = int(math.sqrt(L))
    assert H * W == L and H % WS == 0 and W % WS == 0
    g, beta = prep["ln_gamma"], prep["ln_beta"]

    def branch(x3, pfx, P, shift):
        x2 = x3.reshape(B * L, C)
        # LayerNorm + folded projection (LN output never touches HBM).
        u = ln_proj(x2, g, beta, prep[f"{pfx}_wfold"], prep[f"{pfx}_bfold"])
        x4 = x3.reshape(B, H, W, C)
        u4 = u.reshape(B, H, W, C)
        if shift:
            x4 = jnp.roll(x4, (-_SHIFT, -_SHIFT), axis=(1, 2))
            u4 = jnp.roll(u4, (-_SHIFT, -_SHIFT), axis=(1, 2))
        out4 = window_attn_residual(P, x4, u4)       # out = x + P @ u per window
        if shift:
            out4 = jnp.roll(out4, (_SHIFT, _SHIFT), axis=(1, 2))
        return out4.reshape(B, L, C)

    # x = x + W-MSA(LN(x))
    x = branch(x, "la", prep["P_la"], shift=False)
    # x = x + MLP1(x)
    x = mlp_residual(x.reshape(B * L, C), prep["mlp1_w1"], prep["mlp1_b1"],
                     prep["mlp1_w2"], prep["mlp1_b2"]).reshape(B, L, C)
    # x = x + SW-MSA(LN(x))   (same LayerNorm params, as in the reference)
    P_sw = prep["P_sw_mask"] if mask else prep["P_sw_nomask"]
    x = branch(x, "sw", P_sw, shift=mask)
    # x = x + MLP2(x)
    x = mlp_residual(x.reshape(B * L, C), prep["mlp2_w1"], prep["mlp2_b1"],
                     prep["mlp2_w2"], prep["mlp2_b2"]).reshape(B, L, C)
    return x


# ---------------------------------------------------------------------------
# Pure-JAX reference (original, unfolded formulation) — correctness check
# ---------------------------------------------------------------------------
def reference_block(x, params, mask=True):
    B, L, C = x.shape
    H = W = int(math.sqrt(L))
    g = params["ln_gamma"].reshape(1, C)
    beta = params["ln_beta"].reshape(1, C)

    def ln(t):
        mu = jnp.mean(t, -1, keepdims=True)
        var = jnp.mean((t - mu) ** 2, -1, keepdims=True)
        return (t - mu) * lax.rsqrt(var + 1e-5) * g + beta

    def branch(x3, pfx, P, shift):
        w1v = params[f"{pfx}_w1"][:, 2::3]
        b1v = params[f"{pfx}_b1"][2::3]
        v = ln(x3) @ w1v + b1v
        v = v.reshape(B, H, W, C)
        if shift:
            v = jnp.roll(v, (-_SHIFT, -_SHIFT), axis=(1, 2))
        vw = window_partition(v, WS)
        att = jnp.einsum("qk,nkc->nqc", P, vw)
        att = window_unpartition(att, WS, B, H, W, C)
        if shift:
            att = jnp.roll(att, (_SHIFT, _SHIFT), axis=(1, 2))
        att = att.reshape(B, L, C)
        return x3 + att @ params[f"{pfx}_w2"] + params[f"{pfx}_b2"]

    def mlp(x3, p):
        h = x3 @ params[f"{p}_w1"] + params[f"{p}_b1"]
        h = 0.5 * h * (1.0 + lax.erf(h * _SQRT_HALF))
        return x3 + h @ params[f"{p}_w2"] + params[f"{p}_b2"]

    x = branch(x, "la", _softmax_bias(params["la_bias_table"]), False)
    x = mlp(x, "mlp1")
    m = _shifted_row_mask() if mask else None
    x = branch(x, "sw", _softmax_bias(params["sw_bias_table"], m), mask)
    x = mlp(x, "mlp2")
    return x


# ---------------------------------------------------------------------------
# Deterministic synthetic parameter init (shapes match the nn.Module __init__)
# ---------------------------------------------------------------------------
def init_params(key, C):
    ks = jax.random.split(key, 16)
    n = (2 * WS - 1) ** 2
    s = 0.02
    return {
        "ln_gamma": jnp.ones((C,), jnp.float32),
        "ln_beta": jnp.zeros((C,), jnp.float32),
        "la_w1": s * jax.random.normal(ks[0], (C, 3 * C), jnp.float32),
        "la_b1": s * jax.random.normal(ks[1], (3 * C,), jnp.float32),
        "la_w2": s * jax.random.normal(ks[2], (C, C), jnp.float32),
        "la_b2": s * jax.random.normal(ks[3], (C,), jnp.float32),
        "la_bias_table": jax.random.normal(ks[4], (n, 1), jnp.float32),
        "sw_w1": s * jax.random.normal(ks[5], (C, 3 * C), jnp.float32),
        "sw_b1": s * jax.random.normal(ks[6], (3 * C,), jnp.float32),
        "sw_w2": s * jax.random.normal(ks[7], (C, C), jnp.float32),
        "sw_b2": s * jax.random.normal(ks[8], (C,), jnp.float32),
        "sw_bias_table": jax.random.normal(ks[9], (n, 1), jnp.float32),
        "mlp1_w1": s * jax.random.normal(ks[10], (C, 4 * C), jnp.float32),
        "mlp1_b1": jnp.zeros((4 * C,), jnp.float32),
        "mlp1_w2": s * jax.random.normal(ks[11], (4 * C, C), jnp.float32),
        "mlp1_b2": jnp.zeros((C,), jnp.float32),
        "mlp2_w1": s * jax.random.normal(ks[12], (C, 4 * C), jnp.float32),
        "mlp2_b1": jnp.zeros((4 * C,), jnp.float32),
        "mlp2_w2": s * jax.random.normal(ks[13], (4 * C, C), jnp.float32),
        "mlp2_b2": jnp.zeros((C,), jnp.float32),
    }


if __name__ == "__main__":
    key = jax.random.PRNGKey(0)
    B, C = 2, 32
    Himg = Wimg = 16                  # 16x16 spatial -> 2x2 windows of 8x8
    L = Himg * Wimg
    key, xk, pk = jax.random.split(key, 3)
    x = jax.random.normal(xk, (B, L, C), jnp.float32)
    params = init_params(pk, C)
    # For v6e/v7x pass dtype=jnp.bfloat16 here (and cast x once) to halve
    # HBM/VMEM traffic; all kernels already accumulate in f32.  Demo stays f32
    # so the fold can be validated against the unfolded PyTorch-style reference.
    prep = prepare_params(params, dtype=jnp.float32)

    fwd = jax.jit(functools.partial(swin_encoder_block, mask=True))
    out = fwd(x, prep)
    jax.block_until_ready(out)
    assert out.shape == (B, L, C) and out.dtype == jnp.float32

    ref = reference_block(x, params, mask=True)
    np.testing.assert_allclose(np.asarray(out), np.asarray(ref),
                               rtol=2e-3, atol=2e-3)
    print("KERNEL_OK")
</pallas_src>

<mosaic_0001>
module attributes {stable_mosaic.version = 11 : i64} {
  func.func @_ln_proj_kernel(%arg0: i32, %arg1: memref<256x32xf32, #tpu.memory_space<vmem>>, %arg2: memref<1x32xf32, #tpu.memory_space<vmem>>, %arg3: memref<1x32xf32, #tpu.memory_space<vmem>>, %arg4: memref<32x32xf32, #tpu.memory_space<vmem>>, %arg5: memref<1x32xf32, #tpu.memory_space<vmem>>, %arg6: memref<256x32xf32, #tpu.memory_space<vmem>>) attributes {dimension_semantics = [#tpu.dimension_semantics<parallel>], iteration_bounds = array<i64: 2>, scalar_prefetch = 0 : i64, scratch_operands = 0 : i64, tpu.core_type = #tpu.core_type<tc>, window_params = [{transform_indices = @transform_0, window_bounds = array<i64: 256, 32>}, {pipeline_mode = #tpu.pipeline_mode<synchronous>, transform_indices = @transform_1, window_bounds = array<i64: 1, 32>}, {pipeline_mode = #tpu.pipeline_mode<synchronous>, transform_indices = @transform_2, window_bounds = array<i64: 1, 32>}, {pipeline_mode = #tpu.pipeline_mode<synchronous>, transform_indices = @transform_3, window_bounds = array<i64: 32, 32>}, {pipeline_mode = #tpu.pipeline_mode<synchronous>, transform_indices = @transform_4, window_bounds = array<i64: 1, 32>}, {transform_indices = @transform_5, window_bounds = array<i64: 256, 32>}]} {
    %c0 = arith.constant 0 : index
    %c0_0 = arith.constant 0 : index
    %0 = vector.load %arg1[%c0, %c0_0] : memref<256x32xf32, #tpu.memory_space<vmem>>, vector<256x32xf32>
    %cst = arith.constant dense<0.000000e+00> : vector<256xf32>
    %1 = vector.multi_reduction <add>, %0, %cst [1] : vector<256x32xf32> to vector<256xf32>
    %2 = vector.shape_cast %1 : vector<256xf32> to vector<256x1xf32>
    %cst_1 = arith.constant 3.200000e+01 : f32
    %3 = vector.broadcast %cst_1 : f32 to vector<256x1xf32>
    %4 = arith.divf %2, %3 : vector<256x1xf32>
    %5 = vector.broadcast %4 : vector<256x1xf32> to vector<256x32xf32>
    %6 = arith.subf %0, %5 : vector<256x32xf32>
    %7 = arith.mulf %6, %6 : vector<256x32xf32>
    %cst_2 = arith.constant dense<0.000000e+00> : vector<256xf32>
    %8 = vector.multi_reduction <add>, %7, %cst_2 [1] : vector<256x32xf32> to vector<256xf32>
    %9 = vector.shape_cast %8 : vector<256xf32> to vector<256x1xf32>
    %cst_3 = arith.constant 3.200000e+01 : f32
    %10 = vector.broadcast %cst_3 : f32 to vector<256x1xf32>
    %11 = arith.divf %9, %10 : vector<256x1xf32>
    %cst_4 = arith.constant 9.99999974E-6 : f32
    %12 = vector.broadcast %cst_4 : f32 to vector<256x1xf32>
    %13 = arith.addf %11, %12 : vector<256x1xf32>
    %14 = math.rsqrt %13 : vector<256x1xf32>
    %15 = vector.broadcast %14 : vector<256x1xf32> to vector<256x32xf32>
    %16 = arith.mulf %6, %15 : vector<256x32xf32>
    %c0_5 = arith.constant 0 : index
    %c0_6 = arith.constant 0 : index
    %17 = vector.load %arg2[%c0_5, %c0_6] : memref<1x32xf32, #tpu.memory_space<vmem>>, vector<1x32xf32>
    %18 = vector.broadcast %17 : vector<1x32xf32> to vector<256x32xf32>
    %19 = arith.mulf %16, %18 : vector<256x32xf32>
    %c0_7 = arith.constant 0 : index
    %c0_8 = arith.constant 0 : index
    %20 = vector.load %arg3[%c0_7, %c0_8] : memref<1x32xf32, #tpu.memory_space<vmem>>, vector<1x32xf32>
    %21 = vector.broadcast %20 : vector<1x32xf32> to vector<256x32xf32>
    %22 = arith.addf %19, %21 : vector<256x32xf32>
    %c0_9 = arith.constant 0 : index
    %c0_10 = arith.constant 0 : index
    %23 = vector.load %arg4[%c0_9, %c0_10] : memref<32x32xf32, #tpu.memory_space<vmem>>, vector<32x32xf32>
    %cst_11 = arith.constant dense<0.000000e+00> : vector<256x32xf32>
    %24 = tpu.matmul %22, %23, %cst_11 {dimension_numbers = #tpu.dot_dimension_numbers<[1], [0], [0], [1], [0, 0, 1, 1], [], []>} : vector<256x32xf32>, vector<32x32xf32>, vector<256x32xf32> -> vector<256x32xf32>
    %c0_12 = arith.constant 0 : index
    %c0_13 = arith.constant 0 : index
    %25 = vector.load %arg5[%c0_12, %c0_13] : memref<1x32xf32, #tpu.memory_space<vmem>>, vector<1x32xf32>
    %26 = vector.broadcast %25 : vector<1x32xf32> to vector<256x32xf32>
    %27 = arith.addf %24, %26 : vector<256x32xf32>
    %c0_14 = arith.constant 0 : index
    %c0_15 = arith.constant 0 : index
    %28 = vector.load %arg6[%c0_14, %c0_15] : memref<256x32xf32, #tpu.memory_space<vmem>>, vector<256x32xf32>
    tpu.vector_store %arg6[%c0_14, %c0_15], %27 {strides = array<i32>} : memref<256x32xf32, #tpu.memory_space<vmem>>, vector<256x32xf32>,
    return
  }
  func.func @transform_0(%arg0: i32) -> (i32, i32) {
    %c0_i32 = arith.constant 0 : i32
    %c0_i32_0 = arith.constant 0 : i32
    return %arg0, %c0_i32 : i32, i32
  }
  func.func @transform_1(%arg0: i32) -> (i32, i32) {
    %c0_i32 = arith.constant 0 : i32
    %c0_i32_0 = arith.constant 0 : i32
    %c0_i32_1 = arith.constant 0 : i32
    return %c0_i32, %c0_i32_0 : i32, i32
  }
  func.func @transform_2(%arg0: i32) -> (i32, i32) {
    %c0_i32 = arith.constant 0 : i32
    %c0_i32_0 = arith.constant 0 : i32
    %c0_i32_1 = arith.constant 0 : i32
    return %c0_i32, %c0_i32_0 : i32, i32
  }
  func.func @transform_3(%arg0: i32) -> (i32, i32) {
    %c0_i32 = arith.constant 0 : i32
    %c0_i32_0 = arith.constant 0 : i32
    %c0_i32_1 = arith.constant 0 : i32
    return %c0_i32, %c0_i32_0 : i32, i32
  }
  func.func @transform_4(%arg0: i32) -> (i32, i32) {
    %c0_i32 = arith.constant 0 : i32
    %c0_i32_0 = arith.constant 0 : i32
    %c0_i32_1 = arith.constant 0 : i32
    return %c0_i32, %c0_i32_0 : i32, i32
  }
  func.func @transform_5(%arg0: i32) -> (i32, i32) {
    %c0_i32 = arith.constant 0 : i32
    %c0_i32_0 = arith.constant 0 : i32
    return %arg0, %c0_i32 : i32, i32
  }
}

module attributes {stable_mosaic.version = 11 : i64} {
  func.func @_win_attn_residual_kernel(%arg0: i32, %arg1: i32, %arg2: i32, %arg3: memref<64x64xf32, #tpu.memory_space<vmem>>, %arg4: memref<1x8x8x32xf32, #tpu.memory_space<vmem>>, %arg5: memref<1x8x8x32xf32, #tpu.memory_space<vmem>>, %arg6: memref<1x8x8x32xf32, #tpu.memory_space<vmem>>) attributes {dimension_semantics = [#tpu.dimension_semantics<parallel>, #tpu.dimension_semantics<parallel>, #tpu.dimension_semantics<parallel>], iteration_bounds = array<i64: 2, 2, 2>, scalar_prefetch = 0 : i64, scratch_operands = 0 : i64, tpu.core_type = #tpu.core_type<tc>, window_params = [{pipeline_mode = #tpu.pipeline_mode<synchronous>, transform_indices = @transform_0, window_bounds = array<i64: 64, 64>}, {transform_indices = @transform_1, window_bounds = array<i64: 1, 8, 8, 32>}, {transform_indices = @transform_2, window_bounds = array<i64: 1, 8, 8, 32>}, {transform_indices = @transform_3, window_bounds = array<i64: 1, 8, 8, 32>}]} {
    %c0 = arith.constant 0 : index
    %c0_0 = arith.constant 0 : index
    %c0_1 = arith.constant 0 : index
    %c0_2 = arith.constant 0 : index
    %0 = vector.load %arg5[%c0, %c0_0, %c0_1, %c0_2] : memref<1x8x8x32xf32, #tpu.memory_space<vmem>>, vector<1x8x8x32xf32>
    %1 = vector.shape_cast %0 : vector<1x8x8x32xf32> to vector<64x32xf32>
    %c0_3 = arith.constant 0 : index
    %c0_4 = arith.constant 0 : index
    %2 = vector.load %arg3[%c0_3, %c0_4] : memref<64x64xf32, #tpu.memory_space<vmem>>, vector<64x64xf32>
    %cst = arith.constant dense<0.000000e+00> : vector<64x32xf32>
    %3 = tpu.matmul %2, %1, %cst {dimension_numbers = #tpu.dot_dimension_numbers<[1], [0], [0], [1], [0, 0, 1, 1], [], []>} : vector<64x64xf32>, vector<64x32xf32>, vector<64x32xf32> -> vector<64x32xf32>
    %c0_5 = arith.constant 0 : index
    %c0_6 = arith.constant 0 : index
    %c0_7 = arith.constant 0 : index
    %c0_8 = arith.constant 0 : index
    %4 = vector.load %arg4[%c0_5, %c0_6, %c0_7, %c0_8] : memref<1x8x8x32xf32, #tpu.memory_space<vmem>>, vector<1x8x8x32xf32>
    %5 = vector.shape_cast %4 : vector<1x8x8x32xf32> to vector<64x32xf32>
    %6 = arith.addf %5, %3 : vector<64x32xf32>
    %7 = vector.shape_cast %6 : vector<64x32xf32> to vector<1x8x8x32xf32>
    %c0_9 = arith.constant 0 : index
    %c0_10 = arith.constant 0 : index
    %c0_11 = arith.constant 0 : index
    %c0_12 = arith.constant 0 : index
    %8 = vector.load %arg6[%c0_9, %c0_10, %c0_11, %c0_12] : memref<1x8x8x32xf32, #tpu.memory_space<vmem>>, vector<1x8x8x32xf32>
    tpu.vector_store %arg6[%c0_9, %c0_10, %c0_11, %c0_12], %7 {strides = array<i32>} : memref<1x8x8x32xf32, #tpu.memory_space<vmem>>, vector<1x8x8x32xf32>,
    return
  }
  func.func @transform_0(%arg0: i32, %arg1: i32, %arg2: i32) -> (i32, i32) {
    %c0_i32 = arith.constant 0 : i32
    %c0_i32_0 = arith.constant 0 : i32
    %c0_i32_1 = arith.constant 0 : i32
    return %c0_i32, %c0_i32_0 : i32, i32
  }
  func.func @transform_1(%arg0: i32, %arg1: i32, %arg2: i32) -> (i32, i32, i32, i32) {
    %c0_i32 = arith.constant 0 : i32
    %c0_i32_0 = arith.constant 0 : i32
    return %arg0, %arg1, %arg2, %c0_i32 : i32, i32, i32, i32
  }
  func.func @transform_2(%arg0: i32, %arg1: i32, %arg2: i32) -> (i32, i32, i32, i32) {
    %c0_i32 = arith.constant 0 : i32
    %c0_i32_0 = arith.constant 0 : i32
    return %arg0, %arg1, %arg2, %c0_i32 : i32, i32, i32, i32
  }
  func.func @transform_3(%arg0: i32, %arg1: i32, %arg2: i32) -> (i32, i32, i32, i32) {
    %c0_i32 = arith.constant 0 : i32
    %c0_i32_0 = arith.constant 0 : i32
    return %arg0, %arg1, %arg2, %c0_i32 : i32, i32, i32, i32
  }
}

module attributes {stable_mosaic.version = 11 : i64} {
  func.func @_mlp_residual_kernel(%arg0: i32, %arg1: memref<256x32xf32, #tpu.memory_space<vmem>>, %arg2: memref<32x128xf32, #tpu.memory_space<vmem>>, %arg3: memref<1x128xf32, #tpu.memory_space<vmem>>, %arg4: memref<128x32xf32, #tpu.memory_space<vmem>>, %arg5: memref<1x32xf32, #tpu.memory_space<vmem>>, %arg6: memref<256x32xf32, #tpu.memory_space<vmem>>) attributes {dimension_semantics = [#tpu.dimension_semantics<parallel>], iteration_bounds = array<i64: 2>, scalar_prefetch = 0 : i64, scratch_operands = 0 : i64, tpu.core_type = #tpu.core_type<tc>, window_params = [{transform_indices = @transform_0, window_bounds = array<i64: 256, 32>}, {pipeline_mode = #tpu.pipeline_mode<synchronous>, transform_indices = @transform_1, window_bounds = array<i64: 32, 128>}, {pipeline_mode = #tpu.pipeline_mode<synchronous>, transform_indices = @transform_2, window_bounds = array<i64: 1, 128>}, {pipeline_mode = #tpu.pipeline_mode<synchronous>, transform_indices = @transform_3, window_bounds = array<i64: 128, 32>}, {pipeline_mode = #tpu.pipeline_mode<synchronous>, transform_indices = @transform_4, window_bounds = array<i64: 1, 32>}, {transform_indices = @transform_5, window_bounds = array<i64: 256, 32>}]} {
    %c0 = arith.constant 0 : index
    %c0_0 = arith.constant 0 : index
    %0 = vector.load %arg1[%c0, %c0_0] : memref<256x32xf32, #tpu.memory_space<vmem>>, vector<256x32xf32>
    %c0_1 = arith.constant 0 : index
    %c0_2 = arith.constant 0 : index
    %1 = vector.load %arg2[%c0_1, %c0_2] : memref<32x128xf32, #tpu.memory_space<vmem>>, vector<32x128xf32>
    %cst = arith.constant dense<0.000000e+00> : vector<256x128xf32>
    %2 = tpu.matmul %0, %1, %cst {dimension_numbers = #tpu.dot_dimension_numbers<[1], [0], [0], [1], [0, 0, 1, 1], [], []>} : vector<256x32xf32>, vector<32x128xf32>, vector<256x128xf32> -> vector<256x128xf32>
    %c0_3 = arith.constant 0 : index
    %c0_4 = arith.constant 0 : index
    %3 = vector.load %arg3[%c0_3, %c0_4] : memref<1x128xf32, #tpu.memory_space<vmem>>, vector<1x128xf32>
    %4 = vector.broadcast %3 : vector<1x128xf32> to vector<256x128xf32>
    %5 = arith.addf %2, %4 : vector<256x128xf32>
    %cst_5 = arith.constant 5.000000e-01 : f32
    %6 = vector.broadcast %cst_5 : f32 to vector<256x128xf32>
    %7 = arith.mulf %6, %5 : vector<256x128xf32>
    %cst_6 = arith.constant 0.707106769 : f32
    %8 = vector.broadcast %cst_6 : f32 to vector<256x128xf32>
    %9 = arith.mulf %5, %8 : vector<256x128xf32>
    %10 = math.erf %9 : vector<256x128xf32>
    %cst_7 = arith.constant 1.000000e+00 : f32
    %11 = vector.broadcast %cst_7 : f32 to vector<256x128xf32>
    %12 = arith.addf %11, %10 : vector<256x128xf32>
    %13 = arith.mulf %7, %12 : vector<256x128xf32>
    %c0_8 = arith.constant 0 : index
    %c0_9 = arith.constant 0 : index
    %14 = vector.load %arg4[%c0_8, %c0_9] : memref<128x32xf32, #tpu.memory_space<vmem>>, vector<128x32xf32>
    %cst_10 = arith.constant dense<0.000000e+00> : vector<256x32xf32>
    %15 = tpu.matmul %13, %14, %cst_10 {dimension_numbers = #tpu.dot_dimension_numbers<[1], [0], [0], [1], [0, 0, 1, 1], [], []>} : vector<256x128xf32>, vector<128x32xf32>, vector<256x32xf32> -> vector<256x32xf32>
    %16 = arith.addf %0, %15 : vector<256x32xf32>
    %c0_11 = arith.constant 0 : index
    %c0_12 = arith.constant 0 : index
    %17 = vector.load %arg5[%c0_11, %c0_12] : memref<1x32xf32, #tpu.memory_space<vmem>>, vector<1x32xf32>
    %18 = vector.broadcast %17 : vector<1x32xf32> to vector<256x32xf32>
    %19 = arith.addf %16, %18 : vector<256x32xf32>
    %c0_13 = arith.constant 0 : index
    %c0_14 = arith.constant 0 : index
    %20 = vector.load %arg6[%c0_13, %c0_14] : memref<256x32xf32, #tpu.memory_space<vmem>>, vector<256x32xf32>
    tpu.vector_store %arg6[%c0_13, %c0_14], %19 {strides = array<i32>} : memref<256x32xf32, #tpu.memory_space<vmem>>, vector<256x32xf32>,
    return
  }
  func.func @transform_0(%arg0: i32) -> (i32, i32) {
    %c0_i32 = arith.constant 0 : i32
    %c0_i32_0 = arith.constant 0 : i32
    return %arg0, %c0_i32 : i32, i32
  }
  func.func @transform_1(%arg0: i32) -> (i32, i32) {
    %c0_i32 = arith.constant 0 : i32
    %c0_i32_0 = arith.constant 0 : i32
    %c0_i32_1 = arith.constant 0 : i32
    return %c0_i32, %c0_i32_0 : i32, i32
  }
  func.func @transform_2(%arg0: i32) -> (i32, i32) {
    %c0_i32 = arith.constant 0 : i32
    %c0_i32_0 = arith.constant 0 : i32
    %c0_i32_1 = arith.constant 0 : i32
    return %c0_i32, %c0_i32_0 : i32, i32
  }
  func.func @transform_3(%arg0: i32) -> (i32, i32) {
    %c0_i32 = arith.constant 0 : i32
    %c0_i32_0 = arith.constant 0 : i32
    %c0_i32_1 = arith.constant 0 : i32
    return %c0_i32, %c0_i32_0 : i32, i32
  }
  func.func @transform_4(%arg0: i32) -> (i32, i32) {
    %c0_i32 = arith.constant 0 : i32
    %c0_i32_0 = arith.constant 0 : i32
    %c0_i32_1 = arith.constant 0 : i32
    return %c0_i32, %c0_i32_0 : i32, i32
  }
  func.func @transform_5(%arg0: i32) -> (i32, i32) {
    %c0_i32 = arith.constant 0 : i32
    %c0_i32_0 = arith.constant 0 : i32
    return %arg0, %c0_i32 : i32, i32
  }
}

</mosaic_0001>

<llo_original>
// kernel: swin_encoder_block.7
$region0: #{swin_encoder_block.7}
  #allocation0 [shape = 'u32[]', space=smem, size = 0x4, offset = 0x4, fixed_abs, tag = 'smem constant byte address 0x4 - core index']
  #allocation1 [shape = 'u32[72,128]{1,0:T(1,128)}', space=vmem, size = 0x9000, scoped, tag = 'internal scratch']
  %s0 = inlined_call_operand.vmem [shape: f32[64,64], index: 0, kind: input, shape index: {}]
  %s1 = inlined_call_operand.vmem [shape: f32[2,16,16,32], index: 1, kind: input, shape index: {}]
  %s2 = inlined_call_operand.vmem [shape: f32[2,16,16,32], index: 2, kind: input, shape index: {}]
  %s3 = inlined_call_operand.vmem [shape: f32[2,16,16,32], index: 3, kind: output, shape index: {}]
  %s4 = sld [smem:[#allocation0]]
  $region155: #{swin_encoder_block.7} parent=0
    _
  %s6 = ssub.s32 1, %s4
  %s7 = scalar_select 0, %s6, %s4
  $region1: #{swin_encoder_block.7} parent=0
    #allocation2 [shape = 'u8[65536]{0}', space=vmem, size = 0x10000, scoped, tag = 'input window, operand 1']
    #allocation3 [shape = 'u8[65536]{0}', space=vmem, size = 0x10000, scoped, tag = 'input window, operand 2']
    #allocation4 [shape = 'u8[65536]{0}', space=vmem, size = 0x10000, scoped, tag = 'output window, operand 0']
    loop: start=0, step=1, limit=10
    $region2: #{swin_encoder_block.7} parent=1 // loop_pre_header
      _
    $region3: #{swin_encoder_block.7} parent=1 // loop_header
      %s9 = sphi 0, %s13
      %p10 = scmp.ge.s32.totalorder %s9, 10
      %s16 = sphi 0, %s35
      %s17 = sphi 0, %s31
      %s18 = sphi 0, %s27
      %s19 = sphi 0, %s16
      %s20 = sphi 0, %s17
      %s21 = sphi 0, %s18
      %s22 = sphi 0, %s19
      %s23 = sphi 0, %s20
      %s24 = sphi 0, %s21
      %s36 = sphi 0, %s36
      %s38 = sphi 0, %s36
      %s39 = sphi 0, %s38
      %s53 = sphi 0, %s39
      %s63 = sphi 0, %s65
      %s66 = sphi 0, %s63
      %s67 = sphi 0, %s66
      %s83 = sphi 0, %s67
      %s93 = sphi 0, %s95
      %s96 = sphi 0, %s93
      %s97 = sphi 0, %s96
      %s113 = sphi 0, %s97
      %s123 = sphi 0, %s125
      %s126 = sphi 0, %s123
      %s127 = sphi 0, %s126
      %s143 = sphi 0, %s127
    $region4: #{swin_encoder_block.7} parent=1 // loop_header_branch
      %12 = sbr.rel (%p10) target = $region8
    $region5: #{swin_encoder_block.7} parent=1 // loop_body
      %s14 = ssub.s32 %s9, 1
      %s15 = ssub.s32 %s9, 2
      %s25 = sadd.s32 1, %s18
      %p26 = scmp.ge.s32.totalorder %s25, 2
      %s27 = scalar_select %p26, 0, %s25
      %s28 = sadd.s32 1, %s17
      %s29 = scalar_select %p26, %s28, %s17
      %p30 = scmp.ge.s32.totalorder %s29, 2
      %s31 = scalar_select %p30, 0, %s29
      %s32 = sadd.s32 1, %s16
      %s33 = scalar_select %p30, %s32, %s16
      %p34 = scmp.ge.s32.totalorder %s33, 2
      %s35 = scalar_select %p34, 0, %s33
      %s37 = sadd.s32 %s36, 1
      %p40 = scmp.eq.s32.totalorder %s9, 7
      %p41 = scmp.ne.s32.totalorder %s36, %s38
      %p42 = scmp.eq.s32.totalorder %s9, 0
      %p43 = por %p41, %p42
      %p44 = scmp.ne.s32.totalorder %s36, %s38
      %p45 = scmp.eq.s32.totalorder %s14, 7
      %p46 = por %p44, %p45
      %p47 = scmp.ne.s32.totalorder %s38, %s39
      %p48 = scmp.eq.s32.totalorder %s14, 0
      %p49 = por %p47, %p48
      %p50 = scmp.ne.s32.totalorder %s38, %s39
      %p51 = scmp.eq.s32.totalorder %s15, 7
      %p52 = por %p50, %p51
      %p54 = scmp.ne.s32.totalorder %s39, %s53
      %p55 = scmp.eq.s32.totalorder %s15, 0
      %p56 = por %p54, %p55
      %s57 = ssub.s32 %s16, %s35
      %s58 = ssub.s32 %s17, %s31
      %s59 = sor.u32 %s57, %s58
      %s60 = ssub.s32 %s18, %s27
      %s61 = sor.u32 %s59, %s60
      %p62 = scmp.eq.s32.totalorder %s61, 0
      %s64 = sadd.s32 %s63, 1
      %s65 = scalar_select %p62, %s63, %s64
      %p68 = pneg %p62
      %p69 = scmp.eq.s32.totalorder %s9, 7
      %p70 = por %p68, %p69
      %p71 = scmp.ne.s32.totalorder %s63, %s66
      %p72 = scmp.eq.s32.totalorder %s9, 0
      %p73 = por %p71, %p72
      %p74 = scmp.ne.s32.totalorder %s63, %s66
      %p75 = scmp.eq.s32.totalorder %s14, 7
      %p76 = por %p74, %p75
      %p77 = scmp.ne.s32.totalorder %s66, %s67
      %p78 = scmp.eq.s32.totalorder %s14, 0
      %p79 = por %p77, %p78
      %p80 = scmp.ne.s32.totalorder %s66, %s67
      %p81 = scmp.eq.s32.totalorder %s15, 7
      %p82 = por %p80, %p81
      %p84 = scmp.ne.s32.totalorder %s67, %s83
      %p85 = scmp.eq.s32.totalorder %s15, 0
      %p86 = por %p84, %p85
      %s87 = ssub.s32 %s16, %s35
      %s88 = ssub.s32 %s17, %s31
      %s89 = sor.u32 %s87, %s88
      %s90 = ssub.s32 %s18, %s27
      %s91 = sor.u32 %s89, %s90
      %p92 = scmp.eq.s32.totalorder %s91, 0
      %s94 = sadd.s32 %s93, 1
      %s95 = scalar_select %p92, %s93, %s94
      %p98 = pneg %p92
      %p99 = scmp.eq.s32.totalorder %s9, 7
      %p100 = por %p98, %p99
      %p101 = scmp.ne.s32.totalorder %s93, %s96
      %p102 = scmp.eq.s32.totalorder %s9, 0
      %p103 = por %p101, %p102
      %p104 = scmp.ne.s32.totalorder %s93, %s96
      %p105 = scmp.eq.s32.totalorder %s14, 7
      %p106 = por %p104, %p105
      %p107 = scmp.ne.s32.totalorder %s96, %s97
      %p108 = scmp.eq.s32.totalorder %s14, 0
      %p109 = por %p107, %p108
      %p110 = scmp.ne.s32.totalorder %s96, %s97
      %p111 = scmp.eq.s32.totalorder %s15, 7
      %p112 = por %p110, %p111
      %p114 = scmp.ne.s32.totalorder %s97, %s113
      %p115 = scmp.eq.s32.totalorder %s15, 0
      %p116 = por %p114, %p115
      %s117 = ssub.s32 %s16, %s35
      %s118 = ssub.s32 %s17, %s31
      %s119 = sor.u32 %s117, %s118
      %s120 = ssub.s32 %s18, %s27
      %s121 = sor.u32 %s119, %s120
      %p122 = scmp.eq.s32.totalorder %s121, 0
      %s124 = sadd.s32 %s123, 1
      %s125 = scalar_select %p122, %s123, %s124
      %p128 = pneg %p122
      %p129 = scmp.eq.s32.totalorder %s9, 7
      %p130 = por %p128, %p129
      %p131 = scmp.ne.s32.totalorder %s123, %s126
      %p132 = scmp.eq.s32.totalorder %s9, 0
      %p133 = por %p131, %p132
      %p134 = scmp.ne.s32.totalorder %s123, %s126
      %p135 = scmp.eq.s32.totalorder %s14, 7
      %p136 = por %p134, %p135
      %p137 = scmp.ne.s32.totalorder %s126, %s127
      %p138 = scmp.eq.s32.totalorder %s14, 0
      %p139 = por %p137, %p138
      %p140 = scmp.ne.s32.totalorder %s126, %s127
      %p141 = scmp.eq.s32.totalorder %s15, 7
      %p142 = por %p140, %p141
      %p144 = scmp.ne.s32.totalorder %s127, %s143
      %p145 = scmp.eq.s32.totalorder %s15, 0
      %p146 = por %p144, %p145
      %p147 = scmp.le.s32.totalorder 1, %s9
      %p148 = scmp.lt.s32.totalorder %s9, 9
      %p149 = pnand %p147, %p148
      %p150 = pneg %p149
      // Predicated region
      $region9: #{swin_encoder_block.7} parent=5 // pred_check
        _
      $region10: #{swin_encoder_block.7} parent=5 // pred_check_branch
        %152 = sbr.rel (%p149) target = $region12
      $region11: #{swin_encoder_block.7} parent=5 // pred_region
        %s153 = ssub.s32 %s9, 1
        // Predicated region
        $region13: #{swin_encoder_block.7} parent=11 // pred_check
          %p154 = pneg %p49
        $region14: #{swin_encoder_block.7} parent=11 // pred_check_branch
          %156 = sbr.rel (%p154) target = $region16
        $region15: #{swin_encoder_block.7} parent=11 // pred_region
          _
        $region16: #{swin_encoder_block.7} parent=11 // pred_fallthru
          _
      $region12: #{swin_encoder_block.7} parent=5 // pred_fallthru
        _
      %p157 = scmp.lt.s32.totalorder %s9, 8
      // Predicated region
      $region17: #{swin_encoder_block.7} parent=5 // pred_check
        %p158 = pneg %p157
      $region18: #{swin_encoder_block.7} parent=5 // pred_check_branch
        %160 = sbr.rel (%p158) target = $region20
      $region19: #{swin_encoder_block.7} parent=5 // pred_region
        // Predicated region
        $region21: #{swin_encoder_block.7} parent=19 // pred_check
          %p161 = pneg %p73
        $region22: #{swin_encoder_block.7} parent=19 // pred_check_branch
          %163 = sbr.rel (%p161) target = $region24
        $region23: #{swin_encoder_block.7} parent=19 // pred_region
          %s164 = sand.u32 %s63, 1
          %s165 = sand.u32 %s63, 1
          %s166 = smul.addr %s165, 64
          %s167 = scalar_lea.vmem [#allocation2], %s166
          %s168 = smul.u32 8, %s17
          %s169 = smul.addr %s168, 2
          %s170 = sadd.s32 %s18, %s169
          %s171 = smul.addr %s16, 32
          %s172 = sadd.s32 %s170, %s171
          %s173 = smul.addr %s172, 8
          %s174 = scalar_lea.vmem %s1, %s173
          // Predicated region
          $region25: #{swin_encoder_block.7} parent=23 // pred_check
            _
          $region26: #{swin_encoder_block.7} parent=23 // pred_check_branch
            %176 = sbr.rel (0) target = $region28
          $region27: #{swin_encoder_block.7} parent=23 // pred_region
            // Predicated region
            $region29: #{swin_encoder_block.7} parent=27 // pred_check
              _
            $region30: #{swin_encoder_block.7} parent=27 // pred_check_branch
              %178 = sbr.rel (0) target = $region32
            $region31: #{swin_encoder_block.7} parent=27 // pred_region
              // Predicated region
              $region44: #{swin_encoder_block.7} parent=31 // pred_check
                _
              $region45: #{swin_encoder_block.7} parent=31 // pred_check_branch
                %208 = sbr.rel (0) target = $region47
              $region46: #{swin_encoder_block.7} parent=31 // pred_region
                loop: start=0, step=1, limit=1
                $region48: #{swin_encoder_block.7} parent=46 // loop_pre_header
                  _
                $region49: #{swin_encoder_block.7} parent=46 // loop_header
                  %s210 = sphi 0, %s214
                  %p211 = scmp.ge.s32.totalorder %s210, 1
                  %s215 = sphi %s174, %s174
                  %s216 = sphi %s167, %s167
                $region50: #{swin_encoder_block.7} parent=46 // loop_header_branch
                  %213 = sbr.rel (%p211) target = $region54
                $region51: #{swin_encoder_block.7} parent=46 // loop_body
                  %v217 = vld [vmem:[%s215] sm:$0xff]
                  %218 = vst [vmem:[%s216] sm:$0xff] %v217
                  %v219 = vld [vmem:[%s215 + $0x10] sm:$0xff]
                  %220 = vst [vmem:[%s216 + $0x8] sm:$0xff] %v219
                  %v221 = vld [vmem:[%s215 + $0x20] sm:$0xff]
                  %222 = vst [vmem:[%s216 + $0x10] sm:$0xff] %v221
                  %v223 = vld [vmem:[%s215 + $0x30] sm:$0xff]
                  %224 = vst [vmem:[%s216 + $0x18] sm:$0xff] %v223
                  %v225 = vld [vmem:[%s215 + $0x40] sm:$0xff]
                  %226 = vst [vmem:[%s216 + $0x20] sm:$0xff] %v225
                  %v227 = vld [vmem:[%s215 + $0x50] sm:$0xff]
                  %228 = vst [vmem:[%s216 + $0x28] sm:$0xff] %v227
                  %v229 = vld [vmem:[%s215 + $0x60] sm:$0xff]
                  %230 = vst [vmem:[%s216 + $0x30] sm:$0xff] %v229
                  %v231 = vld [vmem:[%s215 + $0x70] sm:$0xff]
                  %232 = vst [vmem:[%s216 + $0x38] sm:$0xff] %v231
                $region52: #{swin_encoder_block.7} parent=46 // loop_footer
                  %s214 = sadd.s32 1, %s210
                $region53: #{swin_encoder_block.7} parent=46 // loop_footer_branch
                  %209 = sbr.rel target = $region49
                $region54: #{swin_encoder_block.7} parent=46 // loop_exit
                  _
              $region47: #{swin_encoder_block.7} parent=31 // pred_fallthru
                _
              // Predicated region
              $region55: #{swin_encoder_block.7} parent=31 // pred_check
                _
              $region56: #{swin_encoder_block.7} parent=31 // pred_check_branch
                %234 = sbr.rel target = $region58
              $region57: #{swin_encoder_block.7} parent=31 // pred_region
                _
              $region58: #{swin_encoder_block.7} parent=31 // pred_fallthru
                _
            $region32: #{swin_encoder_block.7} parent=27 // pred_fallthru
              _
            // Predicated region
            $region33: #{swin_encoder_block.7} parent=27 // pred_check
              _
            $region34: #{swin_encoder_block.7} parent=27 // pred_check_branch
              %180 = sbr.rel target = $region36
            $region35: #{swin_encoder_block.7} parent=27 // pred_region
              %s182 = ssub.s32 256, 1
              loop: start=0, step=1, limit=1
              $region37: #{swin_encoder_block.7} parent=35 // loop_pre_header
                _
              $region38: #{swin_encoder_block.7} parent=35 // loop_header
                %s184 = sphi 0, %s188
                %p185 = scmp.ge.s32.totalorder %s184, 1
                %s189 = sphi %s174, %s174
                %s190 = sphi %s167, %s167
              $region39: #{swin_encoder_block.7} parent=35 // loop_header_branch
                %187 = sbr.rel (%p185) target = $region43
              $region40: #{swin_encoder_block.7} parent=35 // loop_body
                %v191 = vld [vmem:[%s189] sm:%s182]
                %192 = vst [vmem:[%s190] sm:%s182] %v191
                %v193 = vld [vmem:[%s189 + $0x10] sm:%s182]
                %194 = vst [vmem:[%s190 + $0x8] sm:%s182] %v193
                %v195 = vld [vmem:[%s189 + $0x20] sm:%s182]
                %196 = vst [vmem:[%s190 + $0x10] sm:%s182] %v195
                %v197 = vld [vmem:[%s189 + $0x30] sm:%s182]
                %198 = vst [vmem:[%s190 + $0x18] sm:%s182] %v197
                %v199 = vld [vmem:[%s189 + $0x40] sm:%s182]
                %200 = vst [vmem:[%s190 + $0x20] sm:%s182] %v199
                %v201 = vld [vmem:[%s189 + $0x50] sm:%s182]
                %202 = vst [vmem:[%s190 + $0x28] sm:%s182] %v201
                %v203 = vld [vmem:[%s189 + $0x60] sm:%s182]
                %204 = vst [vmem:[%s190 + $0x30] sm:%s182] %v203
                %v205 = vld [vmem:[%s189 + $0x70] sm:%s182]
                %206 = vst [vmem:[%s190 + $0x38] sm:%s182] %v205
              $region41: #{swin_encoder_block.7} parent=35 // loop_footer
                %s188 = sadd.s32 1, %s184
              $region42: #{swin_encoder_block.7} parent=35 // loop_footer_branch
                %183 = sbr.rel target = $region38
              $region43: #{swin_encoder_block.7} parent=35 // loop_exit
                _
            $region36: #{swin_encoder_block.7} parent=27 // pred_fallthru
              _
          $region28: #{swin_encoder_block.7} parent=23 // pred_fallthru
            _
          %235 = vnop
        $region24: #{swin_encoder_block.7} parent=19 // pred_fallthru
          _
        // Predicated region
        $region59: #{swin_encoder_block.7} parent=19 // pred_check
          %p236 = pneg %p103
        $region60: #{swin_encoder_block.7} parent=19 // pred_check_branch
          %238 = sbr.rel (%p236) target = $region62
        $region61: #{swin_encoder_block.7} parent=19 // pred_region
          %s239 = sand.u32 %s93, 1
          %s240 = sand.u32 %s93, 1
          %s241 = smul.addr %s240, 64
          %s242 = scalar_lea.vmem [#allocation3], %s241
          %s243 = smul.u32 8, %s17
          %s244 = smul.addr %s243, 2
          %s245 = sadd.s32 %s18, %s244
          %s246 = smul.addr %s16, 32
          %s247 = sadd.s32 %s245, %s246
          %s248 = smul.addr %s247, 8
          %s249 = scalar_lea.vmem %s2, %s248
          // Predicated region
          $region63: #{swin_encoder_block.7} parent=61 // pred_check
            _
          $region64: #{swin_encoder_block.7} parent=61 // pred_check_branch
            %251 = sbr.rel (0) target = $region66
          $region65: #{swin_encoder_block.7} parent=61 // pred_region
            // Predicated region
            $region67: #{swin_encoder_block.7} parent=65 // pred_check
              _
            $region68: #{swin_encoder_block.7} parent=65 // pred_check_branch
              %253 = sbr.rel (0) target = $region70
            $region69: #{swin_encoder_block.7} parent=65 // pred_region
              // Predicated region
              $region82: #{swin_encoder_block.7} parent=69 // pred_check
                _
              $region83: #{swin_encoder_block.7} parent=69 // pred_check_branch
                %283 = sbr.rel (0) target = $region85
              $region84: #{swin_encoder_block.7} parent=69 // pred_region
                loop: start=0, step=1, limit=1
                $region86: #{swin_encoder_block.7} parent=84 // loop_pre_header
                  _
                $region87: #{swin_encoder_block.7} parent=84 // loop_header
                  %s285 = sphi 0, %s289
                  %p286 = scmp.ge.s32.totalorder %s285, 1
                  %s290 = sphi %s249, %s249
                  %s291 = sphi %s242, %s242
                $region88: #{swin_encoder_block.7} parent=84 // loop_header_branch
                  %288 = sbr.rel (%p286) target = $region92
                $region89: #{swin_encoder_block.7} parent=84 // loop_body
                  %v292 = vld [vmem:[%s290] sm:$0xff]
                  %293 = vst [vmem:[%s291] sm:$0xff] %v292
                  %v294 = vld [vmem:[%s290 + $0x10] sm:$0xff]
                  %295 = vst [vmem:[%s291 + $0x8] sm:$0xff] %v294
                  %v296 = vld [vmem:[%s290 + $0x20] sm:$0xff]
                  %297 = vst [vmem:[%s291 + $0x10] sm:$0xff] %v296
                  %v298 = vld [vmem:[%s290 + $0x30] sm:$0xff]
                  %299 = vst [vmem:[%s291 + $0x18] sm:$0xff] %v298
                  %v300 = vld [vmem:[%s290 + $0x40] sm:$0xff]
                  %301 = vst [vmem:[%s291 + $0x20] sm:$0xff] %v300
                  %v302 = vld [vmem:[%s290 + $0x50] sm:$0xff]
                  %303 = vst [vmem:[%s291 + $0x28] sm:$0xff] %v302
                  %v304 = vld [vmem:[%s290 + $0x60] sm:$0xff]
                  %305 = vst [vmem:[%s291 + $0x30] sm:$0xff] %v304
                  %v306 = vld [vmem:[%s290 + $0x70] sm:$0xff]
                  %307 = vst [vmem:[%s291 + $0x38] sm:$0xff] %v306
                $region90: #{swin_encoder_block.7} parent=84 // loop_footer
                  %s289 = sadd.s32 1, %s285
                $region91: #{swin_encoder_block.7} parent=84 // loop_footer_branch
                  %284 = sbr.rel target = $region87
                $region92: #{swin_encoder_block.7} parent=84 // loop_exit
                  _
              $region85: #{swin_encoder_block.7} parent=69 // pred_fallthru
                _
              // Predicated region
              $region93: #{swin_encoder_block.7} parent=69 // pred_check
                _
              $region94: #{swin_encoder_block.7} parent=69 // pred_check_branch
                %309 = sbr.rel target = $region96
              $region95: #{swin_encoder_block.7} parent=69 // pred_region
                _
              $region96: #{swin_encoder_block.7} parent=69 // pred_fallthru
                _
            $region70: #{swin_encoder_block.7} parent=65 // pred_fallthru
              _
            // Predicated region
            $region71: #{swin_encoder_block.7} parent=65 // pred_check
              _
            $region72: #{swin_encoder_block.7} parent=65 // pred_check_branch
              %255 = sbr.rel target = $region74
            $region73: #{swin_encoder_block.7} parent=65 // pred_region
              %s257 = ssub.s32 256, 1
              loop: start=0, step=1, limit=1
              $region75: #{swin_encoder_block.7} parent=73 // loop_pre_header
                _
              $region76: #{swin_encoder_block.7} parent=73 // loop_header
                %s259 = sphi 0, %s263
                %p260 = scmp.ge.s32.totalorder %s259, 1
                %s264 = sphi %s249, %s249
                %s265 = sphi %s242, %s242
              $region77: #{swin_encoder_block.7} parent=73 // loop_header_branch
                %262 = sbr.rel (%p260) target = $region81
              $region78: #{swin_encoder_block.7} parent=73 // loop_body
                %v266 = vld [vmem:[%s264] sm:%s257]
                %267 = vst [vmem:[%s265] sm:%s257] %v266
                %v268 = vld [vmem:[%s264 + $0x10] sm:%s257]
                %269 = vst [vmem:[%s265 + $0x8] sm:%s257] %v268
                %v270 = vld [vmem:[%s264 + $0x20] sm:%s257]
                %271 = vst [vmem:[%s265 + $0x10] sm:%s257] %v270
                %v272 = vld [vmem:[%s264 + $0x30] sm:%s257]
                %273 = vst [vmem:[%s265 + $0x18] sm:%s257] %v272
                %v274 = vld [vmem:[%s264 + $0x40] sm:%s257]
                %275 = vst [vmem:[%s265 + $0x20] sm:%s257] %v274
                %v276 = vld [vmem:[%s264 + $0x50] sm:%s257]
                %277 = vst [vmem:[%s265 + $0x28] sm:%s257] %v276
                %v278 = vld [vmem:[%s264 + $0x60] sm:%s257]
                %279 = vst [vmem:[%s265 + $0x30] sm:%s257] %v278
                %v280 = vld [vmem:[%s264 + $0x70] sm:%s257]
                %281 = vst [vmem:[%s265 + $0x38] sm:%s257] %v280
              $region79: #{swin_encoder_block.7} parent=73 // loop_footer
                %s263 = sadd.s32 1, %s259
              $region80: #{swin_encoder_block.7} parent=73 // loop_footer_branch
                %258 = sbr.rel target = $region76
              $region81: #{swin_encoder_block.7} parent=73 // loop_exit
                _
            $region74: #{swin_encoder_block.7} parent=65 // pred_fallthru
              _
          $region66: #{swin_encoder_block.7} parent=61 // pred_fallthru
            _
          %310 = vnop
        $region62: #{swin_encoder_block.7} parent=19 // pred_fallthru
          _
      $region20: #{swin_encoder_block.7} parent=5 // pred_fallthru
        _
      %p311 = scmp.le.s32.totalorder 1, %s9
      %p312 = scmp.lt.s32.totalorder %s9, 9
      %p313 = pnand %p311, %p312
      %p314 = pneg %p313
      // Predicated region
      $region97: #{swin_encoder_block.7} parent=5 // pred_check
        _
      $region98: #{swin_encoder_block.7} parent=5 // pred_check_branch
        %316 = sbr.rel (%p313) target = $region100
      $region99: #{swin_encoder_block.7} parent=5 // pred_region
        %s317 = ssub.s32 %s9, 1
        %s318 = sand.u32 %s66, 1
        %s319 = sand.u32 %s66, 1
        %s320 = smul.addr %s319, 64
        %s321 = scalar_lea.vmem [#allocation2], %s320
        // Predicated region
        $region101: #{swin_encoder_block.7} parent=99 // pred_check
          %p322 = pneg %p79
        $region102: #{swin_encoder_block.7} parent=99 // pred_check_branch
          %324 = sbr.rel (%p322) target = $region104
        $region103: #{swin_encoder_block.7} parent=99 // pred_region
          _
        $region104: #{swin_encoder_block.7} parent=99 // pred_fallthru
          _
        %s325 = sand.u32 %s96, 1
        %s326 = sand.u32 %s96, 1
        %s327 = smul.addr %s326, 64
        %s328 = scalar_lea.vmem [#allocation3], %s327
        // Predicated region
        $region105: #{swin_encoder_block.7} parent=99 // pred_check
          %p329 = pneg %p109
        $region106: #{swin_encoder_block.7} parent=99 // pred_check_branch
          %331 = sbr.rel (%p329) target = $region108
        $region107: #{swin_encoder_block.7} parent=99 // pred_region
          _
        $region108: #{swin_encoder_block.7} parent=99 // pred_fallthru
          _
        %p332 = pneg %p49
        %p333 = pneg %p46
        %s334 = sand.u32 %s66, 1
        %s335 = sand.u32 %s66, 1
        %s336 = smul.addr %s335, 64
        %s337 = scalar_lea.vmem [#allocation2], %s336
        %p338 = pneg %p79
        %p339 = pneg %p76
        %s340 = sand.u32 %s96, 1
        %s341 = sand.u32 %s96, 1
        %s342 = smul.addr %s341, 64
        %s343 = scalar_lea.vmem [#allocation3], %s342
        %p344 = pneg %p109
        %p345 = pneg %p106
        %p346 = pneg %p139
        %p347 = pneg %p136
        %s348 = sand.u32 %s126, 1
        %s349 = sand.u32 %s126, 1
        %s350 = smul.addr %s349, 64
        %s351 = scalar_lea.vmem [#allocation4], %s350
        %s352 = smul.u32 8, %s20
        %s353 = smul.u32 8, %s20
        %s354 = smul.u32 8, %s20
        %v355 = vld [vmem:[%s328] sm:$0xff]
        %v356 = vld [vmem:[%s328 + $0x8] sm:$0xff]
        %v357 = vld [vmem:[%s328 + $0x10] sm:$0xff]
        %v358 = vld [vmem:[%s328 + $0x18] sm:$0xff]
        %v359 = vld [vmem:[%s328 + $0x20] sm:$0xff]
        %v360 = vld [vmem:[%s328 + $0x28] sm:$0xff]
        %v361 = vld [vmem:[%s328 + $0x30] sm:$0xff]
        %v362 = vld [vmem:[%s328 + $0x38] sm:$0xff]
        %v363 = vld [vmem:[%s0] sm:$0xff]
        %v364 = vld [vmem:[%s0 + $0x8] sm:$0xff]
        %v365 = vld [vmem:[%s0 + $0x10] sm:$0xff]
        %v366 = vld [vmem:[%s0 + $0x18] sm:$0xff]
        %v367 = vld [vmem:[%s0 + $0x20] sm:$0xff]
        %v368 = vld [vmem:[%s0 + $0x28] sm:$0xff]
        %v369 = vld [vmem:[%s0 + $0x30] sm:$0xff]
        %v370 = vld [vmem:[%s0 + $0x38] sm:$0xff]
        %vm371 = vcmask 523264
        %v373 = vsel %vm371, %v363, 0
        %v376 = vsel %vm371, %v364, 0
        %v379 = vsel %vm371, %v365, 0
        %v382 = vsel %vm371, %v366, 0
        %v385 = vsel %vm371, %v367, 0
        %v388 = vsel %vm371, %v368, 0
        %v391 = vsel %vm371, %v369, 0
        %v394 = vsel %vm371, %v370, 0
        %396 = vmatpush.msra.mxu0 0.0
        %397 = vmatpush.msra.mxu0 0.0
        %398 = vmatpush.msra.mxu0 0.0
        %399 = vmatpush.msra.mxu0 0.0
        %400 = vmatpush.msra.mxu0 0.0
        %401 = vmatpush.msra.mxu0 0.0
        %402 = vmatpush.msra.mxu0 0.0
        %403 = vmatpush.msra.mxu0 0.0
        %404 = vmatpush.msra.mxu0 %v362
        %405 = vmatpush.msra.mxu0 %v361
        %406 = vmatpush.msra.mxu0 %v360
        %407 = vmatpush.msra.mxu0 %v359
        %408 = vmatpush.msra.mxu0 %v358
        %409 = vmatpush.msra.mxu0 %v357
        %410 = vmatpush.msra.mxu0 %v356
        %411 = vmatpush.msra.mxu0 %v355
        %412 = vmatmul.f32.gmra.mxu0 %v373
        %v413 = vpop.f32.mrf.mxu0
        %v414 = vadd.f32 0.0, %v413
        %415 = vmatmul.f32.gmra.mxu0 %v376
        %v416 = vpop.f32.mrf.mxu0
        %v417 = vadd.f32 0.0, %v416
        %418 = vmatmul.f32.gmra.mxu0 %v379
        %v419 = vpop.f32.mrf.mxu0
        %v420 = vadd.f32 0.0, %v419
        %421 = vmatmul.f32.gmra.mxu0 %v382
        %v422 = vpop.f32.mrf.mxu0
        %v423 = vadd.f32 0.0, %v422
        %424 = vmatmul.f32.gmra.mxu0 %v385
        %v425 = vpop.f32.mrf.mxu0
        %v426 = vadd.f32 0.0, %v425
        %427 = vmatmul.f32.gmra.mxu0 %v388
        %v428 = vpop.f32.mrf.mxu0
        %v429 = vadd.f32 0.0, %v428
        %430 = vmatmul.f32.gmra.mxu0 %v391
        %v431 = vpop.f32.mrf.mxu0
        %v432 = vadd.f32 0.0, %v431
        %433 = vmatmul.f32.gmra.mxu0 %v394
        %v434 = vpop.f32.mrf.mxu0
        %v435 = vadd.f32 0.0, %v434
        %436 = vdwg.mxu0
        %v437 = vld [vmem:[%s321] sm:$0xff]
        %v438 = vld [vmem:[%s321 + $0x8] sm:$0xff]
        %v439 = vld [vmem:[%s321 + $0x10] sm:$0xff]
        %v440 = vld [vmem:[%s321 + $0x18] sm:$0xff]
        %v441 = vld [vmem:[%s321 + $0x20] sm:$0xff]
        %v442 = vld [vmem:[%s321 + $0x28] sm:$0xff]
        %v443 = vld [vmem:[%s321 + $0x30] sm:$0xff]
        %v444 = vld [vmem:[%s321 + $0x38] sm:$0xff]
        %v445 = vadd.f32 %v437, %v414
        %v446 = vadd.f32 %v438, %v417
        %v447 = vadd.f32 %v439, %v420
        %v448 = vadd.f32 %v440, %v423
        %v449 = vadd.f32 %v441, %v426
        %v450 = vadd.f32 %v442, %v429
        %v451 = vadd.f32 %v443, %v432
        %v452 = vadd.f32 %v444, %v435
        %vm453 = vcmask 261120
        %454 = vst.msk [vmem:[%s351] sm:$0xff] %vm453, %v445
        %455 = vst.msk [vmem:[%s351 + $0x8] sm:$0xff] %vm453, %v446
        %456 = vst.msk [vmem:[%s351 + $0x10] sm:$0xff] %vm453, %v447
        %457 = vst.msk [vmem:[%s351 + $0x18] sm:$0xff] %vm453, %v448
        %458 = vst.msk [vmem:[%s351 + $0x20] sm:$0xff] %vm453, %v449
        %459 = vst.msk [vmem:[%s351 + $0x28] sm:$0xff] %vm453, %v450
        %460 = vst.msk [vmem:[%s351 + $0x30] sm:$0xff] %vm453, %v451
        %461 = vst.msk [vmem:[%s351 + $0x38] sm:$0xff] %vm453, %v452
        %s462 = sand.u32 %s126, 1
        %s463 = sand.u32 %s126, 1
        %s464 = smul.addr %s463, 64
        %s465 = scalar_lea.vmem [#allocation4], %s464
        // Predicated region
        $region109: #{swin_encoder_block.7} parent=99 // pred_check
          %p466 = pneg %p136
        $region110: #{swin_encoder_block.7} parent=99 // pred_check_branch
          %468 = sbr.rel (%p466) target = $region112
        $region111: #{swin_encoder_block.7} parent=99 // pred_region
          %s469 = smul.u32 8, %s20
          %s470 = smul.addr %s469, 2
          %s471 = sadd.s32 %s21, %s470
          %s472 = smul.addr %s19, 32
          %s473 = sadd.s32 %s471, %s472
          %s474 = smul.addr %s473, 8
          %s475 = scalar_lea.vmem %s3, %s474
          // Predicated region
          $region113: #{swin_encoder_block.7} parent=111 // pred_check
            _
          $region114: #{swin_encoder_block.7} parent=111 // pred_check_branch
            %477 = sbr.rel (0) target = $region116
          $region115: #{swin_encoder_block.7} parent=111 // pred_region
            // Predicated region
            $region117: #{swin_encoder_block.7} parent=115 // pred_check
              _
            $region118: #{swin_encoder_block.7} parent=115 // pred_check_branch
              %479 = sbr.rel (0) target = $region120
            $region119: #{swin_encoder_block.7} parent=115 // pred_region
              // Predicated region
              $region132: #{swin_encoder_block.7} parent=119 // pred_check
                _
              $region133: #{swin_encoder_block.7} parent=119 // pred_check_branch
                %509 = sbr.rel (0) target = $region135
              $region134: #{swin_encoder_block.7} parent=119 // pred_region
                loop: start=0, step=1, limit=1
                $region136: #{swin_encoder_block.7} parent=134 // loop_pre_header
                  _
                $region137: #{swin_encoder_block.7} parent=134 // loop_header
                  %s511 = sphi 0, %s515
                  %p512 = scmp.ge.s32.totalorder %s511, 1
                  %s516 = sphi %s465, %s465
                  %s517 = sphi %s475, %s475
                $region138: #{swin_encoder_block.7} parent=134 // loop_header_branch
                  %514 = sbr.rel (%p512) target = $region142
                $region139: #{swin_encoder_block.7} parent=134 // loop_body
                  %v518 = vld [vmem:[%s516] sm:$0xff]
                  %519 = vst [vmem:[%s517] sm:$0xff] %v518
                  %v520 = vld [vmem:[%s516 + $0x8] sm:$0xff]
                  %521 = vst [vmem:[%s517 + $0x10] sm:$0xff] %v520
                  %v522 = vld [vmem:[%s516 + $0x10] sm:$0xff]
                  %523 = vst [vmem:[%s517 + $0x20] sm:$0xff] %v522
                  %v524 = vld [vmem:[%s516 + $0x18] sm:$0xff]
                  %525 = vst [vmem:[%s517 + $0x30] sm:$0xff] %v524
                  %v526 = vld [vmem:[%s516 + $0x20] sm:$0xff]
                  %527 = vst [vmem:[%s517 + $0x40] sm:$0xff] %v526
                  %v528 = vld [vmem:[%s516 + $0x28] sm:$0xff]
                  %529 = vst [vmem:[%s517 + $0x50] sm:$0xff] %v528
                  %v530 = vld [vmem:[%s516 + $0x30] sm:$0xff]
                  %531 = vst [vmem:[%s517 + $0x60] sm:$0xff] %v530
                  %v532 = vld [vmem:[%s516 + $0x38] sm:$0xff]
                  %533 = vst [vmem:[%s517 + $0x70] sm:$0xff] %v532
                $region140: #{swin_encoder_block.7} parent=134 // loop_footer
                  %s515 = sadd.s32 1, %s511
                $region141: #{swin_encoder_block.7} parent=134 // loop_footer_branch
                  %510 = sbr.rel target = $region137
                $region142: #{swin_encoder_block.7} parent=134 // loop_exit
                  _
              $region135: #{swin_encoder_block.7} parent=119 // pred_fallthru
                _
              // Predicated region
              $region143: #{swin_encoder_block.7} parent=119 // pred_check
                _
              $region144: #{swin_encoder_block.7} parent=119 // pred_check_branch
                %535 = sbr.rel target = $region146
              $region145: #{swin_encoder_block.7} parent=119 // pred_region
                _
              $region146: #{swin_encoder_block.7} parent=119 // pred_fallthru
                _
            $region120: #{swin_encoder_block.7} parent=115 // pred_fallthru
              _
            // Predicated region
            $region121: #{swin_encoder_block.7} parent=115 // pred_check
              _
            $region122: #{swin_encoder_block.7} parent=115 // pred_check_branch
              %481 = sbr.rel target = $region124
            $region123: #{swin_encoder_block.7} parent=115 // pred_region
              %s483 = ssub.s32 256, 1
              loop: start=0, step=1, limit=1
              $region125: #{swin_encoder_block.7} parent=123 // loop_pre_header
                _
              $region126: #{swin_encoder_block.7} parent=123 // loop_header
                %s485 = sphi 0, %s489
                %p486 = scmp.ge.s32.totalorder %s485, 1
                %s490 = sphi %s465, %s465
                %s491 = sphi %s475, %s475
              $region127: #{swin_encoder_block.7} parent=123 // loop_header_branch
                %488 = sbr.rel (%p486) target = $region131
              $region128: #{swin_encoder_block.7} parent=123 // loop_body
                %v492 = vld [vmem:[%s490] sm:%s483]
                %493 = vst [vmem:[%s491] sm:%s483] %v492
                %v494 = vld [vmem:[%s490 + $0x8] sm:%s483]
                %495 = vst [vmem:[%s491 + $0x10] sm:%s483] %v494
                %v496 = vld [vmem:[%s490 + $0x10] sm:%s483]
                %497 = vst [vmem:[%s491 + $0x20] sm:%s483] %v496
                %v498 = vld [vmem:[%s490 + $0x18] sm:%s483]
                %499 = vst [vmem:[%s491 + $0x30] sm:%s483] %v498
                %v500 = vld [vmem:[%s490 + $0x20] sm:%s483]
                %501 = vst [vmem:[%s491 + $0x40] sm:%s483] %v500
                %v502 = vld [vmem:[%s490 + $0x28] sm:%s483]
                %503 = vst [vmem:[%s491 + $0x50] sm:%s483] %v502
                %v504 = vld [vmem:[%s490 + $0x30] sm:%s483]
                %505 = vst [vmem:[%s491 + $0x60] sm:%s483] %v504
                %v506 = vld [vmem:[%s490 + $0x38] sm:%s483]
                %507 = vst [vmem:[%s491 + $0x70] sm:%s483] %v506
              $region129: #{swin_encoder_block.7} parent=123 // loop_footer
                %s489 = sadd.s32 1, %s485
              $region130: #{swin_encoder_block.7} parent=123 // loop_footer_branch
                %484 = sbr.rel target = $region126
              $region131: #{swin_encoder_block.7} parent=123 // loop_exit
                _
            $region124: #{swin_encoder_block.7} parent=115 // pred_fallthru
              _
          $region116: #{swin_encoder_block.7} parent=111 // pred_fallthru
            _
          %536 = vnop
        $region112: #{swin_encoder_block.7} parent=99 // pred_fallthru
          _
      $region100: #{swin_encoder_block.7} parent=5 // pred_fallthru
        _
      %p537 = scmp.le.s32.totalorder 2, %s9
      // Predicated region
      $region147: #{swin_encoder_block.7} parent=5 // pred_check
        %p538 = pneg %p537
      $region148: #{swin_encoder_block.7} parent=5 // pred_check_branch
        %540 = sbr.rel (%p538) target = $region150
      $region149: #{swin_encoder_block.7} parent=5 // pred_region
        %s541 = ssub.s32 %s9, 2
        // Predicated region
        $region151: #{swin_encoder_block.7} parent=149 // pred_check
          %p542 = pneg %p142
        $region152: #{swin_encoder_block.7} parent=149 // pred_check_branch
          %544 = sbr.rel (%p542) target = $region154
        $region153: #{swin_encoder_block.7} parent=149 // pred_region
          %s545 = sand.u32 %s127, 1
          %s546 = sand.u32 %s127, 1
          %s547 = smul.addr %s546, 64
          %s548 = scalar_lea.vmem [#allocation4], %s547
        $region154: #{swin_encoder_block.7} parent=149 // pred_fallthru
          _
      $region150: #{swin_encoder_block.7} parent=5 // pred_fallthru
        _
    $region6: #{swin_encoder_block.7} parent=1 // loop_footer
      %s13 = sadd.s32 1, %s9
    $region7: #{swin_encoder_block.7} parent=1 // loop_footer_branch
      %8 = sbr.rel target = $region3
    $region8: #{swin_encoder_block.7} parent=1 // loop_exit
      _

// kernel: swin_encoder_block.6
$region0: #{swin_encoder_block.6}
  #allocation0 [shape = 'u32[]', space=smem, size = 0x4, offset = 0x4, fixed_abs, tag = 'smem constant byte address 0x4 - core index']
  #allocation1 [shape = 'u32[72,128]{1,0:T(1,128)}', space=vmem, size = 0x9000, scoped, tag = 'internal scratch']
  %s0 = inlined_call_operand.vmem [shape: f32[512,32], index: 0, kind: input, shape index: {}]
  %s1 = inlined_call_operand.vmem [shape: f32[1,32], index: 1, kind: input, shape index: {}]
  %s2 = inlined_call_operand.vmem [shape: f32[1,32], index: 2, kind: input, shape index: {}]
  %s3 = inlined_call_operand.vmem [shape: f32[32,32], index: 3, kind: input, shape index: {}]
  %s4 = inlined_call_operand.vmem [shape: f32[1,32], index: 4, kind: input, shape index: {}]
  %s5 = inlined_call_operand.vmem [shape: f32[512,32], index: 5, kind: output, shape index: {}]
  %s6 = sld [smem:[#allocation0]]
  $region53: #{swin_encoder_block.6} parent=0
    _
  %s8 = ssub.s32 1, %s6
  %s9 = scalar_select 0, %s8, %s6
  loop: start=0, step=1, limit=4
  $region2: #{swin_encoder_block.6} parent=0 // loop_pre_header
    _
  $region3: #{swin_encoder_block.6} parent=0 // loop_header
    %s11 = sphi 0, %s15
    %p12 = scmp.ge.s32.totalorder %s11, 4
    %s21 = sphi 0, %s23
    %s24 = sphi 0, %s21
    %s25 = sphi 0, %s24
    %s41 = sphi 0, %s25
    %s45 = sphi 0, %s45
    %s47 = sphi 0, %s45
    %s48 = sphi 0, %s47
    %s62 = sphi 0, %s48
    %s66 = sphi 0, %s66
    %s68 = sphi 0, %s66
    %s69 = sphi 0, %s68
    %s83 = sphi 0, %s69
    %s87 = sphi 0, %s87
    %s89 = sphi 0, %s87
    %s90 = sphi 0, %s89
    %s104 = sphi 0, %s90
    %s108 = sphi 0, %s108
    %s110 = sphi 0, %s108
    %s111 = sphi 0, %s110
    %s125 = sphi 0, %s111
    %s131 = sphi 0, %s133
    %s134 = sphi 0, %s131
    %s135 = sphi 0, %s134
    %s151 = sphi 0, %s135
  $region4: #{swin_encoder_block.6} parent=0 // loop_header_branch
    %14 = sbr.rel (%p12) target = $region8
  $region5: #{swin_encoder_block.6} parent=0 // loop_body
    %s16 = ssub.s32 %s11, 1
    %s17 = ssub.s32 %s11, 2
    %s18 = sadd.s32 %s11, 1
    %s19 = ssub.s32 %s11, %s18
    %p20 = scmp.eq.s32.totalorder %s19, 0
    %s22 = sadd.s32 %s21, 1
    %s23 = scalar_select %p20, %s21, %s22
    %p26 = pneg %p20
    %p27 = scmp.eq.s32.totalorder %s11, 1
    %p28 = por %p26, %p27
    %p29 = scmp.ne.s32.totalorder %s21, %s24
    %p30 = scmp.eq.s32.totalorder %s11, 0
    %p31 = por %p29, %p30
    %p32 = scmp.ne.s32.totalorder %s21, %s24
    %p33 = scmp.eq.s32.totalorder %s16, 1
    %p34 = por %p32, %p33
    %p35 = scmp.ne.s32.totalorder %s24, %s25
    %p36 = scmp.eq.s32.totalorder %s16, 0
    %p37 = por %p35, %p36
    %p38 = scmp.ne.s32.totalorder %s24, %s25
    %p39 = scmp.eq.s32.totalorder %s17, 1
    %p40 = por %p38, %p39
    %p42 = scmp.ne.s32.totalorder %s25, %s41
    %p43 = scmp.eq.s32.totalorder %s17, 0
    %p44 = por %p42, %p43
    %s46 = sadd.s32 %s45, 1
    %p49 = scmp.eq.s32.totalorder %s11, 1
    %p50 = scmp.ne.s32.totalorder %s45, %s47
    %p51 = scmp.eq.s32.totalorder %s11, 0
    %p52 = por %p50, %p51
    %p53 = scmp.ne.s32.totalorder %s45, %s47
    %p54 = scmp.eq.s32.totalorder %s16, 1
    %p55 = por %p53, %p54
    %p56 = scmp.ne.s32.totalorder %s47, %s48
    %p57 = scmp.eq.s32.totalorder %s16, 0
    %p58 = por %p56, %p57
    %p59 = scmp.ne.s32.totalorder %s47, %s48
    %p60 = scmp.eq.s32.totalorder %s17, 1
    %p61 = por %p59, %p60
    %p63 = scmp.ne.s32.totalorder %s48, %s62
    %p64 = scmp.eq.s32.totalorder %s17, 0
    %p65 = por %p63, %p64
    %s67 = sadd.s32 %s66, 1
    %p70 = scmp.eq.s32.totalorder %s11, 1
    %p71 = scmp.ne.s32.totalorder %s66, %s68
    %p72 = scmp.eq.s32.totalorder %s11, 0
    %p73 = por %p71, %p72
    %p74 = scmp.ne.s32.totalorder %s66, %s68
    %p75 = scmp.eq.s32.totalorder %s16, 1
    %p76 = por %p74, %p75
    %p77 = scmp.ne.s32.totalorder %s68, %s69
    %p78 = scmp.eq.s32.totalorder %s16, 0
    %p79 = por %p77, %p78
    %p80 = scmp.ne.s32.totalorder %s68, %s69
    %p81 = scmp.eq.s32.totalorder %s17, 1
    %p82 = por %p80, %p81
    %p84 = scmp.ne.s32.totalorder %s69, %s83
    %p85 = scmp.eq.s32.totalorder %s17, 0
    %p86 = por %p84, %p85
    %s88 = sadd.s32 %s87, 1
    %p91 = scmp.eq.s32.totalorder %s11, 1
    %p92 = scmp.ne.s32.totalorder %s87, %s89
    %p93 = scmp.eq.s32.totalorder %s11, 0
    %p94 = por %p92, %p93
    %p95 = scmp.ne.s32.totalorder %s87, %s89
    %p96 = scmp.eq.s32.totalorder %s16, 1
    %p97 = por %p95, %p96
    %p98 = scmp.ne.s32.totalorder %s89, %s90
    %p99 = scmp.eq.s32.totalorder %s16, 0
    %p100 = por %p98, %p99
    %p101 = scmp.ne.s32.totalorder %s89, %s90
    %p102 = scmp.eq.s32.totalorder %s17, 1
    %p103 = por %p101, %p102
    %p105 = scmp.ne.s32.totalorder %s90, %s104
    %p106 = scmp.eq.s32.totalorder %s17, 0
    %p107 = por %p105, %p106
    %s109 = sadd.s32 %s108, 1
    %p112 = scmp.eq.s32.totalorder %s11, 1
    %p113 = scmp.ne.s32.totalorder %s108, %s110
    %p114 = scmp.eq.s32.totalorder %s11, 0
    %p115 = por %p113, %p114
    %p116 = scmp.ne.s32.totalorder %s108, %s110
    %p117 = scmp.eq.s32.totalorder %s16, 1
    %p118 = por %p116, %p117
    %p119 = scmp.ne.s32.totalorder %s110, %s111
    %p120 = scmp.eq.s32.totalorder %s16, 0
    %p121 = por %p119, %p120
    %p122 = scmp.ne.s32.totalorder %s110, %s111
    %p123 = scmp.eq.s32.totalorder %s17, 1
    %p124 = por %p122, %p123
    %p126 = scmp.ne.s32.totalorder %s111, %s125
    %p127 = scmp.eq.s32.totalorder %s17, 0
    %p128 = por %p126, %p127
    %s129 = ssub.s32 %s11, %s18
    %p130 = scmp.eq.s32.totalorder %s129, 0
    %s132 = sadd.s32 %s131, 1
    %s133 = scalar_select %p130, %s131, %s132
    %p136 = pneg %p130
    %p137 = scmp.eq.s32.totalorder %s11, 1
    %p138 = por %p136, %p137
    %p139 = scmp.ne.s32.totalorder %s131, %s134
    %p140 = scmp.eq.s32.totalorder %s11, 0
    %p141 = por %p139, %p140
    %p142 = scmp.ne.s32.totalorder %s131, %s134
    %p143 = scmp.eq.s32.totalorder %s16, 1
    %p144 = por %p142, %p143
    %p145 = scmp.ne.s32.totalorder %s134, %s135
    %p146 = scmp.eq.s32.totalorder %s16, 0
    %p147 = por %p145, %p146
    %p148 = scmp.ne.s32.totalorder %s134, %s135
    %p149 = scmp.eq.s32.totalorder %s17, 1
    %p150 = por %p148, %p149
    %p152 = scmp.ne.s32.totalorder %s135, %s151
    %p153 = scmp.eq.s32.totalorder %s17, 0
    %p154 = por %p152, %p153
    %p155 = scmp.le.s32.totalorder 1, %s11
    %p156 = scmp.lt.s32.totalorder %s11, 3
    %p157 = pnand %p155, %p156
    %p158 = pneg %p157
    // Predicated region
    $region9: #{swin_encoder_block.6} parent=5 // pred_check
      _
    $region10: #{swin_encoder_block.6} parent=5 // pred_check_branch
      %160 = sbr.rel (%p157) target = $region12
    $region11: #{swin_encoder_block.6} parent=5 // pred_region
      %s161 = ssub.s32 %s11, 1
      // Predicated region
      $region13: #{swin_encoder_block.6} parent=11 // pred_check
        %p162 = pneg %p58
      $region14: #{swin_encoder_block.6} parent=11 // pred_check_branch
        %164 = sbr.rel (%p162) target = $region16
      $region15: #{swin_encoder_block.6} parent=11 // pred_region
        _
      $region16: #{swin_encoder_block.6} parent=11 // pred_fallthru
        _
      // Predicated region
      $region17: #{swin_encoder_block.6} parent=11 // pred_check
        %p165 = pneg %p79
      $region18: #{swin_encoder_block.6} parent=11 // pred_check_branch
        %167 = sbr.rel (%p165) target = $region20
      $region19: #{swin_encoder_block.6} parent=11 // pred_region
        _
      $region20: #{swin_encoder_block.6} parent=11 // pred_fallthru
        _
      // Predicated region
      $region21: #{swin_encoder_block.6} parent=11 // pred_check
        %p168 = pneg %p100
      $region22: #{swin_encoder_block.6} parent=11 // pred_check_branch
        %170 = sbr.rel (%p168) target = $region24
      $region23: #{swin_encoder_block.6} parent=11 // pred_region
        _
      $region24: #{swin_encoder_block.6} parent=11 // pred_fallthru
        _
      // Predicated region
      $region25: #{swin_encoder_block.6} parent=11 // pred_check
        %p171 = pneg %p121
      $region26: #{swin_encoder_block.6} parent=11 // pred_check_branch
        %173 = sbr.rel (%p171) target = $region28
      $region27: #{swin_encoder_block.6} parent=11 // pred_region
        _
      $region28: #{swin_encoder_block.6} parent=11 // pred_fallthru
        _
    $region12: #{swin_encoder_block.6} parent=5 // pred_fallthru
      _
    %p174 = scmp.lt.s32.totalorder %s11, 2
    // Predicated region
    $region29: #{swin_encoder_block.6} parent=5 // pred_check
      %p175 = pneg %p174
    $region30: #{swin_encoder_block.6} parent=5 // pred_check_branch
      %177 = sbr.rel (%p175) target = $region32
    $region31: #{swin_encoder_block.6} parent=5 // pred_region
      // Predicated region
      $region33: #{swin_encoder_block.6} parent=31 // pred_check
        %p178 = pneg %p31
      $region34: #{swin_encoder_block.6} parent=31 // pred_check_branch
        %180 = sbr.rel (%p178) target = $region36
      $region35: #{swin_encoder_block.6} parent=31 // pred_region
        %s181 = smul.u32 32, %s11
        %p182 = scmp.lt.s32.totalorder %s181, 63
        %s183 = scalar_select %p182, %s181, 63
        %s184 = smul.addr %s183, 8
        %s185 = scalar_lea.vmem %s0, %s184
        %s186 = smul.u32 32, %s11
      $region36: #{swin_encoder_block.6} parent=31 // pred_fallthru
        _
    $region32: #{swin_encoder_block.6} parent=5 // pred_fallthru
      _
    %p187 = scmp.le.s32.totalorder 1, %s11
    %p188 = scmp.lt.s32.totalorder %s11, 3
    %p189 = pnand %p187, %p188
    %p190 = pneg %p189
    // Predicated region
    $region37: #{swin_encoder_block.6} parent=5 // pred_check
      _
    $region38: #{swin_encoder_block.6} parent=5 // pred_check_branch
      %192 = sbr.rel (%p189) target = $region40
    $region39: #{swin_encoder_block.6} parent=5 // pred_region
      %s193 = ssub.s32 %s11, 1
      %s194 = smul.u32 32, %s16
      %p195 = scmp.lt.s32.totalorder %s194, 63
      %s196 = scalar_select %p195, %s194, 63
      %s197 = smul.addr %s196, 8
      %s198 = scalar_lea.vmem %s0, %s197
      %p199 = pneg %p37
      %p200 = pneg %p34
      %p201 = pneg %p58
      %p202 = pneg %p55
      %p203 = pneg %p79
      %p204 = pneg %p76
      %p205 = pneg %p100
      %p206 = pneg %p97
      %p207 = pneg %p121
      %p208 = pneg %p118
      %p209 = pneg %p147
      %p210 = pneg %p144
      %s211 = smul.u32 32, %s16
      %p212 = scmp.lt.s32.totalorder %s211, 63
      %s213 = scalar_select %p212, %s211, 63
      %s214 = smul.addr %s213, 8
      %s215 = scalar_lea.vmem %s5, %s214
      %s216 = smul.u32 32, %s16
      %p217 = scmp.lt.s32.totalorder %s216, 63
      %s218 = scalar_select %p217, %s216, 63
      %s219 = smul.addr %s218, 8
      %s220 = scalar_lea.vmem %s0, %s219
      %s221 = smul.u32 32, %s16
      %s222 = smul.u32 32, %s16
      %p223 = scmp.lt.s32.totalorder %s222, 63
      %s224 = scalar_select %p223, %s222, 63
      %s225 = smul.addr %s224, 8
      %s226 = scalar_lea.vmem %s5, %s225
      %s227 = smul.u32 32, %s16
      %v228 = vld [vmem:[%s220] sm:$0xff]
      %v229 = vld [vmem:[%s220 + $0x8] sm:$0xff]
      %v230 = vld [vmem:[%s220 + $0x10] sm:$0xff]
      %v231 = vld [vmem:[%s220 + $0x18] sm:$0xff]
      %v232 = vld [vmem:[%s220 + $0x20] sm:$0xff]
      %v233 = vld [vmem:[%s220 + $0x28] sm:$0xff]
      %v234 = vld [vmem:[%s220 + $0x30] sm:$0xff]
      %v235 = vld [vmem:[%s220 + $0x38] sm:$0xff]
      %v236 = vld [vmem:[%s220 + $0x40] sm:$0xff]
      %v237 = vld [vmem:[%s220 + $0x48] sm:$0xff]
      %v238 = vld [vmem:[%s220 + $0x50] sm:$0xff]
      %v239 = vld [vmem:[%s220 + $0x58] sm:$0xff]
      %v240 = vld [vmem:[%s220 + $0x60] sm:$0xff]
      %v241 = vld [vmem:[%s220 + $0x68] sm:$0xff]
      %v242 = vld [vmem:[%s220 + $0x70] sm:$0xff]
      %v243 = vld [vmem:[%s220 + $0x78] sm:$0xff]
      %v244 = vld [vmem:[%s220 + $0x80] sm:$0xff]
      %v245 = vld [vmem:[%s220 + $0x88] sm:$0xff]
      %v246 = vld [vmem:[%s220 + $0x90] sm:$0xff]
      %v247 = vld [vmem:[%s220 + $0x98] sm:$0xff]
      %v248 = vld [vmem:[%s220 + $0xa0] sm:$0xff]
      %v249 = vld [vmem:[%s220 + $0xa8] sm:$0xff]
      %v250 = vld [vmem:[%s220 + $0xb0] sm:$0xff]
      %v251 = vld [vmem:[%s220 + $0xb8] sm:$0xff]
      %v252 = vld [vmem:[%s220 + $0xc0] sm:$0xff]
      %v253 = vld [vmem:[%s220 + $0xc8] sm:$0xff]
      %v254 = vld [vmem:[%s220 + $0xd0] sm:$0xff]
      %v255 = vld [vmem:[%s220 + $0xd8] sm:$0xff]
      %v256 = vld [vmem:[%s220 + $0xe0] sm:$0xff]
      %v257 = vld [vmem:[%s220 + $0xe8] sm:$0xff]
      %v258 = vld [vmem:[%s220 + $0xf0] sm:$0xff]
      %v259 = vld [vmem:[%s220 + $0xf8] sm:$0xff]
      %vm260 = vcmask 261120
      %v261 = vsel %vm260, %v228, 0.0
      %262 = vadd.xlane.f32.xlu0 %v261
      %v263 = vpop.xlane.xlu0 %262
      %v264 = vsel %vm260, %v229, 0.0
      %265 = vadd.xlane.f32.xlu0 %v264
      %v266 = vpop.xlane.xlu0 %265
      %v267 = vsel %vm260, %v230, 0.0
      %268 = vadd.xlane.f32.xlu0 %v267
      %v269 = vpop.xlane.xlu0 %268
      %v270 = vsel %vm260, %v231, 0.0
      %271 = vadd.xlane.f32.xlu0 %v270
      %v272 = vpop.xlane.xlu0 %271
      %v273 = vsel %vm260, %v232, 0.0
      %274 = vadd.xlane.f32.xlu0 %v273
      %v275 = vpop.xlane.xlu0 %274
      %v276 = vsel %vm260, %v233, 0.0
      %277 = vadd.xlane.f32.xlu0 %v276
      %v278 = vpop.xlane.xlu0 %277
      %v279 = vsel %vm260, %v234, 0.0
      %280 = vadd.xlane.f32.xlu0 %v279
      %v281 = vpop.xlane.xlu0 %280
      %v282 = vsel %vm260, %v235, 0.0
      %283 = vadd.xlane.f32.xlu0 %v282
      %v284 = vpop.xlane.xlu0 %283
      %v285 = vsel %vm260, %v236, 0.0
      %286 = vadd.xlane.f32.xlu0 %v285
      %v287 = vpop.xlane.xlu0 %286
      %v288 = vsel %vm260, %v237, 0.0
      %289 = vadd.xlane.f32.xlu0 %v288
      %v290 = vpop.xlane.xlu0 %289
      %v291 = vsel %vm260, %v238, 0.0
      %292 = vadd.xlane.f32.xlu0 %v291
      %v293 = vpop.xlane.xlu0 %292
      %v294 = vsel %vm260, %v239, 0.0
      %295 = vadd.xlane.f32.xlu0 %v294
      %v296 = vpop.xlane.xlu0 %295
      %v297 = vsel %vm260, %v240, 0.0
      %298 = vadd.xlane.f32.xlu0 %v297
      %v299 = vpop.xlane.xlu0 %298
      %v300 = vsel %vm260, %v241, 0.0
      %301 = vadd.xlane.f32.xlu0 %v300
      %v302 = vpop.xlane.xlu0 %301
      %v303 = vsel %vm260, %v242, 0.0
      %304 = vadd.xlane.f32.xlu0 %v303
      %v305 = vpop.xlane.xlu0 %304
      %v306 = vsel %vm260, %v243, 0.0
      %307 = vadd.xlane.f32.xlu0 %v306
      %v308 = vpop.xlane.xlu0 %307
      %v309 = vsel %vm260, %v244, 0.0
      %310 = vadd.xlane.f32.xlu0 %v309
      %v311 = vpop.xlane.xlu0 %310
      %v312 = vsel %vm260, %v245, 0.0
      %313 = vadd.xlane.f32.xlu0 %v312
      %v314 = vpop.xlane.xlu0 %313
      %v315 = vsel %vm260, %v246, 0.0
      %316 = vadd.xlane.f32.xlu0 %v315
      %v317 = vpop.xlane.xlu0 %316
      %v318 = vsel %vm260, %v247, 0.0
      %319 = vadd.xlane.f32.xlu0 %v318
      %v320 = vpop.xlane.xlu0 %319
      %v321 = vsel %vm260, %v248, 0.0
      %322 = vadd.xlane.f32.xlu0 %v321
      %v323 = vpop.xlane.xlu0 %322
      %v324 = vsel %vm260, %v249, 0.0
      %325 = vadd.xlane.f32.xlu0 %v324
      %v326 = vpop.xlane.xlu0 %325
      %v327 = vsel %vm260, %v250, 0.0
      %328 = vadd.xlane.f32.xlu0 %v327
      %v329 = vpop.xlane.xlu0 %328
      %v330 = vsel %vm260, %v251, 0.0
      %331 = vadd.xlane.f32.xlu0 %v330
      %v332 = vpop.xlane.xlu0 %331
      %v333 = vsel %vm260, %v252, 0.0
      %334 = vadd.xlane.f32.xlu0 %v333
      %v335 = vpop.xlane.xlu0 %334
      %v336 = vsel %vm260, %v253, 0.0
      %337 = vadd.xlane.f32.xlu0 %v336
      %v338 = vpop.xlane.xlu0 %337
      %v339 = vsel %vm260, %v254, 0.0
      %340 = vadd.xlane.f32.xlu0 %v339
      %v341 = vpop.xlane.xlu0 %340
      %v342 = vsel %vm260, %v255, 0.0
      %343 = vadd.xlane.f32.xlu0 %v342
      %v344 = vpop.xlane.xlu0 %343
      %v345 = vsel %vm260, %v256, 0.0
      %346 = vadd.xlane.f32.xlu0 %v345
      %v347 = vpop.xlane.xlu0 %346
      %v348 = vsel %vm260, %v257, 0.0
      %349 = vadd.xlane.f32.xlu0 %v348
      %v350 = vpop.xlane.xlu0 %349
      %v351 = vsel %vm260, %v258, 0.0
      %352 = vadd.xlane.f32.xlu0 %v351
      %v353 = vpop.xlane.xlu0 %352
      %v354 = vsel %vm260, %v259, 0.0
      %355 = vadd.xlane.f32.xlu0 %v354
      %v356 = vpop.xlane.xlu0 %355
      %v357 = vrcp.pop 32.0
      %v358 = vmul.f32 32.0, %v357
      %v359 = vsub.f32 1.0, %v358
      %v360 = vmul.f32 %v357, %v359
      %v361 = vadd.f32 %v357, %v360
      %vm362 = vweird.f32 %v357
      %v363 = vsel %vm362, %v357, %v361
      %v364 = vmul.f32 %v263, %v363
      %v365 = vmul.f32 %v266, %v363
      %v366 = vmul.f32 %v269, %v363
      %v367 = vmul.f32 %v272, %v363
      %v368 = vmul.f32 %v275, %v363
      %v369 = vmul.f32 %v278, %v363
      %v370 = vmul.f32 %v281, %v363
      %v371 = vmul.f32 %v284, %v363
      %v372 = vmul.f32 %v287, %v363
      %v373 = vmul.f32 %v290, %v363
      %v374 = vmul.f32 %v293, %v363
      %v375 = vmul.f32 %v296, %v363
      %v376 = vmul.f32 %v299, %v363
      %v377 = vmul.f32 %v302, %v363
      %v378 = vmul.f32 %v305, %v363
      %v379 = vmul.f32 %v308, %v363
      %v380 = vmul.f32 %v311, %v363
      %v381 = vmul.f32 %v314, %v363
      %v382 = vmul.f32 %v317, %v363
      %v383 = vmul.f32 %v320, %v363
      %v384 = vmul.f32 %v323, %v363
      %v385 = vmul.f32 %v326, %v363
      %v386 = vmul.f32 %v329, %v363
      %v387 = vmul.f32 %v332, %v363
      %v388 = vmul.f32 %v335, %v363
      %v389 = vmul.f32 %v338, %v363
      %v390 = vmul.f32 %v341, %v363
      %v391 = vmul.f32 %v344, %v363
      %v392 = vmul.f32 %v347, %v363
      %v393 = vmul.f32 %v350, %v363
      %v394 = vmul.f32 %v353, %v363
      %v395 = vmul.f32 %v356, %v363
      %v396 = vsub.f32 %v228, %v364
      %v397 = vsub.f32 %v229, %v365
      %v398 = vsub.f32 %v230, %v366
      %v399 = vsub.f32 %v231, %v367
      %v400 = vsub.f32 %v232, %v368
      %v401 = vsub.f32 %v233, %v369
      %v402 = vsub.f32 %v234, %v370
      %v403 = vsub.f32 %v235, %v371
      %v404 = vsub.f32 %v236, %v372
      %v405 = vsub.f32 %v237, %v373
      %v406 = vsub.f32 %v238, %v374
      %v407 = vsub.f32 %v239, %v375
      %v408 = vsub.f32 %v240, %v376
      %v409 = vsub.f32 %v241, %v377
      %v410 = vsub.f32 %v242, %v378
      %v411 = vsub.f32 %v243, %v379
      %v412 = vsub.f32 %v244, %v380
      %v413 = vsub.f32 %v245, %v381
      %v414 = vsub.f32 %v246, %v382
      %v415 = vsub.f32 %v247, %v383
      %v416 = vsub.f32 %v248, %v384
      %v417 = vsub.f32 %v249, %v385
      %v418 = vsub.f32 %v250, %v386
      %v419 = vsub.f32 %v251, %v387
      %v420 = vsub.f32 %v252, %v388
      %v421 = vsub.f32 %v253, %v389
      %v422 = vsub.f32 %v254, %v390
      %v423 = vsub.f32 %v255, %v391
      %v424 = vsub.f32 %v256, %v392
      %v425 = vsub.f32 %v257, %v393
      %v426 = vsub.f32 %v258, %v394
      %v427 = vsub.f32 %v259, %v395
      %v428 = vmul.f32 %v396, %v396
      %v429 = vmul.f32 %v397, %v397
      %v430 = vmul.f32 %v398, %v398
      %v431 = vmul.f32 %v399, %v399
      %v432 = vmul.f32 %v400, %v400
      %v433 = vmul.f32 %v401, %v401
      %v434 = vmul.f32 %v402, %v402
      %v435 = vmul.f32 %v403, %v403
      %v436 = vmul.f32 %v404, %v404
      %v437 = vmul.f32 %v405, %v405
      %v438 = vmul.f32 %v406, %v406
      %v439 = vmul.f32 %v407, %v407
      %v440 = vmul.f32 %v408, %v408
      %v441 = vmul.f32 %v409, %v409
      %v442 = vmul.f32 %v410, %v410
      %v443 = vmul.f32 %v411, %v411
      %v444 = vmul.f32 %v412, %v412
      %v445 = vmul.f32 %v413, %v413
      %v446 = vmul.f32 %v414, %v414
      %v447 = vmul.f32 %v415, %v415
      %v448 = vmul.f32 %v416, %v416
      %v449 = vmul.f32 %v417, %v417
      %v450 = vmul.f32 %v418, %v418
      %v451 = vmul.f32 %v419, %v419
      %v452 = vmul.f32 %v420, %v420
      %v453 = vmul.f32 %v421, %v421
      %v454 = vmul.f32 %v422, %v422
      %v455 = vmul.f32 %v423, %v423
      %v456 = vmul.f32 %v424, %v424
      %v457 = vmul.f32 %v425, %v425
      %v458 = vmul.f32 %v426, %v426
      %v459 = vmul.f32 %v427, %v427
      %v460 = vsel %vm260, %v428, 0.0
      %461 = vadd.xlane.f32.xlu0 %v460
      %v462 = vpop.xlane.xlu0 %461
      %v463 = vsel %vm260, %v429, 0.0
      %464 = vadd.xlane.f32.xlu0 %v463
      %v465 = vpop.xlane.xlu0 %464
      %v466 = vsel %vm260, %v430, 0.0
      %467 = vadd.xlane.f32.xlu0 %v466
      %v468 = vpop.xlane.xlu0 %467
      %v469 = vsel %vm260, %v431, 0.0
      %470 = vadd.xlane.f32.xlu0 %v469
      %v471 = vpop.xlane.xlu0 %470
      %v472 = vsel %vm260, %v432, 0.0
      %473 = vadd.xlane.f32.xlu0 %v472
      %v474 = vpop.xlane.xlu0 %473
      %v475 = vsel %vm260, %v433, 0.0
      %476 = vadd.xlane.f32.xlu0 %v475
      %v477 = vpop.xlane.xlu0 %476
      %v478 = vsel %vm260, %v434, 0.0
      %479 = vadd.xlane.f32.xlu0 %v478
      %v480 = vpop.xlane.xlu0 %479
      %v481 = vsel %vm260, %v435, 0.0
      %482 = vadd.xlane.f32.xlu0 %v481
      %v483 = vpop.xlane.xlu0 %482
      %v484 = vsel %vm260, %v436, 0.0
      %485 = vadd.xlane.f32.xlu0 %v484
      %v486 = vpop.xlane.xlu0 %485
      %v487 = vsel %vm260, %v437, 0.0
      %488 = vadd.xlane.f32.xlu0 %v487
      %v489 = vpop.xlane.xlu0 %488
      %v490 = vsel %vm260, %v438, 0.0
      %491 = vadd.xlane.f32.xlu0 %v490
      %v492 = vpop.xlane.xlu0 %491
      %v493 = vsel %vm260, %v439, 0.0
      %494 = vadd.xlane.f32.xlu0 %v493
      %v495 = vpop.xlane.xlu0 %494
      %v496 = vsel %vm260, %v440, 0.0
      %497 = vadd.xlane.f32.xlu0 %v496
      %v498 = vpop.xlane.xlu0 %497
      %v499 = vsel %vm260, %v441, 0.0
      %500 = vadd.xlane.f32.xlu0 %v499
      %v501 = vpop.xlane.xlu0 %500
      %v502 = vsel %vm260, %v442, 0.0
      %503 = vadd.xlane.f32.xlu0 %v502
      %v504 = vpop.xlane.xlu0 %503
      %v505 = vsel %vm260, %v443, 0.0
      %506 = vadd.xlane.f32.xlu0 %v505
      %v507 = vpop.xlane.xlu0 %506
      %v508 = vsel %vm260, %v444, 0.0
      %509 = vadd.xlane.f32.xlu0 %v508
      %v510 = vpop.xlane.xlu0 %509
      %v511 = vsel %vm260, %v445, 0.0
      %512 = vadd.xlane.f32.xlu0 %v511
      %v513 = vpop.xlane.xlu0 %512
      %v514 = vsel %vm260, %v446, 0.0
      %515 = vadd.xlane.f32.xlu0 %v514
      %v516 = vpop.xlane.xlu0 %515
      %v517 = vsel %vm260, %v447, 0.0
      %518 = vadd.xlane.f32.xlu0 %v517
      %v519 = vpop.xlane.xlu0 %518
      %v520 = vsel %vm260, %v448, 0.0
      %521 = vadd.xlane.f32.xlu0 %v520
      %v522 = vpop.xlane.xlu0 %521
      %v523 = vsel %vm260, %v449, 0.0
      %524 = vadd.xlane.f32.xlu0 %v523
      %v525 = vpop.xlane.xlu0 %524
      %v526 = vsel %vm260, %v450, 0.0
      %527 = vadd.xlane.f32.xlu0 %v526
      %v528 = vpop.xlane.xlu0 %527
      %v529 = vsel %vm260, %v451, 0.0
      %530 = vadd.xlane.f32.xlu0 %v529
      %v531 = vpop.xlane.xlu0 %530
      %v532 = vsel %vm260, %v452, 0.0
      %533 = vadd.xlane.f32.xlu0 %v532
      %v534 = vpop.xlane.xlu0 %533
      %v535 = vsel %vm260, %v453, 0.0
      %536 = vadd.xlane.f32.xlu0 %v535
      %v537 = vpop.xlane.xlu0 %536
      %v538 = vsel %vm260, %v454, 0.0
      %539 = vadd.xlane.f32.xlu0 %v538
      %v540 = vpop.xlane.xlu0 %539
      %v541 = vsel %vm260, %v455, 0.0
      %542 = vadd.xlane.f32.xlu0 %v541
      %v543 = vpop.xlane.xlu0 %542
      %v544 = vsel %vm260, %v456, 0.0
      %545 = vadd.xlane.f32.xlu0 %v544
      %v546 = vpop.xlane.xlu0 %545
      %v547 = vsel %vm260, %v457, 0.0
      %548 = vadd.xlane.f32.xlu0 %v547
      %v549 = vpop.xlane.xlu0 %548
      %v550 = vsel %vm260, %v458, 0.0
      %551 = vadd.xlane.f32.xlu0 %v550
      %v552 = vpop.xlane.xlu0 %551
      %v553 = vsel %vm260, %v459, 0.0
      %554 = vadd.xlane.f32.xlu0 %v553
      %v555 = vpop.xlane.xlu0 %554
      %v556 = vmul.f32 %v462, %v363
      %v557 = vmul.f32 %v465, %v363
      %v558 = vmul.f32 %v468, %v363
      %v559 = vmul.f32 %v471, %v363
      %v560 = vmul.f32 %v474, %v363
      %v561 = vmul.f32 %v477, %v363
      %v562 = vmul.f32 %v480, %v363
      %v563 = vmul.f32 %v483, %v363
      %v564 = vmul.f32 %v486, %v363
      %v565 = vmul.f32 %v489, %v363
      %v566 = vmul.f32 %v492, %v363
      %v567 = vmul.f32 %v495, %v363
      %v568 = vmul.f32 %v498, %v363
      %v569 = vmul.f32 %v501, %v363
      %v570 = vmul.f32 %v504, %v363
      %v571 = vmul.f32 %v507, %v363
      %v572 = vmul.f32 %v510, %v363
      %v573 = vmul.f32 %v513, %v363
      %v574 = vmul.f32 %v516, %v363
      %v575 = vmul.f32 %v519, %v363
      %v576 = vmul.f32 %v522, %v363
      %v577 = vmul.f32 %v525, %v363
      %v578 = vmul.f32 %v528, %v363
      %v579 = vmul.f32 %v531, %v363
      %v580 = vmul.f32 %v534, %v363
      %v581 = vmul.f32 %v537, %v363
      %v582 = vmul.f32 %v540, %v363
      %v583 = vmul.f32 %v543, %v363
      %v584 = vmul.f32 %v546, %v363
      %v585 = vmul.f32 %v549, %v363
      %v586 = vmul.f32 %v552, %v363
      %v587 = vmul.f32 %v555, %v363
      %v588 = vadd.f32 %v556, 1e-05
      %v589 = vadd.f32 %v557, 1e-05
      %v590 = vadd.f32 %v558, 1e-05
      %v591 = vadd.f32 %v559, 1e-05
      %v592 = vadd.f32 %v560, 1e-05
      %v593 = vadd.f32 %v561, 1e-05
      %v594 = vadd.f32 %v562, 1e-05
      %v595 = vadd.f32 %v563, 1e-05
      %v596 = vadd.f32 %v564, 1e-05
      %v597 = vadd.f32 %v565, 1e-05
      %v598 = vadd.f32 %v566, 1e-05
      %v599 = vadd.f32 %v567, 1e-05
      %v600 = vadd.f32 %v568, 1e-05
      %v601 = vadd.f32 %v569, 1e-05
      %v602 = vadd.f32 %v570, 1e-05
      %v603 = vadd.f32 %v571, 1e-05
      %v604 = vadd.f32 %v572, 1e-05
      %v605 = vadd.f32 %v573, 1e-05
      %v606 = vadd.f32 %v574, 1e-05
      %v607 = vadd.f32 %v575, 1e-05
      %v608 = vadd.f32 %v576, 1e-05
      %v609 = vadd.f32 %v577, 1e-05
      %v610 = vadd.f32 %v578, 1e-05
      %v611 = vadd.f32 %v579, 1e-05
      %v612 = vadd.f32 %v580, 1e-05
      %v613 = vadd.f32 %v581, 1e-05
      %v614 = vadd.f32 %v582, 1e-05
      %v615 = vadd.f32 %v583, 1e-05
      %v616 = vadd.f32 %v584, 1e-05
      %v617 = vadd.f32 %v585, 1e-05
      %v618 = vadd.f32 %v586, 1e-05
      %v619 = vadd.f32 %v587, 1e-05
      %v620 = vrsqrt.pop %v588
      %v621 = vmul.f32 %v620, %v588
      %v622 = vmul.f32 %v621, %v620
      %v623 = vmul.f32 0.5, %v622
      %v624 = vsub.f32 1.5, %v623
      %v625 = vmul.f32 %v620, %v624
      %vm626 = vweird.f32 %v588
      %vm627 = vweird.f32 %v620
      %vm628 = vmor %vm626, %vm627
      %v629 = vsel %vm628, %v620, %v625
      %v630 = vrsqrt.pop %v589
      %v631 = vmul.f32 %v630, %v589
      %v632 = vmul.f32 %v631, %v630
      %v633 = vmul.f32 0.5, %v632
      %v634 = vsub.f32 1.5, %v633
      %v635 = vmul.f32 %v630, %v634
      %vm636 = vweird.f32 %v589
      %vm637 = vweird.f32 %v630
      %vm638 = vmor %vm636, %vm637
      %v639 = vsel %vm638, %v630, %v635
      %v640 = vrsqrt.pop %v590
      %v641 = vmul.f32 %v640, %v590
      %v642 = vmul.f32 %v641, %v640
      %v643 = vmul.f32 0.5, %v642
      %v644 = vsub.f32 1.5, %v643
      %v645 = vmul.f32 %v640, %v644
      %vm646 = vweird.f32 %v590
      %vm647 = vweird.f32 %v640
      %vm648 = vmor %vm646, %vm647
      %v649 = vsel %vm648, %v640, %v645
      %v650 = vrsqrt.pop %v591
      %v651 = vmul.f32 %v650, %v591
      %v652 = vmul.f32 %v651, %v650
      %v653 = vmul.f32 0.5, %v652
      %v654 = vsub.f32 1.5, %v653
      %v655 = vmul.f32 %v650, %v654
      %vm656 = vweird.f32 %v591
      %vm657 = vweird.f32 %v650
      %vm658 = vmor %vm656, %vm657
      %v659 = vsel %vm658, %v650, %v655
      %v660 = vrsqrt.pop %v592
      %v661 = vmul.f32 %v660, %v592
      %v662 = vmul.f32 %v661, %v660
      %v663 = vmul.f32 0.5, %v662
      %v664 = vsub.f32 1.5, %v663
      %v665 = vmul.f32 %v660, %v664
      %vm666 = vweird.f32 %v592
      %vm667 = vweird.f32 %v660
      %vm668 = vmor %vm666, %vm667
      %v669 = vsel %vm668, %v660, %v665
      %v670 = vrsqrt.pop %v593
      %v671 = vmul.f32 %v670, %v593
      %v672 = vmul.f32 %v671, %v670
      %v673 = vmul.f32 0.5, %v672
      %v674 = vsub.f32 1.5, %v673
      %v675 = vmul.f32 %v670, %v674
      %vm676 = vweird.f32 %v593
      %vm677 = vweird.f32 %v670
      %vm678 = vmor %vm676, %vm677
      %v679 = vsel %vm678, %v670, %v675
      %v680 = vrsqrt.pop %v594
      %v681 = vmul.f32 %v680, %v594
      %v682 = vmul.f32 %v681, %v680
      %v683 = vmul.f32 0.5, %v682
      %v684 = vsub.f32 1.5, %v683
      %v685 = vmul.f32 %v680, %v684
      %vm686 = vweird.f32 %v594
      %vm687 = vweird.f32 %v680
      %vm688 = vmor %vm686, %vm687
      %v689 = vsel %vm688, %v680, %v685
      %v690 = vrsqrt.pop %v595
      %v691 = vmul.f32 %v690, %v595
      %v692 = vmul.f32 %v691, %v690
      %v693 = vmul.f32 0.5, %v692
      %v694 = vsub.f32 1.5, %v693
      %v695 = vmul.f32 %v690, %v694
      %vm696 = vweird.f32 %v595
      %vm697 = vweird.f32 %v690
      %vm698 = vmor %vm696, %vm697
      %v699 = vsel %vm698, %v690, %v695
      %v700 = vrsqrt.pop %v596
      %v701 = vmul.f32 %v700, %v596
      %v702 = vmul.f32 %v701, %v700
      %v703 = vmul.f32 0.5, %v702
      %v704 = vsub.f32 1.5, %v703
      %v705 = vmul.f32 %v700, %v704
      %vm706 = vweird.f32 %v596
      %vm707 = vweird.f32 %v700
      %vm708 = vmor %vm706, %vm707
      %v709 = vsel %vm708, %v700, %v705
      %v710 = vrsqrt.pop %v597
      %v711 = vmul.f32 %v710, %v597
      %v712 = vmul.f32 %v711, %v710
      %v713 = vmul.f32 0.5, %v712
      %v714 = vsub.f32 1.5, %v713
      %v715 = vmul.f32 %v710, %v714
      %vm716 = vweird.f32 %v597
      %vm717 = vweird.f32 %v710
      %vm718 = vmor %vm716, %vm717
      %v719 = vsel %vm718, %v710, %v715
      %v720 = vrsqrt.pop %v598
      %v721 = vmul.f32 %v720, %v598
      %v722 = vmul.f32 %v721, %v720
      %v723 = vmul.f32 0.5, %v722
      %v724 = vsub.f32 1.5, %v723
      %v725 = vmul.f32 %v720, %v724
      %vm726 = vweird.f32 %v598
      %vm727 = vweird.f32 %v720
      %vm728 = vmor %vm726, %vm727
      %v729 = vsel %vm728, %v720, %v725
      %v730 = vrsqrt.pop %v599
      %v731 = vmul.f32 %v730, %v599
      %v732 = vmul.f32 %v731, %v730
      %v733 = vmul.f32 0.5, %v732
      %v734 = vsub.f32 1.5, %v733
      %v735 = vmul.f32 %v730, %v734
      %vm736 = vweird.f32 %v599
      %vm737 = vweird.f32 %v730
      %vm738 = vmor %vm736, %vm737
      %v739 = vsel %vm738, %v730, %v735
      %v740 = vrsqrt.pop %v600
      %v741 = vmul.f32 %v740, %v600
      %v742 = vmul.f32 %v741, %v740
      %v743 = vmul.f32 0.5, %v742
      %v744 = vsub.f32 1.5, %v743
      %v745 = vmul.f32 %v740, %v744
      %vm746 = vweird.f32 %v600
      %vm747 = vweird.f32 %v740
      %vm748 = vmor %vm746, %vm747
      %v749 = vsel %vm748, %v740, %v745
      %v750 = vrsqrt.pop %v601
      %v751 = vmul.f32 %v750, %v601
      %v752 = vmul.f32 %v751, %v750
      %v753 = vmul.f32 0.5, %v752
      %v754 = vsub.f32 1.5, %v753
      %v755 = vmul.f32 %v750, %v754
      %vm756 = vweird.f32 %v601
      %vm757 = vweird.f32 %v750
      %vm758 = vmor %vm756, %vm757
      %v759 = vsel %vm758, %v750, %v755
      %v760 = vrsqrt.pop %v602
      %v761 = vmul.f32 %v760, %v602
      %v762 = vmul.f32 %v761, %v760
      %v763 = vmul.f32 0.5, %v762
      %v764 = vsub.f32 1.5, %v763
      %v765 = vmul.f32 %v760, %v764
      %vm766 = vweird.f32 %v602
      %vm767 = vweird.f32 %v760
      %vm768 = vmor %vm766, %vm767
      %v769 = vsel %vm768, %v760, %v765
      %v770 = vrsqrt.pop %v603
      %v771 = vmul.f32 %v770, %v603
      %v772 = vmul.f32 %v771, %v770
      %v773 = vmul.f32 0.5, %v772
      %v774 = vsub.f32 1.5, %v773
      %v775 = vmul.f32 %v770, %v774
      %vm776 = vweird.f32 %v603
      %vm777 = vweird.f32 %v770
      %vm778 = vmor %vm776, %vm777
      %v779 = vsel %vm778, %v770, %v775
      %v780 = vrsqrt.pop %v604
      %v781 = vmul.f32 %v780, %v604
      %v782 = vmul.f32 %v781, %v780
      %v783 = vmul.f32 0.5, %v782
      %v784 = vsub.f32 1.5, %v783
      %v785 = vmul.f32 %v780, %v784
      %vm786 = vweird.f32 %v604
      %vm787 = vweird.f32 %v780
      %vm788 = vmor %vm786, %vm787
      %v789 = vsel %vm788, %v780, %v785
      %v790 = vrsqrt.pop %v605
      %v791 = vmul.f32 %v790, %v605
      %v792 = vmul.f32 %v791, %v790
      %v793 = vmul.f32 0.5, %v792
      %v794 = vsub.f32 1.5, %v793
      %v795 = vmul.f32 %v790, %v794
      %vm796 = vweird.f32 %v605
      %vm797 = vweird.f32 %v790
      %vm798 = vmor %vm796, %vm797
      %v799 = vsel %vm798, %v790, %v795
      %v800 = vrsqrt.pop %v606
      %v801 = vmul.f32 %v800, %v606
      %v802 = vmul.f32 %v801, %v800
      %v803 = vmul.f32 0.5, %v802
      %v804 = vsub.f32 1.5, %v803
      %v805 = vmul.f32 %v800, %v804
      %vm806 = vweird.f32 %v606
      %vm807 = vweird.f32 %v800
      %vm808 = vmor %vm806, %vm807
      %v809 = vsel %vm808, %v800, %v805
      %v810 = vrsqrt.pop %v607
      %v811 = vmul.f32 %v810, %v607
      %v812 = vmul.f32 %v811, %v810
      %v813 = vmul.f32 0.5, %v812
      %v814 = vsub.f32 1.5, %v813
      %v815 = vmul.f32 %v810, %v814
      %vm816 = vweird.f32 %v607
      %vm817 = vweird.f32 %v810
      %vm818 = vmor %vm816, %vm817
      %v819 = vsel %vm818, %v810, %v815
      %v820 = vrsqrt.pop %v608
      %v821 = vmul.f32 %v820, %v608
      %v822 = vmul.f32 %v821, %v820
      %v823 = vmul.f32 0.5, %v822
      %v824 = vsub.f32 1.5, %v823
      %v825 = vmul.f32 %v820, %v824
      %vm826 = vweird.f32 %v608
      %vm827 = vweird.f32 %v820
      %vm828 = vmor %vm826, %vm827
      %v829 = vsel %vm828, %v820, %v825
      %v830 = vrsqrt.pop %v609
      %v831 = vmul.f32 %v830, %v609
      %v832 = vmul.f32 %v831, %v830
      %v833 = vmul.f32 0.5, %v832
      %v834 = vsub.f32 1.5, %v833
      %v835 = vmul.f32 %v830, %v834
      %vm836 = vweird.f32 %v609
      %vm837 = vweird.f32 %v830
      %vm838 = vmor %vm836, %vm837
      %v839 = vsel %vm838, %v830, %v835
      %v840 = vrsqrt.pop %v610
      %v841 = vmul.f32 %v840, %v610
      %v842 = vmul.f32 %v841, %v840
      %v843 = vmul.f32 0.5, %v842
      %v844 = vsub.f32 1.5, %v843
      %v845 = vmul.f32 %v840, %v844
      %vm846 = vweird.f32 %v610
      %vm847 = vweird.f32 %v840
      %vm848 = vmor %vm846, %vm847
      %v849 = vsel %vm848, %v840, %v845
      %v850 = vrsqrt.pop %v611
      %v851 = vmul.f32 %v850, %v611
      %v852 = vmul.f32 %v851, %v850
      %v853 = vmul.f32 0.5, %v852
      %v854 = vsub.f32 1.5, %v853
      %v855 = vmul.f32 %v850, %v854
      %vm856 = vweird.f32 %v611
      %vm857 = vweird.f32 %v850
      %vm858 = vmor %vm856, %vm857
      %v859 = vsel %vm858, %v850, %v855
      %v860 = vrsqrt.pop %v612
      %v861 = vmul.f32 %v860, %v612
      %v862 = vmul.f32 %v861, %v860
      %v863 = vmul.f32 0.5, %v862
      %v864 = vsub.f32 1.5, %v863
      %v865 = vmul.f32 %v860, %v864
      %vm866 = vweird.f32 %v612
      %vm867 = vweird.f32 %v860
      %vm868 = vmor %vm866, %vm867
      %v869 = vsel %vm868, %v860, %v865
      %v870 = vrsqrt.pop %v613
      %v871 = vmul.f32 %v870, %v613
      %v872 = vmul.f32 %v871, %v870
      %v873 = vmul.f32 0.5, %v872
      %v874 = vsub.f32 1.5, %v873
      %v875 = vmul.f32 %v870, %v874
      %vm876 = vweird.f32 %v613
      %vm877 = vweird.f32 %v870
      %vm878 = vmor %vm876, %vm877
      %v879 = vsel %vm878, %v870, %v875
      %v880 = vrsqrt.pop %v614
      %v881 = vmul.f32 %v880, %v614
      %v882 = vmul.f32 %v881, %v880
      %v883 = vmul.f32 0.5, %v882
      %v884 = vsub.f32 1.5, %v883
      %v885 = vmul.f32 %v880, %v884
      %vm886 = vweird.f32 %v614
      %vm887 = vweird.f32 %v880
      %vm888 = vmor %vm886, %vm887
      %v889 = vsel %vm888, %v880, %v885
      %v890 = vrsqrt.pop %v615
      %v891 = vmul.f32 %v890, %v615
      %v892 = vmul.f32 %v891, %v890
      %v893 = vmul.f32 0.5, %v892
      %v894 = vsub.f32 1.5, %v893
      %v895 = vmul.f32 %v890, %v894
      %vm896 = vweird.f32 %v615
      %vm897 = vweird.f32 %v890
      %vm898 = vmor %vm896, %vm897
      %v899 = vsel %vm898, %v890, %v895
      %v900 = vrsqrt.pop %v616
      %v901 = vmul.f32 %v900, %v616
      %v902 = vmul.f32 %v901, %v900
      %v903 = vmul.f32 0.5, %v902
      %v904 = vsub.f32 1.5, %v903
      %v905 = vmul.f32 %v900, %v904
      %vm906 = vweird.f32 %v616
      %vm907 = vweird.f32 %v900
      %vm908 = vmor %vm906, %vm907
      %v909 = vsel %vm908, %v900, %v905
      %v910 = vrsqrt.pop %v617
      %v911 = vmul.f32 %v910, %v617
      %v912 = vmul.f32 %v911, %v910
      %v913 = vmul.f32 0.5, %v912
      %v914 = vsub.f32 1.5, %v913
      %v915 = vmul.f32 %v910, %v914
      %vm916 = vweird.f32 %v617
      %vm917 = vweird.f32 %v910
      %vm918 = vmor %vm916, %vm917
      %v919 = vsel %vm918, %v910, %v915
      %v920 = vrsqrt.pop %v618
      %v921 = vmul.f32 %v920, %v618
      %v922 = vmul.f32 %v921, %v920
      %v923 = vmul.f32 0.5, %v922
      %v924 = vsub.f32 1.5, %v923
      %v925 = vmul.f32 %v920, %v924
      %vm926 = vweird.f32 %v618
      %vm927 = vweird.f32 %v920
      %vm928 = vmor %vm926, %vm927
      %v929 = vsel %vm928, %v920, %v925
      %v930 = vrsqrt.pop %v619
      %v931 = vmul.f32 %v930, %v619
      %v932 = vmul.f32 %v931, %v930
      %v933 = vmul.f32 0.5, %v932
      %v934 = vsub.f32 1.5, %v933
      %v935 = vmul.f32 %v930, %v934
      %vm936 = vweird.f32 %v619
      %vm937 = vweird.f32 %v930
      %vm938 = vmor %vm936, %vm937
      %v939 = vsel %vm938, %v930, %v935
      %v940 = vmul.f32 %v396, %v629
      %v941 = vmul.f32 %v397, %v639
      %v942 = vmul.f32 %v398, %v649
      %v943 = vmul.f32 %v399, %v659
      %v944 = vmul.f32 %v400, %v669
      %v945 = vmul.f32 %v401, %v679
      %v946 = vmul.f32 %v402, %v689
      %v947 = vmul.f32 %v403, %v699
      %v948 = vmul.f32 %v404, %v709
      %v949 = vmul.f32 %v405, %v719
      %v950 = vmul.f32 %v406, %v729
      %v951 = vmul.f32 %v407, %v739
      %v952 = vmul.f32 %v408, %v749
      %v953 = vmul.f32 %v409, %v759
      %v954 = vmul.f32 %v410, %v769
      %v955 = vmul.f32 %v411, %v779
      %v956 = vmul.f32 %v412, %v789
      %v957 = vmul.f32 %v413, %v799
      %v958 = vmul.f32 %v414, %v809
      %v959 = vmul.f32 %v415, %v819
      %v960 = vmul.f32 %v416, %v829
      %v961 = vmul.f32 %v417, %v839
      %v962 = vmul.f32 %v418, %v849
      %v963 = vmul.f32 %v419, %v859
      %v964 = vmul.f32 %v420, %v869
      %v965 = vmul.f32 %v421, %v879
      %v966 = vmul.f32 %v422, %v889
      %v967 = vmul.f32 %v423, %v899
      %v968 = vmul.f32 %v424, %v909
      %v969 = vmul.f32 %v425, %v919
      %v970 = vmul.f32 %v426, %v929
      %v971 = vmul.f32 %v427, %v939
      %v972 = vld [vmem:[%s1] sm:$0x1]
      %v974 = vperm.slane %v972, 0
      %v976 = vmul.f32 %v940, %v974
      %v977 = vmul.f32 %v941, %v974
      %v978 = vmul.f32 %v942, %v974
      %v979 = vmul.f32 %v943, %v974
      %v980 = vmul.f32 %v944, %v974
      %v981 = vmul.f32 %v945, %v974
      %v982 = vmul.f32 %v946, %v974
      %v983 = vmul.f32 %v947, %v974
      %v984 = vmul.f32 %v948, %v974
      %v985 = vmul.f32 %v949, %v974
      %v986 = vmul.f32 %v950, %v974
      %v987 = vmul.f32 %v951, %v974
      %v988 = vmul.f32 %v952, %v974
      %v989 = vmul.f32 %v953, %v974
      %v990 = vmul.f32 %v954, %v974
      %v991 = vmul.f32 %v955, %v974
      %v992 = vmul.f32 %v956, %v974
      %v993 = vmul.f32 %v957, %v974
      %v994 = vmul.f32 %v958, %v974
      %v995 = vmul.f32 %v959, %v974
      %v996 = vmul.f32 %v960, %v974
      %v997 = vmul.f32 %v961, %v974
      %v998 = vmul.f32 %v962, %v974
      %v999 = vmul.f32 %v963, %v974
      %v1000 = vmul.f32 %v964, %v974
      %v1001 = vmul.f32 %v965, %v974
      %v1002 = vmul.f32 %v966, %v974
      %v1003 = vmul.f32 %v967, %v974
      %v1004 = vmul.f32 %v968, %v974
      %v1005 = vmul.f32 %v969, %v974
      %v1006 = vmul.f32 %v970, %v974
      %v1007 = vmul.f32 %v971, %v974
      %v1008 = vld [vmem:[%s2] sm:$0x1]
      %v1010 = vperm.slane %v1008, 0
      %v1012 = vadd.f32 %v976, %v1010
      %v1013 = vadd.f32 %v977, %v1010
      %v1014 = vadd.f32 %v978, %v1010
      %v1015 = vadd.f32 %v979, %v1010
      %v1016 = vadd.f32 %v980, %v1010
      %v1017 = vadd.f32 %v981, %v1010
      %v1018 = vadd.f32 %v982, %v1010
      %v1019 = vadd.f32 %v983, %v1010
      %v1020 = vadd.f32 %v984, %v1010
      %v1021 = vadd.f32 %v985, %v1010
      %v1022 = vadd.f32 %v986, %v1010
      %v1023 = vadd.f32 %v987, %v1010
      %v1024 = vadd.f32 %v988, %v1010
      %v1025 = vadd.f32 %v989, %v1010
      %v1026 = vadd.f32 %v990, %v1010
      %v1027 = vadd.f32 %v991, %v1010
      %v1028 = vadd.f32 %v992, %v1010
      %v1029 = vadd.f32 %v993, %v1010
      %v1030 = vadd.f32 %v994, %v1010
      %v1031 = vadd.f32 %v995, %v1010
      %v1032 = vadd.f32 %v996, %v1010
      %v1033 = vadd.f32 %v997, %v1010
      %v1034 = vadd.f32 %v998, %v1010
      %v1035 = vadd.f32 %v999, %v1010
      %v1036 = vadd.f32 %v1000, %v1010
      %v1037 = vadd.f32 %v1001, %v1010
      %v1038 = vadd.f32 %v1002, %v1010
      %v1039 = vadd.f32 %v1003, %v1010
      %v1040 = vadd.f32 %v1004, %v1010
      %v1041 = vadd.f32 %v1005, %v1010
      %v1042 = vadd.f32 %v1006, %v1010
      %v1043 = vadd.f32 %v1007, %v1010
      %v1044 = vld [vmem:[%s3] sm:$0xff]
      %v1045 = vld [vmem:[%s3 + $0x8] sm:$0xff]
      %v1046 = vld [vmem:[%s3 + $0x10] sm:$0xff]
      %v1047 = vld [vmem:[%s3 + $0x18] sm:$0xff]
      %v1048 = vld [vmem:[%s4] sm:$0x1]
      %v1050 = vperm.slane %v1048, 0
      %v1053 = vsel %vm260, %v1012, 0
      %v1056 = vsel %vm260, %v1013, 0
      %v1059 = vsel %vm260, %v1014, 0
      %v1062 = vsel %vm260, %v1015, 0
      %v1065 = vsel %vm260, %v1016, 0
      %v1068 = vsel %vm260, %v1017, 0
      %v1071 = vsel %vm260, %v1018, 0
      %v1074 = vsel %vm260, %v1019, 0
      %v1077 = vsel %vm260, %v1020, 0
      %v1080 = vsel %vm260, %v1021, 0
      %v1083 = vsel %vm260, %v1022, 0
      %v1086 = vsel %vm260, %v1023, 0
      %v1089 = vsel %vm260, %v1024, 0
      %v1092 = vsel %vm260, %v1025, 0
      %v1095 = vsel %vm260, %v1026, 0
      %v1098 = vsel %vm260, %v1027, 0
      %v1101 = vsel %vm260, %v1028, 0
      %v1104 = vsel %vm260, %v1029, 0
      %v1107 = vsel %vm260, %v1030, 0
      %v1110 = vsel %vm260, %v1031, 0
      %v1113 = vsel %vm260, %v1032, 0
      %v1116 = vsel %vm260, %v1033, 0
      %v1119 = vsel %vm260, %v1034, 0
      %v1122 = vsel %vm260, %v1035, 0
      %v1125 = vsel %vm260, %v1036, 0
      %v1128 = vsel %vm260, %v1037, 0
      %v1131 = vsel %vm260, %v1038, 0
      %v1134 = vsel %vm260, %v1039, 0
      %v1137 = vsel %vm260, %v1040, 0
      %v1140 = vsel %vm260, %v1041, 0
      %v1143 = vsel %vm260, %v1042, 0
      %v1146 = vsel %vm260, %v1043, 0
      %1148 = vmatpush.msra.mxu0 0.0
      %1149 = vmatpush.msra.mxu0 0.0
      %1150 = vmatpush.msra.mxu0 0.0
      %1151 = vmatpush.msra.mxu0 0.0
      %1152 = vmatpush.msra.mxu0 0.0
      %1153 = vmatpush.msra.mxu0 0.0
      %1154 = vmatpush.msra.mxu0 0.0
      %1155 = vmatpush.msra.mxu0 0.0
      %1156 = vmatpush.msra.mxu0 0.0
      %1157 = vmatpush.msra.mxu0 0.0
      %1158 = vmatpush.msra.mxu0 0.0
      %1159 = vmatpush.msra.mxu0 0.0
      %1160 = vmatpush.msra.mxu0 %v1047
      %1161 = vmatpush.msra.mxu0 %v1046
      %1162 = vmatpush.msra.mxu0 %v1045
      %1163 = vmatpush.msra.mxu0 %v1044
      %1164 = vmatmul.f32.gmra.mxu0 %v1053
      %v1165 = vpop.f32.mrf.mxu0
      %v1166 = vadd.f32 %v1050, %v1165
      %1167 = vmatmul.f32.gmra.mxu0 %v1056
      %v1168 = vpop.f32.mrf.mxu0
      %v1169 = vadd.f32 %v1050, %v1168
      %1170 = vmatmul.f32.gmra.mxu0 %v1059
      %v1171 = vpop.f32.mrf.mxu0
      %v1172 = vadd.f32 %v1050, %v1171
      %1173 = vmatmul.f32.gmra.mxu0 %v1062
      %v1174 = vpop.f32.mrf.mxu0
      %v1175 = vadd.f32 %v1050, %v1174
      %1176 = vmatmul.f32.gmra.mxu0 %v1065
      %v1177 = vpop.f32.mrf.mxu0
      %v1178 = vadd.f32 %v1050, %v1177
      %1179 = vmatmul.f32.gmra.mxu0 %v1068
      %v1180 = vpop.f32.mrf.mxu0
      %v1181 = vadd.f32 %v1050, %v1180
      %1182 = vmatmul.f32.gmra.mxu0 %v1071
      %v1183 = vpop.f32.mrf.mxu0
      %v1184 = vadd.f32 %v1050, %v1183
      %1185 = vmatmul.f32.gmra.mxu0 %v1074
      %v1186 = vpop.f32.mrf.mxu0
      %v1187 = vadd.f32 %v1050, %v1186
      %1188 = vmatmul.f32.gmra.mxu0 %v1077
      %v1189 = vpop.f32.mrf.mxu0
      %v1190 = vadd.f32 %v1050, %v1189
      %1191 = vmatmul.f32.gmra.mxu0 %v1080
      %v1192 = vpop.f32.mrf.mxu0
      %v1193 = vadd.f32 %v1050, %v1192
      %1194 = vmatmul.f32.gmra.mxu0 %v1083
      %v1195 = vpop.f32.mrf.mxu0
      %v1196 = vadd.f32 %v1050, %v1195
      %1197 = vmatmul.f32.gmra.mxu0 %v1086
      %v1198 = vpop.f32.mrf.mxu0
      %v1199 = vadd.f32 %v1050, %v1198
      %1200 = vmatmul.f32.gmra.mxu0 %v1089
      %v1201 = vpop.f32.mrf.mxu0
      %v1202 = vadd.f32 %v1050, %v1201
      %1203 = vmatmul.f32.gmra.mxu0 %v1092
      %v1204 = vpop.f32.mrf.mxu0
      %v1205 = vadd.f32 %v1050, %v1204
      %1206 = vmatmul.f32.gmra.mxu0 %v1095
      %v1207 = vpop.f32.mrf.mxu0
      %v1208 = vadd.f32 %v1050, %v1207
      %1209 = vmatmul.f32.gmra.mxu0 %v1098
      %v1210 = vpop.f32.mrf.mxu0
      %v1211 = vadd.f32 %v1050, %v1210
      %1212 = vmatmul.f32.gmra.mxu0 %v1101
      %v1213 = vpop.f32.mrf.mxu0
      %v1214 = vadd.f32 %v1050, %v1213
      %1215 = vmatmul.f32.gmra.mxu0 %v1104
      %v1216 = vpop.f32.mrf.mxu0
      %v1217 = vadd.f32 %v1050, %v1216
      %1218 = vmatmul.f32.gmra.mxu0 %v1107
      %v1219 = vpop.f32.mrf.mxu0
      %v1220 = vadd.f32 %v1050, %v1219
      %1221 = vmatmul.f32.gmra.mxu0 %v1110
      %v1222 = vpop.f32.mrf.mxu0
      %v1223 = vadd.f32 %v1050, %v1222
      %1224 = vmatmul.f32.gmra.mxu0 %v1113
      %v1225 = vpop.f32.mrf.mxu0
      %v1226 = vadd.f32 %v1050, %v1225
      %1227 = vmatmul.f32.gmra.mxu0 %v1116
      %v1228 = vpop.f32.mrf.mxu0
      %v1229 = vadd.f32 %v1050, %v1228
      %1230 = vmatmul.f32.gmra.mxu0 %v1119
      %v1231 = vpop.f32.mrf.mxu0
      %v1232 = vadd.f32 %v1050, %v1231
      %1233 = vmatmul.f32.gmra.mxu0 %v1122
      %v1234 = vpop.f32.mrf.mxu0
      %v1235 = vadd.f32 %v1050, %v1234
      %1236 = vmatmul.f32.gmra.mxu0 %v1125
      %v1237 = vpop.f32.mrf.mxu0
      %v1238 = vadd.f32 %v1050, %v1237
      %1239 = vmatmul.f32.gmra.mxu0 %v1128
      %v1240 = vpop.f32.mrf.mxu0
      %v1241 = vadd.f32 %v1050, %v1240
      %1242 = vmatmul.f32.gmra.mxu0 %v1131
      %v1243 = vpop.f32.mrf.mxu0
      %v1244 = vadd.f32 %v1050, %v1243
      %1245 = vmatmul.f32.gmra.mxu0 %v1134
      %v1246 = vpop.f32.mrf.mxu0
      %v1247 = vadd.f32 %v1050, %v1246
      %1248 = vmatmul.f32.gmra.mxu0 %v1137
      %v1249 = vpop.f32.mrf.mxu0
      %v1250 = vadd.f32 %v1050, %v1249
      %1251 = vmatmul.f32.gmra.mxu0 %v1140
      %v1252 = vpop.f32.mrf.mxu0
      %v1253 = vadd.f32 %v1050, %v1252
      %1254 = vmatmul.f32.gmra.mxu0 %v1143
      %v1255 = vpop.f32.mrf.mxu0
      %v1256 = vadd.f32 %v1050, %v1255
      %1257 = vmatmul.f32.gmra.mxu0 %v1146
      %v1258 = vpop.f32.mrf.mxu0
      %v1259 = vadd.f32 %v1050, %v1258
      %1260 = vdwg.mxu0
      %1261 = vst.msk [vmem:[%s226] sm:$0xff] %vm260, %v1166
      %1262 = vst.msk [vmem:[%s226 + $0x8] sm:$0xff] %vm260, %v1169
      %1263 = vst.msk [vmem:[%s226 + $0x10] sm:$0xff] %vm260, %v1172
      %1264 = vst.msk [vmem:[%s226 + $0x18] sm:$0xff] %vm260, %v1175
      %1265 = vst.msk [vmem:[%s226 + $0x20] sm:$0xff] %vm260, %v1178
      %1266 = vst.msk [vmem:[%s226 + $0x28] sm:$0xff] %vm260, %v1181
      %1267 = vst.msk [vmem:[%s226 + $0x30] sm:$0xff] %vm260, %v1184
      %1268 = vst.msk [vmem:[%s226 + $0x38] sm:$0xff] %vm260, %v1187
      %1269 = vst.msk [vmem:[%s226 + $0x40] sm:$0xff] %vm260, %v1190
      %1270 = vst.msk [vmem:[%s226 + $0x48] sm:$0xff] %vm260, %v1193
      %1271 = vst.msk [vmem:[%s226 + $0x50] sm:$0xff] %vm260, %v1196
      %1272 = vst.msk [vmem:[%s226 + $0x58] sm:$0xff] %vm260, %v1199
      %1273 = vst.msk [vmem:[%s226 + $0x60] sm:$0xff] %vm260, %v1202
      %1274 = vst.msk [vmem:[%s226 + $0x68] sm:$0xff] %vm260, %v1205
      %1275 = vst.msk [vmem:[%s226 + $0x70] sm:$0xff] %vm260, %v1208
      %1276 = vst.msk [vmem:[%s226 + $0x78] sm:$0xff] %vm260, %v1211
      %1277 = vst.msk [vmem:[%s226 + $0x80] sm:$0xff] %vm260, %v1214
      %1278 = vst.msk [vmem:[%s226 + $0x88] sm:$0xff] %vm260, %v1217
      %1279 = vst.msk [vmem:[%s226 + $0x90] sm:$0xff] %vm260, %v1220
      %1280 = vst.msk [vmem:[%s226 + $0x98] sm:$0xff] %vm260, %v1223
      %1281 = vst.msk [vmem:[%s226 + $0xa0] sm:$0xff] %vm260, %v1226
      %1282 = vst.msk [vmem:[%s226 + $0xa8] sm:$0xff] %vm260, %v1229
      %1283 = vst.msk [vmem:[%s226 + $0xb0] sm:$0xff] %vm260, %v1232
      %1284 = vst.msk [vmem:[%s226 + $0xb8] sm:$0xff] %vm260, %v1235
      %1285 = vst.msk [vmem:[%s226 + $0xc0] sm:$0xff] %vm260, %v1238
      %1286 = vst.msk [vmem:[%s226 + $0xc8] sm:$0xff] %vm260, %v1241
      %1287 = vst.msk [vmem:[%s226 + $0xd0] sm:$0xff] %vm260, %v1244
      %1288 = vst.msk [vmem:[%s226 + $0xd8] sm:$0xff] %vm260, %v1247
      %1289 = vst.msk [vmem:[%s226 + $0xe0] sm:$0xff] %vm260, %v1250
      %1290 = vst.msk [vmem:[%s226 + $0xe8] sm:$0xff] %vm260, %v1253
      %1291 = vst.msk [vmem:[%s226 + $0xf0] sm:$0xff] %vm260, %v1256
      %1292 = vst.msk [vmem:[%s226 + $0xf8] sm:$0xff] %vm260, %v1259
      %s1293 = smul.u32 32, %s16
      %p1294 = scmp.lt.s32.totalorder %s1293, 63
      %s1295 = scalar_select %p1294, %s1293, 63
      %s1296 = smul.addr %s1295, 8
      %s1297 = scalar_lea.vmem %s5, %s1296
      // Predicated region
      $region41: #{swin_encoder_block.6} parent=39 // pred_check
        %p1298 = pneg %p144
      $region42: #{swin_encoder_block.6} parent=39 // pred_check_branch
        %1300 = sbr.rel (%p1298) target = $region44
      $region43: #{swin_encoder_block.6} parent=39 // pred_region
        %s1301 = smul.u32 32, %s16
      $region44: #{swin_encoder_block.6} parent=39 // pred_fallthru
        _
    $region40: #{swin_encoder_block.6} parent=5 // pred_fallthru
      _
    %p1302 = scmp.le.s32.totalorder 2, %s11
    // Predicated region
    $region45: #{swin_encoder_block.6} parent=5 // pred_check
      %p1303 = pneg %p1302
    $region46: #{swin_encoder_block.6} parent=5 // pred_check_branch
      %1305 = sbr.rel (%p1303) target = $region48
    $region47: #{swin_encoder_block.6} parent=5 // pred_region
      %s1306 = ssub.s32 %s11, 2
      // Predicated region
      $region49: #{swin_encoder_block.6} parent=47 // pred_check
        %p1307 = pneg %p150
      $region50: #{swin_encoder_block.6} parent=47 // pred_check_branch
        %1309 = sbr.rel (%p1307) target = $region52
      $region51: #{swin_encoder_block.6} parent=47 // pred_region
        %s1310 = smul.u32 32, %s17
        %p1311 = scmp.lt.s32.totalorder %s1310, 63
        %s1312 = scalar_select %p1311, %s1310, 63
        %s1313 = smul.addr %s1312, 8
        %s1314 = scalar_lea.vmem %s5, %s1313
      $region52: #{swin_encoder_block.6} parent=47 // pred_fallthru
        _
    $region48: #{swin_encoder_block.6} parent=5 // pred_fallthru
      _
  $region6: #{swin_encoder_block.6} parent=0 // loop_footer
    %s15 = sadd.s32 1, %s11
  $region7: #{swin_encoder_block.6} parent=0 // loop_footer_branch
    %10 = sbr.rel target = $region3
  $region8: #{swin_encoder_block.6} parent=0 // loop_exit
    _

// kernel: swin_encoder_block.8
$region0: #{swin_encoder_block.8}
  #allocation0 [shape = 'u32[]', space=smem, size = 0x4, offset = 0x4, fixed_abs, tag = 'smem constant byte address 0x4 - core index']
  #allocation1 [shape = 'u32[72,128]{1,0:T(1,128)}', space=vmem, size = 0x9000, scoped, tag = 'internal scratch']
  %s0 = inlined_call_operand.vmem [shape: f32[512,32], index: 0, kind: input, shape index: {}]
  %s1 = inlined_call_operand.vmem [shape: f32[32,128], index: 1, kind: input, shape index: {}]
  %s2 = inlined_call_operand.vmem [shape: f32[1,128], index: 2, kind: input, shape index: {}]
  %s3 = inlined_call_operand.vmem [shape: f32[128,32], index: 3, kind: input, shape index: {}]
  %s4 = inlined_call_operand.vmem [shape: f32[1,32], index: 4, kind: input, shape index: {}]
  %s5 = inlined_call_operand.vmem [shape: f32[512,32], index: 5, kind: output, shape index: {}]
  %s6 = sld [smem:[#allocation0]]
  $region53: #{swin_encoder_block.8} parent=0
    _
  %s8 = ssub.s32 1, %s6
  %s9 = scalar_select 0, %s8, %s6
  loop: start=0, step=1, limit=4
  $region2: #{swin_encoder_block.8} parent=0 // loop_pre_header
    _
  $region3: #{swin_encoder_block.8} parent=0 // loop_header
    %s11 = sphi 0, %s15
    %p12 = scmp.ge.s32.totalorder %s11, 4
    %s21 = sphi 0, %s23
    %s24 = sphi 0, %s21
    %s25 = sphi 0, %s24
    %s41 = sphi 0, %s25
    %s45 = sphi 0, %s45
    %s47 = sphi 0, %s45
    %s48 = sphi 0, %s47
    %s62 = sphi 0, %s48
    %s66 = sphi 0, %s66
    %s68 = sphi 0, %s66
    %s69 = sphi 0, %s68
    %s83 = sphi 0, %s69
    %s87 = sphi 0, %s87
    %s89 = sphi 0, %s87
    %s90 = sphi 0, %s89
    %s104 = sphi 0, %s90
    %s108 = sphi 0, %s108
    %s110 = sphi 0, %s108
    %s111 = sphi 0, %s110
    %s125 = sphi 0, %s111
    %s131 = sphi 0, %s133
    %s134 = sphi 0, %s131
    %s135 = sphi 0, %s134
    %s151 = sphi 0, %s135
  $region4: #{swin_encoder_block.8} parent=0 // loop_header_branch
    %14 = sbr.rel (%p12) target = $region8
  $region5: #{swin_encoder_block.8} parent=0 // loop_body
    %s16 = ssub.s32 %s11, 1
    %s17 = ssub.s32 %s11, 2
    %s18 = sadd.s32 %s11, 1
    %s19 = ssub.s32 %s11, %s18
    %p20 = scmp.eq.s32.totalorder %s19, 0
    %s22 = sadd.s32 %s21, 1
    %s23 = scalar_select %p20, %s21, %s22
    %p26 = pneg %p20
    %p27 = scmp.eq.s32.totalorder %s11, 1
    %p28 = por %p26, %p27
    %p29 = scmp.ne.s32.totalorder %s21, %s24
    %p30 = scmp.eq.s32.totalorder %s11, 0
    %p31 = por %p29, %p30
    %p32 = scmp.ne.s32.totalorder %s21, %s24
    %p33 = scmp.eq.s32.totalorder %s16, 1
    %p34 = por %p32, %p33
    %p35 = scmp.ne.s32.totalorder %s24, %s25
    %p36 = scmp.eq.s32.totalorder %s16, 0
    %p37 = por %p35, %p36
    %p38 = scmp.ne.s32.totalorder %s24, %s25
    %p39 = scmp.eq.s32.totalorder %s17, 1
    %p40 = por %p38, %p39
    %p42 = scmp.ne.s32.totalorder %s25, %s41
    %p43 = scmp.eq.s32.totalorder %s17, 0
    %p44 = por %p42, %p43
    %s46 = sadd.s32 %s45, 1
    %p49 = scmp.eq.s32.totalorder %s11, 1
    %p50 = scmp.ne.s32.totalorder %s45, %s47
    %p51 = scmp.eq.s32.totalorder %s11, 0
    %p52 = por %p50, %p51
    %p53 = scmp.ne.s32.totalorder %s45, %s47
    %p54 = scmp.eq.s32.totalorder %s16, 1
    %p55 = por %p53, %p54
    %p56 = scmp.ne.s32.totalorder %s47, %s48
    %p57 = scmp.eq.s32.totalorder %s16, 0
    %p58 = por %p56, %p57
    %p59 = scmp.ne.s32.totalorder %s47, %s48
    %p60 = scmp.eq.s32.totalorder %s17, 1
    %p61 = por %p59, %p60
    %p63 = scmp.ne.s32.totalorder %s48, %s62
    %p64 = scmp.eq.s32.totalorder %s17, 0
    %p65 = por %p63, %p64
    %s67 = sadd.s32 %s66, 1
    %p70 = scmp.eq.s32.totalorder %s11, 1
    %p71 = scmp.ne.s32.totalorder %s66, %s68
    %p72 = scmp.eq.s32.totalorder %s11, 0
    %p73 = por %p71, %p72
    %p74 = scmp.ne.s32.totalorder %s66, %s68
    %p75 = scmp.eq.s32.totalorder %s16, 1
    %p76 = por %p74, %p75
    %p77 = scmp.ne.s32.totalorder %s68, %s69
    %p78 = scmp.eq.s32.totalorder %s16, 0
    %p79 = por %p77, %p78
    %p80 = scmp.ne.s32.totalorder %s68, %s69
    %p81 = scmp.eq.s32.totalorder %s17, 1
    %p82 = por %p80, %p81
    %p84 = scmp.ne.s32.totalorder %s69, %s83
    %p85 = scmp.eq.s32.totalorder %s17, 0
    %p86 = por %p84, %p85
    %s88 = sadd.s32 %s87, 1
    %p91 = scmp.eq.s32.totalorder %s11, 1
    %p92 = scmp.ne.s32.totalorder %s87, %s89
    %p93 = scmp.eq.s32.totalorder %s11, 0
    %p94 = por %p92, %p93
    %p95 = scmp.ne.s32.totalorder %s87, %s89
    %p96 = scmp.eq.s32.totalorder %s16, 1
    %p97 = por %p95, %p96
    %p98 = scmp.ne.s32.totalorder %s89, %s90
    %p99 = scmp.eq.s32.totalorder %s16, 0
    %p100 = por %p98, %p99
    %p101 = scmp.ne.s32.totalorder %s89, %s90
    %p102 = scmp.eq.s32.totalorder %s17, 1
    %p103 = por %p101, %p102
    %p105 = scmp.ne.s32.totalorder %s90, %s104
    %p106 = scmp.eq.s32.totalorder %s17, 0
    %p107 = por %p105, %p106
    %s109 = sadd.s32 %s108, 1
    %p112 = scmp.eq.s32.totalorder %s11, 1
    %p113 = scmp.ne.s32.totalorder %s108, %s110
    %p114 = scmp.eq.s32.totalorder %s11, 0
    %p115 = por %p113, %p114
    %p116 = scmp.ne.s32.totalorder %s108, %s110
    %p117 = scmp.eq.s32.totalorder %s16, 1
    %p118 = por %p116, %p117
    %p119 = scmp.ne.s32.totalorder %s110, %s111
    %p120 = scmp.eq.s32.totalorder %s16, 0
    %p121 = por %p119, %p120
    %p122 = scmp.ne.s32.totalorder %s110, %s111
    %p123 = scmp.eq.s32.totalorder %s17, 1
    %p124 = por %p122, %p123
    %p126 = scmp.ne.s32.totalorder %s111, %s125
    %p127 = scmp.eq.s32.totalorder %s17, 0
    %p128 = por %p126, %p127
    %s129 = ssub.s32 %s11, %s18
    %p130 = scmp.eq.s32.totalorder %s129, 0
    %s132 = sadd.s32 %s131, 1
    %s133 = scalar_select %p130, %s131, %s132
    %p136 = pneg %p130
    %p137 = scmp.eq.s32.totalorder %s11, 1
    %p138 = por %p136, %p137
    %p139 = scmp.ne.s32.totalorder %s131, %s134
    %p140 = scmp.eq.s32.totalorder %s11, 0
    %p141 = por %p139, %p140
    %p142 = scmp.ne.s32.totalorder %s131, %s134
    %p143 = scmp.eq.s32.totalorder %s16, 1
    %p144 = por %p142, %p143
    %p145 = scmp.ne.s32.totalorder %s134, %s135
    %p146 = scmp.eq.s32.totalorder %s16, 0
    %p147 = por %p145, %p146
    %p148 = scmp.ne.s32.totalorder %s134, %s135
    %p149 = scmp.eq.s32.totalorder %s17, 1
    %p150 = por %p148, %p149
    %p152 = scmp.ne.s32.totalorder %s135, %s151
    %p153 = scmp.eq.s32.totalorder %s17, 0
    %p154 = por %p152, %p153
    %p155 = scmp.le.s32.totalorder 1, %s11
    %p156 = scmp.lt.s32.totalorder %s11, 3
    %p157 = pnand %p155, %p156
    %p158 = pneg %p157
    // Predicated region
    $region9: #{swin_encoder_block.8} parent=5 // pred_check
      _
    $region10: #{swin_encoder_block.8} parent=5 // pred_check_branch
      %160 = sbr.rel (%p157) target = $region12
    $region11: #{swin_encoder_block.8} parent=5 // pred_region
      %s161 = ssub.s32 %s11, 1
      // Predicated region
      $region13: #{swin_encoder_block.8} parent=11 // pred_check
        %p162 = pneg %p58
      $region14: #{swin_encoder_block.8} parent=11 // pred_check_branch
        %164 = sbr.rel (%p162) target = $region16
      $region15: #{swin_encoder_block.8} parent=11 // pred_region
        _
      $region16: #{swin_encoder_block.8} parent=11 // pred_fallthru
        _
      // Predicated region
      $region17: #{swin_encoder_block.8} parent=11 // pred_check
        %p165 = pneg %p79
      $region18: #{swin_encoder_block.8} parent=11 // pred_check_branch
        %167 = sbr.rel (%p165) target = $region20
      $region19: #{swin_encoder_block.8} parent=11 // pred_region
        _
      $region20: #{swin_encoder_block.8} parent=11 // pred_fallthru
        _
      // Predicated region
      $region21: #{swin_encoder_block.8} parent=11 // pred_check
        %p168 = pneg %p100
      $region22: #{swin_encoder_block.8} parent=11 // pred_check_branch
        %170 = sbr.rel (%p168) target = $region24
      $region23: #{swin_encoder_block.8} parent=11 // pred_region
        _
      $region24: #{swin_encoder_block.8} parent=11 // pred_fallthru
        _
      // Predicated region
      $region25: #{swin_encoder_block.8} parent=11 // pred_check
        %p171 = pneg %p121
      $region26: #{swin_encoder_block.8} parent=11 // pred_check_branch
        %173 = sbr.rel (%p171) target = $region28
      $region27: #{swin_encoder_block.8} parent=11 // pred_region
        _
      $region28: #{swin_encoder_block.8} parent=11 // pred_fallthru
        _
    $region12: #{swin_encoder_block.8} parent=5 // pred_fallthru
      _
    %p174 = scmp.lt.s32.totalorder %s11, 2
    // Predicated region
    $region29: #{swin_encoder_block.8} parent=5 // pred_check
      %p175 = pneg %p174
    $region30: #{swin_encoder_block.8} parent=5 // pred_check_branch
      %177 = sbr.rel (%p175) target = $region32
    $region31: #{swin_encoder_block.8} parent=5 // pred_region
      // Predicated region
      $region33: #{swin_encoder_block.8} parent=31 // pred_check
        %p178 = pneg %p31
      $region34: #{swin_encoder_block.8} parent=31 // pred_check_branch
        %180 = sbr.rel (%p178) target = $region36
      $region35: #{swin_encoder_block.8} parent=31 // pred_region
        %s181 = smul.u32 32, %s11
        %p182 = scmp.lt.s32.totalorder %s181, 63
        %s183 = scalar_select %p182, %s181, 63
        %s184 = smul.addr %s183, 8
        %s185 = scalar_lea.vmem %s0, %s184
        %s186 = smul.u32 32, %s11
      $region36: #{swin_encoder_block.8} parent=31 // pred_fallthru
        _
    $region32: #{swin_encoder_block.8} parent=5 // pred_fallthru
      _
    %p187 = scmp.le.s32.totalorder 1, %s11
    %p188 = scmp.lt.s32.totalorder %s11, 3
    %p189 = pnand %p187, %p188
    %p190 = pneg %p189
    // Predicated region
    $region37: #{swin_encoder_block.8} parent=5 // pred_check
      _
    $region38: #{swin_encoder_block.8} parent=5 // pred_check_branch
      %192 = sbr.rel (%p189) target = $region40
    $region39: #{swin_encoder_block.8} parent=5 // pred_region
      %s193 = ssub.s32 %s11, 1
      %s194 = smul.u32 32, %s16
      %p195 = scmp.lt.s32.totalorder %s194, 63
      %s196 = scalar_select %p195, %s194, 63
      %s197 = smul.addr %s196, 8
      %s198 = scalar_lea.vmem %s0, %s197
      %p199 = pneg %p37
      %p200 = pneg %p34
      %p201 = pneg %p58
      %p202 = pneg %p55
      %p203 = pneg %p79
      %p204 = pneg %p76
      %p205 = pneg %p100
      %p206 = pneg %p97
      %p207 = pneg %p121
      %p208 = pneg %p118
      %p209 = pneg %p147
      %p210 = pneg %p144
      %s211 = smul.u32 32, %s16
      %p212 = scmp.lt.s32.totalorder %s211, 63
      %s213 = scalar_select %p212, %s211, 63
      %s214 = smul.addr %s213, 8
      %s215 = scalar_lea.vmem %s5, %s214
      %s216 = smul.u32 32, %s16
      %p217 = scmp.lt.s32.totalorder %s216, 63
      %s218 = scalar_select %p217, %s216, 63
      %s219 = smul.addr %s218, 8
      %s220 = scalar_lea.vmem %s0, %s219
      %s221 = smul.u32 32, %s16
      %s222 = smul.u32 32, %s16
      %p223 = scmp.lt.s32.totalorder %s222, 63
      %s224 = scalar_select %p223, %s222, 63
      %s225 = smul.addr %s224, 8
      %s226 = scalar_lea.vmem %s5, %s225
      %s227 = smul.u32 32, %s16
      %v228 = vld [vmem:[%s220] sm:$0xff]
      %v229 = vld [vmem:[%s220 + $0x8] sm:$0xff]
      %v230 = vld [vmem:[%s220 + $0x10] sm:$0xff]
      %v231 = vld [vmem:[%s220 + $0x18] sm:$0xff]
      %v232 = vld [vmem:[%s220 + $0x20] sm:$0xff]
      %v233 = vld [vmem:[%s220 + $0x28] sm:$0xff]
      %v234 = vld [vmem:[%s220 + $0x30] sm:$0xff]
      %v235 = vld [vmem:[%s220 + $0x38] sm:$0xff]
      %v236 = vld [vmem:[%s220 + $0x40] sm:$0xff]
      %v237 = vld [vmem:[%s220 + $0x48] sm:$0xff]
      %v238 = vld [vmem:[%s220 + $0x50] sm:$0xff]
      %v239 = vld [vmem:[%s220 + $0x58] sm:$0xff]
      %v240 = vld [vmem:[%s220 + $0x60] sm:$0xff]
      %v241 = vld [vmem:[%s220 + $0x68] sm:$0xff]
      %v242 = vld [vmem:[%s220 + $0x70] sm:$0xff]
      %v243 = vld [vmem:[%s220 + $0x78] sm:$0xff]
      %v244 = vld [vmem:[%s220 + $0x80] sm:$0xff]
      %v245 = vld [vmem:[%s220 + $0x88] sm:$0xff]
      %v246 = vld [vmem:[%s220 + $0x90] sm:$0xff]
      %v247 = vld [vmem:[%s220 + $0x98] sm:$0xff]
      %v248 = vld [vmem:[%s220 + $0xa0] sm:$0xff]
      %v249 = vld [vmem:[%s220 + $0xa8] sm:$0xff]
      %v250 = vld [vmem:[%s220 + $0xb0] sm:$0xff]
      %v251 = vld [vmem:[%s220 + $0xb8] sm:$0xff]
      %v252 = vld [vmem:[%s220 + $0xc0] sm:$0xff]
      %v253 = vld [vmem:[%s220 + $0xc8] sm:$0xff]
      %v254 = vld [vmem:[%s220 + $0xd0] sm:$0xff]
      %v255 = vld [vmem:[%s220 + $0xd8] sm:$0xff]
      %v256 = vld [vmem:[%s220 + $0xe0] sm:$0xff]
      %v257 = vld [vmem:[%s220 + $0xe8] sm:$0xff]
      %v258 = vld [vmem:[%s220 + $0xf0] sm:$0xff]
      %v259 = vld [vmem:[%s220 + $0xf8] sm:$0xff]
      %v260 = vld [vmem:[%s1] sm:$0xff]
      %v261 = vld [vmem:[%s1 + $0x8] sm:$0xff]
      %v262 = vld [vmem:[%s1 + $0x10] sm:$0xff]
      %v263 = vld [vmem:[%s1 + $0x18] sm:$0xff]
      %v264 = vld [vmem:[%s2] sm:$0x1]
      %v266 = vperm.slane %v264, 0
      %vm268 = vcmask 261120
      %v270 = vsel %vm268, %v228, 0
      %v273 = vsel %vm268, %v229, 0
      %v276 = vsel %vm268, %v230, 0
      %v279 = vsel %vm268, %v231, 0
      %v282 = vsel %vm268, %v232, 0
      %v285 = vsel %vm268, %v233, 0
      %v288 = vsel %vm268, %v234, 0
      %v291 = vsel %vm268, %v235, 0
      %v294 = vsel %vm268, %v236, 0
      %v297 = vsel %vm268, %v237, 0
      %v300 = vsel %vm268, %v238, 0
      %v303 = vsel %vm268, %v239, 0
      %v306 = vsel %vm268, %v240, 0
      %v309 = vsel %vm268, %v241, 0
      %v312 = vsel %vm268, %v242, 0
      %v315 = vsel %vm268, %v243, 0
      %v318 = vsel %vm268, %v244, 0
      %v321 = vsel %vm268, %v245, 0
      %v324 = vsel %vm268, %v246, 0
      %v327 = vsel %vm268, %v247, 0
      %v330 = vsel %vm268, %v248, 0
      %v333 = vsel %vm268, %v249, 0
      %v336 = vsel %vm268, %v250, 0
      %v339 = vsel %vm268, %v251, 0
      %v342 = vsel %vm268, %v252, 0
      %v345 = vsel %vm268, %v253, 0
      %v348 = vsel %vm268, %v254, 0
      %v351 = vsel %vm268, %v255, 0
      %v354 = vsel %vm268, %v256, 0
      %v357 = vsel %vm268, %v257, 0
      %v360 = vsel %vm268, %v258, 0
      %v363 = vsel %vm268, %v259, 0
      %365 = vmatpush.msra.mxu0 0.0
      %366 = vmatpush.msra.mxu0 0.0
      %367 = vmatpush.msra.mxu0 0.0
      %368 = vmatpush.msra.mxu0 0.0
      %369 = vmatpush.msra.mxu0 0.0
      %370 = vmatpush.msra.mxu0 0.0
      %371 = vmatpush.msra.mxu0 0.0
      %372 = vmatpush.msra.mxu0 0.0
      %373 = vmatpush.msra.mxu0 0.0
      %374 = vmatpush.msra.mxu0 0.0
      %375 = vmatpush.msra.mxu0 0.0
      %376 = vmatpush.msra.mxu0 0.0
      %377 = vmatpush.msra.mxu0 %v263
      %378 = vmatpush.msra.mxu0 %v262
      %379 = vmatpush.msra.mxu0 %v261
      %380 = vmatpush.msra.mxu0 %v260
      %381 = vmatmul.f32.gmra.mxu0 %v270
      %v382 = vpop.f32.mrf.mxu0
      %v383 = vadd.f32 %v266, %v382
      %384 = vmatmul.f32.gmra.mxu0 %v273
      %v385 = vpop.f32.mrf.mxu0
      %v386 = vadd.f32 %v266, %v385
      %387 = vmatmul.f32.gmra.mxu0 %v276
      %v388 = vpop.f32.mrf.mxu0
      %v389 = vadd.f32 %v266, %v388
      %390 = vmatmul.f32.gmra.mxu0 %v279
      %v391 = vpop.f32.mrf.mxu0
      %v392 = vadd.f32 %v266, %v391
      %393 = vmatmul.f32.gmra.mxu0 %v282
      %v394 = vpop.f32.mrf.mxu0
      %v395 = vadd.f32 %v266, %v394
      %396 = vmatmul.f32.gmra.mxu0 %v285
      %v397 = vpop.f32.mrf.mxu0
      %v398 = vadd.f32 %v266, %v397
      %399 = vmatmul.f32.gmra.mxu0 %v288
      %v400 = vpop.f32.mrf.mxu0
      %v401 = vadd.f32 %v266, %v400
      %402 = vmatmul.f32.gmra.mxu0 %v291
      %v403 = vpop.f32.mrf.mxu0
      %v404 = vadd.f32 %v266, %v403
      %405 = vmatmul.f32.gmra.mxu0 %v294
      %v406 = vpop.f32.mrf.mxu0
      %v407 = vadd.f32 %v266, %v406
      %408 = vmatmul.f32.gmra.mxu0 %v297
      %v409 = vpop.f32.mrf.mxu0
      %v410 = vadd.f32 %v266, %v409
      %411 = vmatmul.f32.gmra.mxu0 %v300
      %v412 = vpop.f32.mrf.mxu0
      %v413 = vadd.f32 %v266, %v412
      %414 = vmatmul.f32.gmra.mxu0 %v303
      %v415 = vpop.f32.mrf.mxu0
      %v416 = vadd.f32 %v266, %v415
      %417 = vmatmul.f32.gmra.mxu0 %v306
      %v418 = vpop.f32.mrf.mxu0
      %v419 = vadd.f32 %v266, %v418
      %420 = vmatmul.f32.gmra.mxu0 %v309
      %v421 = vpop.f32.mrf.mxu0
      %v422 = vadd.f32 %v266, %v421
      %423 = vmatmul.f32.gmra.mxu0 %v312
      %v424 = vpop.f32.mrf.mxu0
      %v425 = vadd.f32 %v266, %v424
      %426 = vmatmul.f32.gmra.mxu0 %v315
      %v427 = vpop.f32.mrf.mxu0
      %v428 = vadd.f32 %v266, %v427
      %429 = vmatmul.f32.gmra.mxu0 %v318
      %v430 = vpop.f32.mrf.mxu0
      %v431 = vadd.f32 %v266, %v430
      %432 = vmatmul.f32.gmra.mxu0 %v321
      %v433 = vpop.f32.mrf.mxu0
      %v434 = vadd.f32 %v266, %v433
      %435 = vmatmul.f32.gmra.mxu0 %v324
      %v436 = vpop.f32.mrf.mxu0
      %v437 = vadd.f32 %v266, %v436
      %438 = vmatmul.f32.gmra.mxu0 %v327
      %v439 = vpop.f32.mrf.mxu0
      %v440 = vadd.f32 %v266, %v439
      %441 = vmatmul.f32.gmra.mxu0 %v330
      %v442 = vpop.f32.mrf.mxu0
      %v443 = vadd.f32 %v266, %v442
      %444 = vmatmul.f32.gmra.mxu0 %v333
      %v445 = vpop.f32.mrf.mxu0
      %v446 = vadd.f32 %v266, %v445
      %447 = vmatmul.f32.gmra.mxu0 %v336
      %v448 = vpop.f32.mrf.mxu0
      %v449 = vadd.f32 %v266, %v448
      %450 = vmatmul.f32.gmra.mxu0 %v339
      %v451 = vpop.f32.mrf.mxu0
      %v452 = vadd.f32 %v266, %v451
      %453 = vmatmul.f32.gmra.mxu0 %v342
      %v454 = vpop.f32.mrf.mxu0
      %v455 = vadd.f32 %v266, %v454
      %456 = vmatmul.f32.gmra.mxu0 %v345
      %v457 = vpop.f32.mrf.mxu0
      %v458 = vadd.f32 %v266, %v457
      %459 = vmatmul.f32.gmra.mxu0 %v348
      %v460 = vpop.f32.mrf.mxu0
      %v461 = vadd.f32 %v266, %v460
      %462 = vmatmul.f32.gmra.mxu0 %v351
      %v463 = vpop.f32.mrf.mxu0
      %v464 = vadd.f32 %v266, %v463
      %465 = vmatmul.f32.gmra.mxu0 %v354
      %v466 = vpop.f32.mrf.mxu0
      %v467 = vadd.f32 %v266, %v466
      %468 = vmatmul.f32.gmra.mxu0 %v357
      %v469 = vpop.f32.mrf.mxu0
      %v470 = vadd.f32 %v266, %v469
      %471 = vmatmul.f32.gmra.mxu0 %v360
      %v472 = vpop.f32.mrf.mxu0
      %v473 = vadd.f32 %v266, %v472
      %474 = vmatmul.f32.gmra.mxu0 %v363
      %v475 = vpop.f32.mrf.mxu0
      %v476 = vadd.f32 %v266, %v475
      %477 = vdwg.mxu0
      %v478 = vmul.f32 %v383, 0.5
      %v479 = vmul.f32 %v386, 0.5
      %v480 = vmul.f32 %v389, 0.5
      %v481 = vmul.f32 %v392, 0.5
      %v482 = vmul.f32 %v395, 0.5
      %v483 = vmul.f32 %v398, 0.5
      %v484 = vmul.f32 %v401, 0.5
      %v485 = vmul.f32 %v404, 0.5
      %v486 = vmul.f32 %v407, 0.5
      %v487 = vmul.f32 %v410, 0.5
      %v488 = vmul.f32 %v413, 0.5
      %v489 = vmul.f32 %v416, 0.5
      %v490 = vmul.f32 %v419, 0.5
      %v491 = vmul.f32 %v422, 0.5
      %v492 = vmul.f32 %v425, 0.5
      %v493 = vmul.f32 %v428, 0.5
      %v494 = vmul.f32 %v431, 0.5
      %v495 = vmul.f32 %v434, 0.5
      %v496 = vmul.f32 %v437, 0.5
      %v497 = vmul.f32 %v440, 0.5
      %v498 = vmul.f32 %v443, 0.5
      %v499 = vmul.f32 %v446, 0.5
      %v500 = vmul.f32 %v449, 0.5
      %v501 = vmul.f32 %v452, 0.5
      %v502 = vmul.f32 %v455, 0.5
      %v503 = vmul.f32 %v458, 0.5
      %v504 = vmul.f32 %v461, 0.5
      %v505 = vmul.f32 %v464, 0.5
      %v506 = vmul.f32 %v467, 0.5
      %v507 = vmul.f32 %v470, 0.5
      %v508 = vmul.f32 %v473, 0.5
      %v509 = vmul.f32 %v476, 0.5
      %v510 = vmul.f32 %v383, 0.70710677
      %v511 = vmul.f32 %v386, 0.70710677
      %v512 = vmul.f32 %v389, 0.70710677
      %v513 = vmul.f32 %v392, 0.70710677
      %v514 = vmul.f32 %v395, 0.70710677
      %v515 = vmul.f32 %v398, 0.70710677
      %v516 = vmul.f32 %v401, 0.70710677
      %v517 = vmul.f32 %v404, 0.70710677
      %v518 = vmul.f32 %v407, 0.70710677
      %v519 = vmul.f32 %v410, 0.70710677
      %v520 = vmul.f32 %v413, 0.70710677
      %v521 = vmul.f32 %v416, 0.70710677
      %v522 = vmul.f32 %v419, 0.70710677
      %v523 = vmul.f32 %v422, 0.70710677
      %v524 = vmul.f32 %v425, 0.70710677
      %v525 = vmul.f32 %v428, 0.70710677
      %v526 = vmul.f32 %v431, 0.70710677
      %v527 = vmul.f32 %v434, 0.70710677
      %v528 = vmul.f32 %v437, 0.70710677
      %v529 = vmul.f32 %v440, 0.70710677
      %v530 = vmul.f32 %v443, 0.70710677
      %v531 = vmul.f32 %v446, 0.70710677
      %v532 = vmul.f32 %v449, 0.70710677
      %v533 = vmul.f32 %v452, 0.70710677
      %v534 = vmul.f32 %v455, 0.70710677
      %v535 = vmul.f32 %v458, 0.70710677
      %v536 = vmul.f32 %v461, 0.70710677
      %v537 = vmul.f32 %v464, 0.70710677
      %v538 = vmul.f32 %v467, 0.70710677
      %v539 = vmul.f32 %v470, 0.70710677
      %v540 = vmul.f32 %v473, 0.70710677
      %v541 = vmul.f32 %v476, 0.70710677
      %v542 = vmul.f32 %v510, %v510
      %v543 = vmin.f32 16.0, %v542
      %v544 = vmul.f32 %v543, 2.1237322e-06
      %v545 = vadd.f32 %v544, 0.00028619796
      %v546 = vmul.f32 %v543, %v545
      %v547 = vadd.f32 %v546, 0.0036580483
      %v548 = vmul.f32 %v543, %v547
      %v549 = vadd.f32 %v548, 0.05243302
      %v550 = vmul.f32 %v543, %v549
      %v551 = vadd.f32 %v550, 0.18741608
      %v552 = vmul.f32 %v543, %v551
      %v553 = vadd.f32 %v552, 1.1283791
      %v554 = vmul.f32 %v510, %v553
      %v555 = vmul.f32 %v543, 3.8918573e-05
      %v556 = vadd.f32 %v555, 0.001143296
      %v557 = vmul.f32 %v543, %v556
      %v558 = vadd.f32 %v557, 0.014752088
      %v559 = vmul.f32 %v543, %v558
      %v560 = vadd.f32 %v559, 0.112945676
      %v561 = vmul.f32 %v543, %v560
      %v562 = vadd.f32 %v561, 0.4994258
      %v563 = vmul.f32 %v543, %v562
      %v564 = vadd.f32 %v563, 1.0
      %v565 = vrcp.pop %v564
      %v566 = vmul.f32 %v564, %v565
      %v567 = vsub.f32 1.0, %v566
      %v568 = vmul.f32 %v565, %v567
      %v569 = vadd.f32 %v565, %v568
      %vm570 = vweird.f32 %v564
      %vm571 = vweird.f32 %v565
      %vm572 = vmor %vm570, %vm571
      %v573 = vsel %vm572, %v565, %v569
      %v574 = vand.u32 2147483647, %v564
      %vm575 = vcmp.eq.f32.partialorder %v574, 8.507059e+37
      %v576 = vand.u32 %v564, 2147483648
      %v577 = vor.u32 1.1754944e-38, %v576
      %v578 = vsel %vm575, %v577, %v573
      %v579 = vmul.f32 %v554, %v578
      %v580 = vmin.f32 %v579, 1.0
      %v581 = vmax.f32 %v580, -1.0
      %v582 = vmul.f32 %v511, %v511
      %v583 = vmin.f32 16.0, %v582
      %v584 = vmul.f32 %v583, 2.1237322e-06
      %v585 = vadd.f32 %v584, 0.00028619796
      %v586 = vmul.f32 %v583, %v585
      %v587 = vadd.f32 %v586, 0.0036580483
      %v588 = vmul.f32 %v583, %v587
      %v589 = vadd.f32 %v588, 0.05243302
      %v590 = vmul.f32 %v583, %v589
      %v591 = vadd.f32 %v590, 0.18741608
      %v592 = vmul.f32 %v583, %v591
      %v593 = vadd.f32 %v592, 1.1283791
      %v594 = vmul.f32 %v511, %v593
      %v595 = vmul.f32 %v583, 3.8918573e-05
      %v596 = vadd.f32 %v595, 0.001143296
      %v597 = vmul.f32 %v583, %v596
      %v598 = vadd.f32 %v597, 0.014752088
      %v599 = vmul.f32 %v583, %v598
      %v600 = vadd.f32 %v599, 0.112945676
      %v601 = vmul.f32 %v583, %v600
      %v602 = vadd.f32 %v601, 0.4994258
      %v603 = vmul.f32 %v583, %v602
      %v604 = vadd.f32 %v603, 1.0
      %v605 = vrcp.pop %v604
      %v606 = vmul.f32 %v604, %v605
      %v607 = vsub.f32 1.0, %v606
      %v608 = vmul.f32 %v605, %v607
      %v609 = vadd.f32 %v605, %v608
      %vm610 = vweird.f32 %v604
      %vm611 = vweird.f32 %v605
      %vm612 = vmor %vm610, %vm611
      %v613 = vsel %vm612, %v605, %v609
      %v614 = vand.u32 2147483647, %v604
      %vm615 = vcmp.eq.f32.partialorder %v614, 8.507059e+37
      %v616 = vand.u32 %v604, 2147483648
      %v617 = vor.u32 1.1754944e-38, %v616
      %v618 = vsel %vm615, %v617, %v613
      %v619 = vmul.f32 %v594, %v618
      %v620 = vmin.f32 %v619, 1.0
      %v621 = vmax.f32 %v620, -1.0
      %v622 = vmul.f32 %v512, %v512
      %v623 = vmin.f32 16.0, %v622
      %v624 = vmul.f32 %v623, 2.1237322e-06
      %v625 = vadd.f32 %v624, 0.00028619796
      %v626 = vmul.f32 %v623, %v625
      %v627 = vadd.f32 %v626, 0.0036580483
      %v628 = vmul.f32 %v623, %v627
      %v629 = vadd.f32 %v628, 0.05243302
      %v630 = vmul.f32 %v623, %v629
      %v631 = vadd.f32 %v630, 0.18741608
      %v632 = vmul.f32 %v623, %v631
      %v633 = vadd.f32 %v632, 1.1283791
      %v634 = vmul.f32 %v512, %v633
      %v635 = vmul.f32 %v623, 3.8918573e-05
      %v636 = vadd.f32 %v635, 0.001143296
      %v637 = vmul.f32 %v623, %v636
      %v638 = vadd.f32 %v637, 0.014752088
      %v639 = vmul.f32 %v623, %v638
      %v640 = vadd.f32 %v639, 0.112945676
      %v641 = vmul.f32 %v623, %v640
      %v642 = vadd.f32 %v641, 0.4994258
      %v643 = vmul.f32 %v623, %v642
      %v644 = vadd.f32 %v643, 1.0
      %v645 = vrcp.pop %v644
      %v646 = vmul.f32 %v644, %v645
      %v647 = vsub.f32 1.0, %v646
      %v648 = vmul.f32 %v645, %v647
      %v649 = vadd.f32 %v645, %v648
      %vm650 = vweird.f32 %v644
      %vm651 = vweird.f32 %v645
      %vm652 = vmor %vm650, %vm651
      %v653 = vsel %vm652, %v645, %v649
      %v654 = vand.u32 2147483647, %v644
      %vm655 = vcmp.eq.f32.partialorder %v654, 8.507059e+37
      %v656 = vand.u32 %v644, 2147483648
      %v657 = vor.u32 1.1754944e-38, %v656
      %v658 = vsel %vm655, %v657, %v653
      %v659 = vmul.f32 %v634, %v658
      %v660 = vmin.f32 %v659, 1.0
      %v661 = vmax.f32 %v660, -1.0
      %v662 = vmul.f32 %v513, %v513
      %v663 = vmin.f32 16.0, %v662
      %v664 = vmul.f32 %v663, 2.1237322e-06
      %v665 = vadd.f32 %v664, 0.00028619796
      %v666 = vmul.f32 %v663, %v665
      %v667 = vadd.f32 %v666, 0.0036580483
      %v668 = vmul.f32 %v663, %v667
      %v669 = vadd.f32 %v668, 0.05243302
      %v670 = vmul.f32 %v663, %v669
      %v671 = vadd.f32 %v670, 0.18741608
      %v672 = vmul.f32 %v663, %v671
      %v673 = vadd.f32 %v672, 1.1283791
      %v674 = vmul.f32 %v513, %v673
      %v675 = vmul.f32 %v663, 3.8918573e-05
      %v676 = vadd.f32 %v675, 0.001143296
      %v677 = vmul.f32 %v663, %v676
      %v678 = vadd.f32 %v677, 0.014752088
      %v679 = vmul.f32 %v663, %v678
      %v680 = vadd.f32 %v679, 0.112945676
      %v681 = vmul.f32 %v663, %v680
      %v682 = vadd.f32 %v681, 0.4994258
      %v683 = vmul.f32 %v663, %v682
      %v684 = vadd.f32 %v683, 1.0
      %v685 = vrcp.pop %v684
      %v686 = vmul.f32 %v684, %v685
      %v687 = vsub.f32 1.0, %v686
      %v688 = vmul.f32 %v685, %v687
      %v689 = vadd.f32 %v685, %v688
      %vm690 = vweird.f32 %v684
      %vm691 = vweird.f32 %v685
      %vm692 = vmor %vm690, %vm691
      %v693 = vsel %vm692, %v685, %v689
      %v694 = vand.u32 2147483647, %v684
      %vm695 = vcmp.eq.f32.partialorder %v694, 8.507059e+37
      %v696 = vand.u32 %v684, 2147483648
      %v697 = vor.u32 1.1754944e-38, %v696
      %v698 = vsel %vm695, %v697, %v693
      %v699 = vmul.f32 %v674, %v698
      %v700 = vmin.f32 %v699, 1.0
      %v701 = vmax.f32 %v700, -1.0
      %v702 = vmul.f32 %v514, %v514
      %v703 = vmin.f32 16.0, %v702
      %v704 = vmul.f32 %v703, 2.1237322e-06
      %v705 = vadd.f32 %v704, 0.00028619796
      %v706 = vmul.f32 %v703, %v705
      %v707 = vadd.f32 %v706, 0.0036580483
      %v708 = vmul.f32 %v703, %v707
      %v709 = vadd.f32 %v708, 0.05243302
      %v710 = vmul.f32 %v703, %v709
      %v711 = vadd.f32 %v710, 0.18741608
      %v712 = vmul.f32 %v703, %v711
      %v713 = vadd.f32 %v712, 1.1283791
      %v714 = vmul.f32 %v514, %v713
      %v715 = vmul.f32 %v703, 3.8918573e-05
      %v716 = vadd.f32 %v715, 0.001143296
      %v717 = vmul.f32 %v703, %v716
      %v718 = vadd.f32 %v717, 0.014752088
      %v719 = vmul.f32 %v703, %v718
      %v720 = vadd.f32 %v719, 0.112945676
      %v721 = vmul.f32 %v703, %v720
      %v722 = vadd.f32 %v721, 0.4994258
      %v723 = vmul.f32 %v703, %v722
      %v724 = vadd.f32 %v723, 1.0
      %v725 = vrcp.pop %v724
      %v726 = vmul.f32 %v724, %v725
      %v727 = vsub.f32 1.0, %v726
      %v728 = vmul.f32 %v725, %v727
      %v729 = vadd.f32 %v725, %v728
      %vm730 = vweird.f32 %v724
      %vm731 = vweird.f32 %v725
      %vm732 = vmor %vm730, %vm731
      %v733 = vsel %vm732, %v725, %v729
      %v734 = vand.u32 2147483647, %v724
      %vm735 = vcmp.eq.f32.partialorder %v734, 8.507059e+37
      %v736 = vand.u32 %v724, 2147483648
      %v737 = vor.u32 1.1754944e-38, %v736
      %v738 = vsel %vm735, %v737, %v733
      %v739 = vmul.f32 %v714, %v738
      %v740 = vmin.f32 %v739, 1.0
      %v741 = vmax.f32 %v740, -1.0
      %v742 = vmul.f32 %v515, %v515
      %v743 = vmin.f32 16.0, %v742
      %v744 = vmul.f32 %v743, 2.1237322e-06
      %v745 = vadd.f32 %v744, 0.00028619796
      %v746 = vmul.f32 %v743, %v745
      %v747 = vadd.f32 %v746, 0.0036580483
      %v748 = vmul.f32 %v743, %v747
      %v749 = vadd.f32 %v748, 0.05243302
      %v750 = vmul.f32 %v743, %v749
      %v751 = vadd.f32 %v750, 0.18741608
      %v752 = vmul.f32 %v743, %v751
      %v753 = vadd.f32 %v752, 1.1283791
      %v754 = vmul.f32 %v515, %v753
      %v755 = vmul.f32 %v743, 3.8918573e-05
      %v756 = vadd.f32 %v755, 0.001143296
      %v757 = vmul.f32 %v743, %v756
      %v758 = vadd.f32 %v757, 0.014752088
      %v759 = vmul.f32 %v743, %v758
      %v760 = vadd.f32 %v759, 0.112945676
      %v761 = vmul.f32 %v743, %v760
      %v762 = vadd.f32 %v761, 0.4994258
      %v763 = vmul.f32 %v743, %v762
      %v764 = vadd.f32 %v763, 1.0
      %v765 = vrcp.pop %v764
      %v766 = vmul.f32 %v764, %v765
      %v767 = vsub.f32 1.0, %v766
      %v768 = vmul.f32 %v765, %v767
      %v769 = vadd.f32 %v765, %v768
      %vm770 = vweird.f32 %v764
      %vm771 = vweird.f32 %v765
      %vm772 = vmor %vm770, %vm771
      %v773 = vsel %vm772, %v765, %v769
      %v774 = vand.u32 2147483647, %v764
      %vm775 = vcmp.eq.f32.partialorder %v774, 8.507059e+37
      %v776 = vand.u32 %v764, 2147483648
      %v777 = vor.u32 1.1754944e-38, %v776
      %v778 = vsel %vm775, %v777, %v773
      %v779 = vmul.f32 %v754, %v778
      %v780 = vmin.f32 %v779, 1.0
      %v781 = vmax.f32 %v780, -1.0
      %v782 = vmul.f32 %v516, %v516
      %v783 = vmin.f32 16.0, %v782
      %v784 = vmul.f32 %v783, 2.1237322e-06
      %v785 = vadd.f32 %v784, 0.00028619796
      %v786 = vmul.f32 %v783, %v785
      %v787 = vadd.f32 %v786, 0.0036580483
      %v788 = vmul.f32 %v783, %v787
      %v789 = vadd.f32 %v788, 0.05243302
      %v790 = vmul.f32 %v783, %v789
      %v791 = vadd.f32 %v790, 0.18741608
      %v792 = vmul.f32 %v783, %v791
      %v793 = vadd.f32 %v792, 1.1283791
      %v794 = vmul.f32 %v516, %v793
      %v795 = vmul.f32 %v783, 3.8918573e-05
      %v796 = vadd.f32 %v795, 0.001143296
      %v797 = vmul.f32 %v783, %v796
      %v798 = vadd.f32 %v797, 0.014752088
      %v799 = vmul.f32 %v783, %v798
      %v800 = vadd.f32 %v799, 0.112945676
      %v801 = vmul.f32 %v783, %v800
      %v802 = vadd.f32 %v801, 0.4994258
      %v803 = vmul.f32 %v783, %v802
      %v804 = vadd.f32 %v803, 1.0
      %v805 = vrcp.pop %v804
      %v806 = vmul.f32 %v804, %v805
      %v807 = vsub.f32 1.0, %v806
      %v808 = vmul.f32 %v805, %v807
      %v809 = vadd.f32 %v805, %v808
      %vm810 = vweird.f32 %v804
      %vm811 = vweird.f32 %v805
      %vm812 = vmor %vm810, %vm811
      %v813 = vsel %vm812, %v805, %v809
      %v814 = vand.u32 2147483647, %v804
      %vm815 = vcmp.eq.f32.partialorder %v814, 8.507059e+37
      %v816 = vand.u32 %v804, 2147483648
      %v817 = vor.u32 1.1754944e-38, %v816
      %v818 = vsel %vm815, %v817, %v813
      %v819 = vmul.f32 %v794, %v818
      %v820 = vmin.f32 %v819, 1.0
      %v821 = vmax.f32 %v820, -1.0
      %v822 = vmul.f32 %v517, %v517
      %v823 = vmin.f32 16.0, %v822
      %v824 = vmul.f32 %v823, 2.1237322e-06
      %v825 = vadd.f32 %v824, 0.00028619796
      %v826 = vmul.f32 %v823, %v825
      %v827 = vadd.f32 %v826, 0.0036580483
      %v828 = vmul.f32 %v823, %v827
      %v829 = vadd.f32 %v828, 0.05243302
      %v830 = vmul.f32 %v823, %v829
      %v831 = vadd.f32 %v830, 0.18741608
      %v832 = vmul.f32 %v823, %v831
      %v833 = vadd.f32 %v832, 1.1283791
      %v834 = vmul.f32 %v517, %v833
      %v835 = vmul.f32 %v823, 3.8918573e-05
      %v836 = vadd.f32 %v835, 0.001143296
      %v837 = vmul.f32 %v823, %v836
      %v838 = vadd.f32 %v837, 0.014752088
      %v839 = vmul.f32 %v823, %v838
      %v840 = vadd.f32 %v839, 0.112945676
      %v841 = vmul.f32 %v823, %v840
      %v842 = vadd.f32 %v841, 0.4994258
      %v843 = vmul.f32 %v823, %v842
      %v844 = vadd.f32 %v843, 1.0
      %v845 = vrcp.pop %v844
      %v846 = vmul.f32 %v844, %v845
      %v847 = vsub.f32 1.0, %v846
      %v848 = vmul.f32 %v845, %v847
      %v849 = vadd.f32 %v845, %v848
      %vm850 = vweird.f32 %v844
      %vm851 = vweird.f32 %v845
      %vm852 = vmor %vm850, %vm851
      %v853 = vsel %vm852, %v845, %v849
      %v854 = vand.u32 2147483647, %v844
      %vm855 = vcmp.eq.f32.partialorder %v854, 8.507059e+37
      %v856 = vand.u32 %v844, 2147483648
      %v857 = vor.u32 1.1754944e-38, %v856
      %v858 = vsel %vm855, %v857, %v853
      %v859 = vmul.f32 %v834, %v858
      %v860 = vmin.f32 %v859, 1.0
      %v861 = vmax.f32 %v860, -1.0
      %v862 = vmul.f32 %v518, %v518
      %v863 = vmin.f32 16.0, %v862
      %v864 = vmul.f32 %v863, 2.1237322e-06
      %v865 = vadd.f32 %v864, 0.00028619796
      %v866 = vmul.f32 %v863, %v865
      %v867 = vadd.f32 %v866, 0.0036580483
      %v868 = vmul.f32 %v863, %v867
      %v869 = vadd.f32 %v868, 0.05243302
      %v870 = vmul.f32 %v863, %v869
      %v871 = vadd.f32 %v870, 0.18741608
      %v872 = vmul.f32 %v863, %v871
      %v873 = vadd.f32 %v872, 1.1283791
      %v874 = vmul.f32 %v518, %v873
      %v875 = vmul.f32 %v863, 3.8918573e-05
      %v876 = vadd.f32 %v875, 0.001143296
      %v877 = vmul.f32 %v863, %v876
      %v878 = vadd.f32 %v877, 0.014752088
      %v879 = vmul.f32 %v863, %v878
      %v880 = vadd.f32 %v879, 0.112945676
      %v881 = vmul.f32 %v863, %v880
      %v882 = vadd.f32 %v881, 0.4994258
      %v883 = vmul.f32 %v863, %v882
      %v884 = vadd.f32 %v883, 1.0
      %v885 = vrcp.pop %v884
      %v886 = vmul.f32 %v884, %v885
      %v887 = vsub.f32 1.0, %v886
      %v888 = vmul.f32 %v885, %v887
      %v889 = vadd.f32 %v885, %v888
      %vm890 = vweird.f32 %v884
      %vm891 = vweird.f32 %v885
      %vm892 = vmor %vm890, %vm891
      %v893 = vsel %vm892, %v885, %v889
      %v894 = vand.u32 2147483647, %v884
      %vm895 = vcmp.eq.f32.partialorder %v894, 8.507059e+37
      %v896 = vand.u32 %v884, 2147483648
      %v897 = vor.u32 1.1754944e-38, %v896
      %v898 = vsel %vm895, %v897, %v893
      %v899 = vmul.f32 %v874, %v898
      %v900 = vmin.f32 %v899, 1.0
      %v901 = vmax.f32 %v900, -1.0
      %v902 = vmul.f32 %v519, %v519
      %v903 = vmin.f32 16.0, %v902
      %v904 = vmul.f32 %v903, 2.1237322e-06
      %v905 = vadd.f32 %v904, 0.00028619796
      %v906 = vmul.f32 %v903, %v905
      %v907 = vadd.f32 %v906, 0.0036580483
      %v908 = vmul.f32 %v903, %v907
      %v909 = vadd.f32 %v908, 0.05243302
      %v910 = vmul.f32 %v903, %v909
      %v911 = vadd.f32 %v910, 0.18741608
      %v912 = vmul.f32 %v903, %v911
      %v913 = vadd.f32 %v912, 1.1283791
      %v914 = vmul.f32 %v519, %v913
      %v915 = vmul.f32 %v903, 3.8918573e-05
      %v916 = vadd.f32 %v915, 0.001143296
      %v917 = vmul.f32 %v903, %v916
      %v918 = vadd.f32 %v917, 0.014752088
      %v919 = vmul.f32 %v903, %v918
      %v920 = vadd.f32 %v919, 0.112945676
      %v921 = vmul.f32 %v903, %v920
      %v922 = vadd.f32 %v921, 0.4994258
      %v923 = vmul.f32 %v903, %v922
      %v924 = vadd.f32 %v923, 1.0
      %v925 = vrcp.pop %v924
      %v926 = vmul.f32 %v924, %v925
      %v927 = vsub.f32 1.0, %v926
      %v928 = vmul.f32 %v925, %v927
      %v929 = vadd.f32 %v925, %v928
      %vm930 = vweird.f32 %v924
      %vm931 = vweird.f32 %v925
      %vm932 = vmor %vm930, %vm931
      %v933 = vsel %vm932, %v925, %v929
      %v934 = vand.u32 2147483647, %v924
      %vm935 = vcmp.eq.f32.partialorder %v934, 8.507059e+37
      %v936 = vand.u32 %v924, 2147483648
      %v937 = vor.u32 1.1754944e-38, %v936
      %v938 = vsel %vm935, %v937, %v933
      %v939 = vmul.f32 %v914, %v938
      %v940 = vmin.f32 %v939, 1.0
      %v941 = vmax.f32 %v940, -1.0
      %v942 = vmul.f32 %v520, %v520
      %v943 = vmin.f32 16.0, %v942
      %v944 = vmul.f32 %v943, 2.1237322e-06
      %v945 = vadd.f32 %v944, 0.00028619796
      %v946 = vmul.f32 %v943, %v945
      %v947 = vadd.f32 %v946, 0.0036580483
      %v948 = vmul.f32 %v943, %v947
      %v949 = vadd.f32 %v948, 0.05243302
      %v950 = vmul.f32 %v943, %v949
      %v951 = vadd.f32 %v950, 0.18741608
      %v952 = vmul.f32 %v943, %v951
      %v953 = vadd.f32 %v952, 1.1283791
      %v954 = vmul.f32 %v520, %v953
      %v955 = vmul.f32 %v943, 3.8918573e-05
      %v956 = vadd.f32 %v955, 0.001143296
      %v957 = vmul.f32 %v943, %v956
      %v958 = vadd.f32 %v957, 0.014752088
      %v959 = vmul.f32 %v943, %v958
      %v960 = vadd.f32 %v959, 0.112945676
      %v961 = vmul.f32 %v943, %v960
      %v962 = vadd.f32 %v961, 0.4994258
      %v963 = vmul.f32 %v943, %v962
      %v964 = vadd.f32 %v963, 1.0
      %v965 = vrcp.pop %v964
      %v966 = vmul.f32 %v964, %v965
      %v967 = vsub.f32 1.0, %v966
      %v968 = vmul.f32 %v965, %v967
      %v969 = vadd.f32 %v965, %v968
      %vm970 = vweird.f32 %v964
      %vm971 = vweird.f32 %v965
      %vm972 = vmor %vm970, %vm971
      %v973 = vsel %vm972, %v965, %v969
      %v974 = vand.u32 2147483647, %v964
      %vm975 = vcmp.eq.f32.partialorder %v974, 8.507059e+37
      %v976 = vand.u32 %v964, 2147483648
      %v977 = vor.u32 1.1754944e-38, %v976
      %v978 = vsel %vm975, %v977, %v973
      %v979 = vmul.f32 %v954, %v978
      %v980 = vmin.f32 %v979, 1.0
      %v981 = vmax.f32 %v980, -1.0
      %v982 = vmul.f32 %v521, %v521
      %v983 = vmin.f32 16.0, %v982
      %v984 = vmul.f32 %v983, 2.1237322e-06
      %v985 = vadd.f32 %v984, 0.00028619796
      %v986 = vmul.f32 %v983, %v985
      %v987 = vadd.f32 %v986, 0.0036580483
      %v988 = vmul.f32 %v983, %v987
      %v989 = vadd.f32 %v988, 0.05243302
      %v990 = vmul.f32 %v983, %v989
      %v991 = vadd.f32 %v990, 0.18741608
      %v992 = vmul.f32 %v983, %v991
      %v993 = vadd.f32 %v992, 1.1283791
      %v994 = vmul.f32 %v521, %v993
      %v995 = vmul.f32 %v983, 3.8918573e-05
      %v996 = vadd.f32 %v995, 0.001143296
      %v997 = vmul.f32 %v983, %v996
      %v998 = vadd.f32 %v997, 0.014752088
      %v999 = vmul.f32 %v983, %v998
      %v1000 = vadd.f32 %v999, 0.112945676
      %v1001 = vmul.f32 %v983, %v1000
      %v1002 = vadd.f32 %v1001, 0.4994258
      %v1003 = vmul.f32 %v983, %v1002
      %v1004 = vadd.f32 %v1003, 1.0
      %v1005 = vrcp.pop %v1004
      %v1006 = vmul.f32 %v1004, %v1005
      %v1007 = vsub.f32 1.0, %v1006
      %v1008 = vmul.f32 %v1005, %v1007
      %v1009 = vadd.f32 %v1005, %v1008
      %vm1010 = vweird.f32 %v1004
      %vm1011 = vweird.f32 %v1005
      %vm1012 = vmor %vm1010, %vm1011
      %v1013 = vsel %vm1012, %v1005, %v1009
      %v1014 = vand.u32 2147483647, %v1004
      %vm1015 = vcmp.eq.f32.partialorder %v1014, 8.507059e+37
      %v1016 = vand.u32 %v1004, 2147483648
      %v1017 = vor.u32 1.1754944e-38, %v1016
      %v1018 = vsel %vm1015, %v1017, %v1013
      %v1019 = vmul.f32 %v994, %v1018
      %v1020 = vmin.f32 %v1019, 1.0
      %v1021 = vmax.f32 %v1020, -1.0
      %v1022 = vmul.f32 %v522, %v522
      %v1023 = vmin.f32 16.0, %v1022
      %v1024 = vmul.f32 %v1023, 2.1237322e-06
      %v1025 = vadd.f32 %v1024, 0.00028619796
      %v1026 = vmul.f32 %v1023, %v1025
      %v1027 = vadd.f32 %v1026, 0.0036580483
      %v1028 = vmul.f32 %v1023, %v1027
      %v1029 = vadd.f32 %v1028, 0.05243302
      %v1030 = vmul.f32 %v1023, %v1029
      %v1031 = vadd.f32 %v1030, 0.18741608
      %v1032 = vmul.f32 %v1023, %v1031
      %v1033 = vadd.f32 %v1032, 1.1283791
      %v1034 = vmul.f32 %v522, %v1033
      %v1035 = vmul.f32 %v1023, 3.8918573e-05
      %v1036 = vadd.f32 %v1035, 0.001143296
      %v1037 = vmul.f32 %v1023, %v1036
      %v1038 = vadd.f32 %v1037, 0.014752088
      %v1039 = vmul.f32 %v1023, %v1038
      %v1040 = vadd.f32 %v1039, 0.112945676
      %v1041 = vmul.f32 %v1023, %v1040
      %v1042 = vadd.f32 %v1041, 0.4994258
      %v1043 = vmul.f32 %v1023, %v1042
      %v1044 = vadd.f32 %v1043, 1.0
      %v1045 = vrcp.pop %v1044
      %v1046 = vmul.f32 %v1044, %v1045
      %v1047 = vsub.f32 1.0, %v1046
      %v1048 = vmul.f32 %v1045, %v1047
      %v1049 = vadd.f32 %v1045, %v1048
      %vm1050 = vweird.f32 %v1044
      %vm1051 = vweird.f32 %v1045
      %vm1052 = vmor %vm1050, %vm1051
      %v1053 = vsel %vm1052, %v1045, %v1049
      %v1054 = vand.u32 2147483647, %v1044
      %vm1055 = vcmp.eq.f32.partialorder %v1054, 8.507059e+37
      %v1056 = vand.u32 %v1044, 2147483648
      %v1057 = vor.u32 1.1754944e-38, %v1056
      %v1058 = vsel %vm1055, %v1057, %v1053
      %v1059 = vmul.f32 %v1034, %v1058
      %v1060 = vmin.f32 %v1059, 1.0
      %v1061 = vmax.f32 %v1060, -1.0
      %v1062 = vmul.f32 %v523, %v523
      %v1063 = vmin.f32 16.0, %v1062
      %v1064 = vmul.f32 %v1063, 2.1237322e-06
      %v1065 = vadd.f32 %v1064, 0.00028619796
      %v1066 = vmul.f32 %v1063, %v1065
      %v1067 = vadd.f32 %v1066, 0.0036580483
      %v1068 = vmul.f32 %v1063, %v1067
      %v1069 = vadd.f32 %v1068, 0.05243302
      %v1070 = vmul.f32 %v1063, %v1069
      %v1071 = vadd.f32 %v1070, 0.18741608
      %v1072 = vmul.f32 %v1063, %v1071
      %v1073 = vadd.f32 %v1072, 1.1283791
      %v1074 = vmul.f32 %v523, %v1073
      %v1075 = vmul.f32 %v1063, 3.8918573e-05
      %v1076 = vadd.f32 %v1075, 0.001143296
      %v1077 = vmul.f32 %v1063, %v1076
      %v1078 = vadd.f32 %v1077, 0.014752088
      %v1079 = vmul.f32 %v1063, %v1078
      %v1080 = vadd.f32 %v1079, 0.112945676
      %v1081 = vmul.f32 %v1063, %v1080
      %v1082 = vadd.f32 %v1081, 0.4994258
      %v1083 = vmul.f32 %v1063, %v1082
      %v1084 = vadd.f32 %v1083, 1.0
      %v1085 = vrcp.pop %v1084
      %v1086 = vmul.f32 %v1084, %v1085
      %v1087 = vsub.f32 1.0, %v1086
      %v1088 = vmul.f32 %v1085, %v1087
      %v1089 = vadd.f32 %v1085, %v1088
      %vm1090 = vweird.f32 %v1084
      %vm1091 = vweird.f32 %v1085
      %vm1092 = vmor %vm1090, %vm1091
      %v1093 = vsel %vm1092, %v1085, %v1089
      %v1094 = vand.u32 2147483647, %v1084
      %vm1095 = vcmp.eq.f32.partialorder %v1094, 8.507059e+37
      %v1096 = vand.u32 %v1084, 2147483648
      %v1097 = vor.u32 1.1754944e-38, %v1096
      %v1098 = vsel %vm1095, %v1097, %v1093
      %v1099 = vmul.f32 %v1074, %v1098
      %v1100 = vmin.f32 %v1099, 1.0
      %v1101 = vmax.f32 %v1100, -1.0
      %v1102 = vmul.f32 %v524, %v524
      %v1103 = vmin.f32 16.0, %v1102
      %v1104 = vmul.f32 %v1103, 2.1237322e-06
      %v1105 = vadd.f32 %v1104, 0.00028619796
      %v1106 = vmul.f32 %v1103, %v1105
      %v1107 = vadd.f32 %v1106, 0.0036580483
      %v1108 = vmul.f32 %v1103, %v1107
      %v1109 = vadd.f32 %v1108, 0.05243302
      %v1110 = vmul.f32 %v1103, %v1109
      %v1111 = vadd.f32 %v1110, 0.18741608
      %v1112 = vmul.f32 %v1103, %v1111
      %v1113 = vadd.f32 %v1112, 1.1283791
      %v1114 = vmul.f32 %v524, %v1113
      %v1115 = vmul.f32 %v1103, 3.8918573e-05
      %v1116 = vadd.f32 %v1115, 0.001143296
      %v1117 = vmul.f32 %v1103, %v1116
      %v1118 = vadd.f32 %v1117, 0.014752088
      %v1119 = vmul.f32 %v1103, %v1118
      %v1120 = vadd.f32 %v1119, 0.112945676
      %v1121 = vmul.f32 %v1103, %v1120
      %v1122 = vadd.f32 %v1121, 0.4994258
      %v1123 = vmul.f32 %v1103, %v1122
      %v1124 = vadd.f32 %v1123, 1.0
      %v1125 = vrcp.pop %v1124
      %v1126 = vmul.f32 %v1124, %v1125
      %v1127 = vsub.f32 1.0, %v1126
      %v1128 = vmul.f32 %v1125, %v1127
      %v1129 = vadd.f32 %v1125, %v1128
      %vm1130 = vweird.f32 %v1124
      %vm1131 = vweird.f32 %v1125
      %vm1132 = vmor %vm1130, %vm1131
      %v1133 = vsel %vm1132, %v1125, %v1129
      %v1134 = vand.u32 2147483647, %v1124
      %vm1135 = vcmp.eq.f32.partialorder %v1134, 8.507059e+37
      %v1136 = vand.u32 %v1124, 2147483648
      %v1137 = vor.u32 1.1754944e-38, %v1136
      %v1138 = vsel %vm1135, %v1137, %v1133
      %v1139 = vmul.f32 %v1114, %v1138
      %v1140 = vmin.f32 %v1139, 1.0
      %v1141 = vmax.f32 %v1140, -1.0
      %v1142 = vmul.f32 %v525, %v525
      %v1143 = vmin.f32 16.0, %v1142
      %v1144 = vmul.f32 %v1143, 2.1237322e-06
      %v1145 = vadd.f32 %v1144, 0.00028619796
      %v1146 = vmul.f32 %v1143, %v1145
      %v1147 = vadd.f32 %v1146, 0.0036580483
      %v1148 = vmul.f32 %v1143, %v1147
      %v1149 = vadd.f32 %v1148, 0.05243302
      %v1150 = vmul.f32 %v1143, %v1149
      %v1151 = vadd.f32 %v1150, 0.18741608
      %v1152 = vmul.f32 %v1143, %v1151
      %v1153 = vadd.f32 %v1152, 1.1283791
      %v1154 = vmul.f32 %v525, %v1153
      %v1155 = vmul.f32 %v1143, 3.8918573e-05
      %v1156 = vadd.f32 %v1155, 0.001143296
      %v1157 = vmul.f32 %v1143, %v1156
      %v1158 = vadd.f32 %v1157, 0.014752088
      %v1159 = vmul.f32 %v1143, %v1158
      %v1160 = vadd.f32 %v1159, 0.112945676
      %v1161 = vmul.f32 %v1143, %v1160
      %v1162 = vadd.f32 %v1161, 0.4994258
      %v1163 = vmul.f32 %v1143, %v1162
      %v1164 = vadd.f32 %v1163, 1.0
      %v1165 = vrcp.pop %v1164
      %v1166 = vmul.f32 %v1164, %v1165
      %v1167 = vsub.f32 1.0, %v1166
      %v1168 = vmul.f32 %v1165, %v1167
      %v1169 = vadd.f32 %v1165, %v1168
      %vm1170 = vweird.f32 %v1164
      %vm1171 = vweird.f32 %v1165
      %vm1172 = vmor %vm1170, %vm1171
      %v1173 = vsel %vm1172, %v1165, %v1169
      %v1174 = vand.u32 2147483647, %v1164
      %vm1175 = vcmp.eq.f32.partialorder %v1174, 8.507059e+37
      %v1176 = vand.u32 %v1164, 2147483648
      %v1177 = vor.u32 1.1754944e-38, %v1176
      %v1178 = vsel %vm1175, %v1177, %v1173
      %v1179 = vmul.f32 %v1154, %v1178
      %v1180 = vmin.f32 %v1179, 1.0
      %v1181 = vmax.f32 %v1180, -1.0
      %v1182 = vmul.f32 %v526, %v526
      %v1183 = vmin.f32 16.0, %v1182
      %v1184 = vmul.f32 %v1183, 2.1237322e-06
      %v1185 = vadd.f32 %v1184, 0.00028619796
      %v1186 = vmul.f32 %v1183, %v1185
      %v1187 = vadd.f32 %v1186, 0.0036580483
      %v1188 = vmul.f32 %v1183, %v1187
      %v1189 = vadd.f32 %v1188, 0.05243302
      %v1190 = vmul.f32 %v1183, %v1189
      %v1191 = vadd.f32 %v1190, 0.18741608
      %v1192 = vmul.f32 %v1183, %v1191
      %v1193 = vadd.f32 %v1192, 1.1283791
      %v1194 = vmul.f32 %v526, %v1193
      %v1195 = vmul.f32 %v1183, 3.8918573e-05
      %v1196 = vadd.f32 %v1195, 0.001143296
      %v1197 = vmul.f32 %v1183, %v1196
      %v1198 = vadd.f32 %v1197, 0.014752088
      %v1199 = vmul.f32 %v1183, %v1198
      %v1200 = vadd.f32 %v1199, 0.112945676
      %v1201 = vmul.f32 %v1183, %v1200
      %v1202 = vadd.f32 %v1201, 0.4994258
      %v1203 = vmul.f32 %v1183, %v1202
      %v1204 = vadd.f32 %v1203, 1.0
      %v1205 = vrcp.pop %v1204
      %v1206 = vmul.f32 %v1204, %v1205
      %v1207 = vsub.f32 1.0, %v1206
      %v1208 = vmul.f32 %v1205, %v1207
      %v1209 = vadd.f32 %v1205, %v1208
      %vm1210 = vweird.f32 %v1204
      %vm1211 = vweird.f32 %v1205
      %vm1212 = vmor %vm1210, %vm1211
      %v1213 = vsel %vm1212, %v1205, %v1209
      %v1214 = vand.u32 2147483647, %v1204
      %vm1215 = vcmp.eq.f32.partialorder %v1214, 8.507059e+37
      %v1216 = vand.u32 %v1204, 2147483648
      %v1217 = vor.u32 1.1754944e-38, %v1216
      %v1218 = vsel %vm1215, %v1217, %v1213
      %v1219 = vmul.f32 %v1194, %v1218
      %v1220 = vmin.f32 %v1219, 1.0
      %v1221 = vmax.f32 %v1220, -1.0
      %v1222 = vmul.f32 %v527, %v527
      %v1223 = vmin.f32 16.0, %v1222
      %v1224 = vmul.f32 %v1223, 2.1237322e-06
      %v1225 = vadd.f32 %v1224, 0.00028619796
      %v1226 = vmul.f32 %v1223, %v1225
      %v1227 = vadd.f32 %v1226, 0.0036580483
      %v1228 = vmul.f32 %v1223, %v1227
      %v1229 = vadd.f32 %v1228, 0.05243302
      %v1230 = vmul.f32 %v1223, %v1229
      %v1231 = vadd.f32 %v1230, 0.18741608
      %v1232 = vmul.f32 %v1223, %v1231
      %v1233 = vadd.f32 %v1232, 1.1283791
      %v1234 = vmul.f32 %v527, %v1233
      %v1235 = vmul.f32 %v1223, 3.8918573e-05
      %v1236 = vadd.f32 %v1235, 0.001143296
      %v1237 = vmul.f32 %v1223, %v1236
      %v1238 = vadd.f32 %v1237, 0.014752088
      %v1239 = vmul.f32 %v1223, %v1238
      %v1240 = vadd.f32 %v1239, 0.112945676
      %v1241 = vmul.f32 %v1223, %v1240
      %v1242 = vadd.f32 %v1241, 0.4994258
      %v1243 = vmul.f32 %v1223, %v1242
      %v1244 = vadd.f32 %v1243, 1.0
      %v1245 = vrcp.pop %v1244
      %v1246 = vmul.f32 %v1244, %v1245
      %v1247 = vsub.f32 1.0, %v1246
      %v1248 = vmul.f32 %v1245, %v1247
      %v1249 = vadd.f32 %v1245, %v1248
      %vm1250 = vweird.f32 %v1244
      %vm1251 = vweird.f32 %v1245
      %vm1252 = vmor %vm1250, %vm1251
      %v1253 = vsel %vm1252, %v1245, %v1249
      %v1254 = vand.u32 2147483647, %v1244
      %vm1255 = vcmp.eq.f32.partialorder %v1254, 8.507059e+37
      %v1256 = vand.u32 %v1244, 2147483648
      %v1257 = vor.u32 1.1754944e-38, %v1256
      %v1258 = vsel %vm1255, %v1257, %v1253
      %v1259 = vmul.f32 %v1234, %v1258
      %v1260 = vmin.f32 %v1259, 1.0
      %v1261 = vmax.f32 %v1260, -1.0
      %v1262 = vmul.f32 %v528, %v528
      %v1263 = vmin.f32 16.0, %v1262
      %v1264 = vmul.f32 %v1263, 2.1237322e-06
      %v1265 = vadd.f32 %v1264, 0.00028619796
      %v1266 = vmul.f32 %v1263, %v1265
      %v1267 = vadd.f32 %v1266, 0.0036580483
      %v1268 = vmul.f32 %v1263, %v1267
      %v1269 = vadd.f32 %v1268, 0.05243302
      %v1270 = vmul.f32 %v1263, %v1269
      %v1271 = vadd.f32 %v1270, 0.18741608
      %v1272 = vmul.f32 %v1263, %v1271
      %v1273 = vadd.f32 %v1272, 1.1283791
      %v1274 = vmul.f32 %v528, %v1273
      %v1275 = vmul.f32 %v1263, 3.8918573e-05
      %v1276 = vadd.f32 %v1275, 0.001143296
      %v1277 = vmul.f32 %v1263, %v1276
      %v1278 = vadd.f32 %v1277, 0.014752088
      %v1279 = vmul.f32 %v1263, %v1278
      %v1280 = vadd.f32 %v1279, 0.112945676
      %v1281 = vmul.f32 %v1263, %v1280
      %v1282 = vadd.f32 %v1281, 0.4994258
      %v1283 = vmul.f32 %v1263, %v1282
      %v1284 = vadd.f32 %v1283, 1.0
      %v1285 = vrcp.pop %v1284
      %v1286 = vmul.f32 %v1284, %v1285
      %v1287 = vsub.f32 1.0, %v1286
      %v1288 = vmul.f32 %v1285, %v1287
      %v1289 = vadd.f32 %v1285, %v1288
      %vm1290 = vweird.f32 %v1284
      %vm1291 = vweird.f32 %v1285
      %vm1292 = vmor %vm1290, %vm1291
      %v1293 = vsel %vm1292, %v1285, %v1289
      %v1294 = vand.u32 2147483647, %v1284
      %vm1295 = vcmp.eq.f32.partialorder %v1294, 8.507059e+37
      %v1296 = vand.u32 %v1284, 2147483648
      %v1297 = vor.u32 1.1754944e-38, %v1296
      %v1298 = vsel %vm1295, %v1297, %v1293
      %v1299 = vmul.f32 %v1274, %v1298
      %v1300 = vmin.f32 %v1299, 1.0
      %v1301 = vmax.f32 %v1300, -1.0
      %v1302 = vmul.f32 %v529, %v529
      %v1303 = vmin.f32 16.0, %v1302
      %v1304 = vmul.f32 %v1303, 2.1237322e-06
      %v1305 = vadd.f32 %v1304, 0.00028619796
      %v1306 = vmul.f32 %v1303, %v1305
      %v1307 = vadd.f32 %v1306, 0.0036580483
      %v1308 = vmul.f32 %v1303, %v1307
      %v1309 = vadd.f32 %v1308, 0.05243302
      %v1310 = vmul.f32 %v1303, %v1309
      %v1311 = vadd.f32 %v1310, 0.18741608
      %v1312 = vmul.f32 %v1303, %v1311
      %v1313 = vadd.f32 %v1312, 1.1283791
      %v1314 = vmul.f32 %v529, %v1313
      %v1315 = vmul.f32 %v1303, 3.8918573e-05
      %v1316 = vadd.f32 %v1315, 0.001143296
      %v1317 = vmul.f32 %v1303, %v1316
      %v1318 = vadd.f32 %v1317, 0.014752088
      %v1319 = vmul.f32 %v1303, %v1318
      %v1320 = vadd.f32 %v1319, 0.112945676
      %v1321 = vmul.f32 %v1303, %v1320
      %v1322 = vadd.f32 %v1321, 0.4994258
      %v1323 = vmul.f32 %v1303, %v1322
      %v1324 = vadd.f32 %v1323, 1.0
      %v1325 = vrcp.pop %v1324
      %v1326 = vmul.f32 %v1324, %v1325
      %v1327 = vsub.f32 1.0, %v1326
      %v1328 = vmul.f32 %v1325, %v1327
      %v1329 = vadd.f32 %v1325, %v1328
      %vm1330 = vweird.f32 %v1324
      %vm1331 = vweird.f32 %v1325
      %vm1332 = vmor %vm1330, %vm1331
      %v1333 = vsel %vm1332, %v1325, %v1329
      %v1334 = vand.u32 2147483647, %v1324
      %vm1335 = vcmp.eq.f32.partialorder %v1334, 8.507059e+37
      %v1336 = vand.u32 %v1324, 2147483648
      %v1337 = vor.u32 1.1754944e-38, %v1336
      %v1338 = vsel %vm1335, %v1337, %v1333
      %v1339 = vmul.f32 %v1314, %v1338
      %v1340 = vmin.f32 %v1339, 1.0
      %v1341 = vmax.f32 %v1340, -1.0
      %v1342 = vmul.f32 %v530, %v530
      %v1343 = vmin.f32 16.0, %v1342
      %v1344 = vmul.f32 %v1343, 2.1237322e-06
      %v1345 = vadd.f32 %v1344, 0.00028619796
      %v1346 = vmul.f32 %v1343, %v1345
      %v1347 = vadd.f32 %v1346, 0.0036580483
      %v1348 = vmul.f32 %v1343, %v1347
      %v1349 = vadd.f32 %v1348, 0.05243302
      %v1350 = vmul.f32 %v1343, %v1349
      %v1351 = vadd.f32 %v1350, 0.18741608
      %v1352 = vmul.f32 %v1343, %v1351
      %v1353 = vadd.f32 %v1352, 1.1283791
      %v1354 = vmul.f32 %v530, %v1353
      %v1355 = vmul.f32 %v1343, 3.8918573e-05
      %v1356 = vadd.f32 %v1355, 0.001143296
      %v1357 = vmul.f32 %v1343, %v1356
      %v1358 = vadd.f32 %v1357, 0.014752088
      %v1359 = vmul.f32 %v1343, %v1358
      %v1360 = vadd.f32 %v1359, 0.112945676
      %v1361 = vmul.f32 %v1343, %v1360
      %v1362 = vadd.f32 %v1361, 0.4994258
      %v1363 = vmul.f32 %v1343, %v1362
      %v1364 = vadd.f32 %v1363, 1.0
      %v1365 = vrcp.pop %v1364
      %v1366 = vmul.f32 %v1364, %v1365
      %v1367 = vsub.f32 1.0, %v1366
      %v1368 = vmul.f32 %v1365, %v1367
      %v1369 = vadd.f32 %v1365, %v1368
      %vm1370 = vweird.f32 %v1364
      %vm1371 = vweird.f32 %v1365
      %vm1372 = vmor %vm1370, %vm1371
      %v1373 = vsel %vm1372, %v1365, %v1369
      %v1374 = vand.u32 2147483647, %v1364
      %vm1375 = vcmp.eq.f32.partialorder %v1374, 8.507059e+37
      %v1376 = vand.u32 %v1364, 2147483648
      %v1377 = vor.u32 1.1754944e-38, %v1376
      %v1378 = vsel %vm1375, %v1377, %v1373
      %v1379 = vmul.f32 %v1354, %v1378
      %v1380 = vmin.f32 %v1379, 1.0
      %v1381 = vmax.f32 %v1380, -1.0
      %v1382 = vmul.f32 %v531, %v531
      %v1383 = vmin.f32 16.0, %v1382
      %v1384 = vmul.f32 %v1383, 2.1237322e-06
      %v1385 = vadd.f32 %v1384, 0.00028619796
      %v1386 = vmul.f32 %v1383, %v1385
      %v1387 = vadd.f32 %v1386, 0.0036580483
      %v1388 = vmul.f32 %v1383, %v1387
      %v1389 = vadd.f32 %v1388, 0.05243302
      %v1390 = vmul.f32 %v1383, %v1389
      %v1391 = vadd.f32 %v1390, 0.18741608
      %v1392 = vmul.f32 %v1383, %v1391
      %v1393 = vadd.f32 %v1392, 1.1283791
      %v1394 = vmul.f32 %v531, %v1393
      %v1395 = vmul.f32 %v1383, 3.8918573e-05
      %v1396 = vadd.f32 %v1395, 0.001143296
      %v1397 = vmul.f32 %v1383, %v1396
      %v1398 = vadd.f32 %v1397, 0.014752088
      %v1399 = vmul.f32 %v1383, %v1398
      %v1400 = vadd.f32 %v1399, 0.112945676
      %v1401 = vmul.f32 %v1383, %v1400
      %v1402 = vadd.f32 %v1401, 0.4994258
      %v1403 = vmul.f32 %v1383, %v1402
      %v1404 = vadd.f32 %v1403, 1.0
      %v1405 = vrcp.pop %v1404
      %v1406 = vmul.f32 %v1404, %v1405
      %v1407 = vsub.f32 1.0, %v1406
      %v1408 = vmul.f32 %v1405, %v1407
      %v1409 = vadd.f32 %v1405, %v1408
      %vm1410 = vweird.f32 %v1404
      %vm1411 = vweird.f32 %v1405
      %vm1412 = vmor %vm1410, %vm1411
      %v1413 = vsel %vm1412, %v1405, %v1409
      %v1414 = vand.u32 2147483647, %v1404
      %vm1415 = vcmp.eq.f32.partialorder %v1414, 8.507059e+37
      %v1416 = vand.u32 %v1404, 2147483648
      %v1417 = vor.u32 1.1754944e-38, %v1416
      %v1418 = vsel %vm1415, %v1417, %v1413
      %v1419 = vmul.f32 %v1394, %v1418
      %v1420 = vmin.f32 %v1419, 1.0
      %v1421 = vmax.f32 %v1420, -1.0
      %v1422 = vmul.f32 %v532, %v532
      %v1423 = vmin.f32 16.0, %v1422
      %v1424 = vmul.f32 %v1423, 2.1237322e-06
      %v1425 = vadd.f32 %v1424, 0.00028619796
      %v1426 = vmul.f32 %v1423, %v1425
      %v1427 = vadd.f32 %v1426, 0.0036580483
      %v1428 = vmul.f32 %v1423, %v1427
      %v1429 = vadd.f32 %v1428, 0.05243302
      %v1430 = vmul.f32 %v1423, %v1429
      %v1431 = vadd.f32 %v1430, 0.18741608
      %v1432 = vmul.f32 %v1423, %v1431
      %v1433 = vadd.f32 %v1432, 1.1283791
      %v1434 = vmul.f32 %v532, %v1433
      %v1435 = vmul.f32 %v1423, 3.8918573e-05
      %v1436 = vadd.f32 %v1435, 0.001143296
      %v1437 = vmul.f32 %v1423, %v1436
      %v1438 = vadd.f32 %v1437, 0.014752088
      %v1439 = vmul.f32 %v1423, %v1438
      %v1440 = vadd.f32 %v1439, 0.112945676
      %v1441 = vmul.f32 %v1423, %v1440
      %v1442 = vadd.f32 %v1441, 0.4994258
      %v1443 = vmul.f32 %v1423, %v1442
      %v1444 = vadd.f32 %v1443, 1.0
      %v1445 = vrcp.pop %v1444
      %v1446 = vmul.f32 %v1444, %v1445
      %v1447 = vsub.f32 1.0, %v1446
      %v1448 = vmul.f32 %v1445, %v1447
      %v1449 = vadd.f32 %v1445, %v1448
      %vm1450 = vweird.f32 %v1444
      %vm1451 = vweird.f32 %v1445
      %vm1452 = vmor %vm1450, %vm1451
      %v1453 = vsel %vm1452, %v1445, %v1449
      %v1454 = vand.u32 2147483647, %v1444
      %vm1455 = vcmp.eq.f32.partialorder %v1454, 8.507059e+37
      %v1456 = vand.u32 %v1444, 2147483648
      %v1457 = vor.u32 1.1754944e-38, %v1456
      %v1458 = vsel %vm1455, %v1457, %v1453
      %v1459 = vmul.f32 %v1434, %v1458
      %v1460 = vmin.f32 %v1459, 1.0
      %v1461 = vmax.f32 %v1460, -1.0
      %v1462 = vmul.f32 %v533, %v533
      %v1463 = vmin.f32 16.0, %v1462
      %v1464 = vmul.f32 %v1463, 2.1237322e-06
      %v1465 = vadd.f32 %v1464, 0.00028619796
      %v1466 = vmul.f32 %v1463, %v1465
      %v1467 = vadd.f32 %v1466, 0.0036580483
      %v1468 = vmul.f32 %v1463, %v1467
      %v1469 = vadd.f32 %v1468, 0.05243302
      %v1470 = vmul.f32 %v1463, %v1469
      %v1471 = vadd.f32 %v1470, 0.18741608
      %v1472 = vmul.f32 %v1463, %v1471
      %v1473 = vadd.f32 %v1472, 1.1283791
      %v1474 = vmul.f32 %v533, %v1473
      %v1475 = vmul.f32 %v1463, 3.8918573e-05
      %v1476 = vadd.f32 %v1475, 0.001143296
      %v1477 = vmul.f32 %v1463, %v1476
      %v1478 = vadd.f32 %v1477, 0.014752088
      %v1479 = vmul.f32 %v1463, %v1478
      %v1480 = vadd.f32 %v1479, 0.112945676
      %v1481 = vmul.f32 %v1463, %v1480
      %v1482 = vadd.f32 %v1481, 0.4994258
      %v1483 = vmul.f32 %v1463, %v1482
      %v1484 = vadd.f32 %v1483, 1.0
      %v1485 = vrcp.pop %v1484
      %v1486 = vmul.f32 %v1484, %v1485
      %v1487 = vsub.f32 1.0, %v1486
      %v1488 = vmul.f32 %v1485, %v1487
      %v1489 = vadd.f32 %v1485, %v1488
      %vm1490 = vweird.f32 %v1484
      %vm1491 = vweird.f32 %v1485
      %vm1492 = vmor %vm1490, %vm1491
      %v1493 = vsel %vm1492, %v1485, %v1489
      %v1494 = vand.u32 2147483647, %v1484
      %vm1495 = vcmp.eq.f32.partialorder %v1494, 8.507059e+37
      %v1496 = vand.u32 %v1484, 2147483648
      %v1497 = vor.u32 1.1754944e-38, %v1496
      %v1498 = vsel %vm1495, %v1497, %v1493
      %v1499 = vmul.f32 %v1474, %v1498
      %v1500 = vmin.f32 %v1499, 1.0
      %v1501 = vmax.f32 %v1500, -1.0
      %v1502 = vmul.f32 %v534, %v534
      %v1503 = vmin.f32 16.0, %v1502
      %v1504 = vmul.f32 %v1503, 2.1237322e-06
      %v1505 = vadd.f32 %v1504, 0.00028619796
      %v1506 = vmul.f32 %v1503, %v1505
      %v1507 = vadd.f32 %v1506, 0.0036580483
      %v1508 = vmul.f32 %v1503, %v1507
      %v1509 = vadd.f32 %v1508, 0.05243302
      %v1510 = vmul.f32 %v1503, %v1509
      %v1511 = vadd.f32 %v1510, 0.18741608
      %v1512 = vmul.f32 %v1503, %v1511
      %v1513 = vadd.f32 %v1512, 1.1283791
      %v1514 = vmul.f32 %v534, %v1513
      %v1515 = vmul.f32 %v1503, 3.8918573e-05
      %v1516 = vadd.f32 %v1515, 0.001143296
      %v1517 = vmul.f32 %v1503, %v1516
      %v1518 = vadd.f32 %v1517, 0.014752088
      %v1519 = vmul.f32 %v1503, %v1518
      %v1520 = vadd.f32 %v1519, 0.112945676
      %v1521 = vmul.f32 %v1503, %v1520
      %v1522 = vadd.f32 %v1521, 0.4994258
      %v1523 = vmul.f32 %v1503, %v1522
      %v1524 = vadd.f32 %v1523, 1.0
      %v1525 = vrcp.pop %v1524
      %v1526 = vmul.f32 %v1524, %v1525
      %v1527 = vsub.f32 1.0, %v1526
      %v1528 = vmul.f32 %v1525, %v1527
      %v1529 = vadd.f32 %v1525, %v1528
      %vm1530 = vweird.f32 %v1524
      %vm1531 = vweird.f32 %v1525
      %vm1532 = vmor %vm1530, %vm1531
      %v1533 = vsel %vm1532, %v1525, %v1529
      %v1534 = vand.u32 2147483647, %v1524
      %vm1535 = vcmp.eq.f32.partialorder %v1534, 8.507059e+37
      %v1536 = vand.u32 %v1524, 2147483648
      %v1537 = vor.u32 1.1754944e-38, %v1536
      %v1538 = vsel %vm1535, %v1537, %v1533
      %v1539 = vmul.f32 %v1514, %v1538
      %v1540 = vmin.f32 %v1539, 1.0
      %v1541 = vmax.f32 %v1540, -1.0
      %v1542 = vmul.f32 %v535, %v535
      %v1543 = vmin.f32 16.0, %v1542
      %v1544 = vmul.f32 %v1543, 2.1237322e-06
      %v1545 = vadd.f32 %v1544, 0.00028619796
      %v1546 = vmul.f32 %v1543, %v1545
      %v1547 = vadd.f32 %v1546, 0.0036580483
      %v1548 = vmul.f32 %v1543, %v1547
      %v1549 = vadd.f32 %v1548, 0.05243302
      %v1550 = vmul.f32 %v1543, %v1549
      %v1551 = vadd.f32 %v1550, 0.18741608
      %v1552 = vmul.f32 %v1543, %v1551
      %v1553 = vadd.f32 %v1552, 1.1283791
      %v1554 = vmul.f32 %v535, %v1553
      %v1555 = vmul.f32 %v1543, 3.8918573e-05
      %v1556 = vadd.f32 %v1555, 0.001143296
      %v1557 = vmul.f32 %v1543, %v1556
      %v1558 = vadd.f32 %v1557, 0.014752088
      %v1559 = vmul.f32 %v1543, %v1558
      %v1560 = vadd.f32 %v1559, 0.112945676
      %v1561 = vmul.f32 %v1543, %v1560
      %v1562 = vadd.f32 %v1561, 0.4994258
      %v1563 = vmul.f32 %v1543, %v1562
      %v1564 = vadd.f32 %v1563, 1.0
      %v1565 = vrcp.pop %v1564
      %v1566 = vmul.f32 %v1564, %v1565
      %v1567 = vsub.f32 1.0, %v1566
      %v1568 = vmul.f32 %v1565, %v1567
      %v1569 = vadd.f32 %v1565, %v1568
      %vm1570 = vweird.f32 %v1564
      %vm1571 = vweird.f32 %v1565
      %vm1572 = vmor %vm1570, %vm1571
      %v1573 = vsel %vm1572, %v1565, %v1569
      %v1574 = vand.u32 2147483647, %v1564
      %vm1575 = vcmp.eq.f32.partialorder %v1574, 8.507059e+37
      %v1576 = vand.u32 %v1564, 2147483648
      %v1577 = vor.u32 1.1754944e-38, %v1576
      %v1578 = vsel %vm1575, %v1577, %v1573
      %v1579 = vmul.f32 %v1554, %v1578
      %v1580 = vmin.f32 %v1579, 1.0
      %v1581 = vmax.f32 %v1580, -1.0
      %v1582 = vmul.f32 %v536, %v536
      %v1583 = vmin.f32 16.0, %v1582
      %v1584 = vmul.f32 %v1583, 2.1237322e-06
      %v1585 = vadd.f32 %v1584, 0.00028619796
      %v1586 = vmul.f32 %v1583, %v1585
      %v1587 = vadd.f32 %v1586, 0.0036580483
      %v1588 = vmul.f32 %v1583, %v1587
      %v1589 = vadd.f32 %v1588, 0.05243302
      %v1590 = vmul.f32 %v1583, %v1589
      %v1591 = vadd.f32 %v1590, 0.18741608
      %v1592 = vmul.f32 %v1583, %v1591
      %v1593 = vadd.f32 %v1592, 1.1283791
      %v1594 = vmul.f32 %v536, %v1593
      %v1595 = vmul.f32 %v1583, 3.8918573e-05
      %v1596 = vadd.f32 %v1595, 0.001143296
      %v1597 = vmul.f32 %v1583, %v1596
      %v1598 = vadd.f32 %v1597, 0.014752088
      %v1599 = vmul.f32 %v1583, %v1598
      %v1600 = vadd.f32 %v1599, 0.112945676
      %v1601 = vmul.f32 %v1583, %v1600
      %v1602 = vadd.f32 %v1601, 0.4994258
      %v1603 = vmul.f32 %v1583, %v1602
      %v1604 = vadd.f32 %v1603, 1.0
      %v1605 = vrcp.pop %v1604
      %v1606 = vmul.f32 %v1604, %v1605
      %v1607 = vsub.f32 1.0, %v1606
      %v1608 = vmul.f32 %v1605, %v1607
      %v1609 = vadd.f32 %v1605, %v1608
      %vm1610 = vweird.f32 %v1604
      %vm1611 = vweird.f32 %v1605
      %vm1612 = vmor %vm1610, %vm1611
      %v1613 = vsel %vm1612, %v1605, %v1609
      %v1614 = vand.u32 2147483647, %v1604
      %vm1615 = vcmp.eq.f32.partialorder %v1614, 8.507059e+37
      %v1616 = vand.u32 %v1604, 2147483648
      %v1617 = vor.u32 1.1754944e-38, %v1616
      %v1618 = vsel %vm1615, %v1617, %v1613
      %v1619 = vmul.f32 %v1594, %v1618
      %v1620 = vmin.f32 %v1619, 1.0
      %v1621 = vmax.f32 %v1620, -1.0
      %v1622 = vmul.f32 %v537, %v537
      %v1623 = vmin.f32 16.0, %v1622
      %v1624 = vmul.f32 %v1623, 2.1237322e-06
      %v1625 = vadd.f32 %v1624, 0.00028619796
      %v1626 = vmul.f32 %v1623, %v1625
      %v1627 = vadd.f32 %v1626, 0.0036580483
      %v1628 = vmul.f32 %v1623, %v1627
      %v1629 = vadd.f32 %v1628, 0.05243302
      %v1630 = vmul.f32 %v1623, %v1629
      %v1631 = vadd.f32 %v1630, 0.18741608
      %v1632 = vmul.f32 %v1623, %v1631
      %v1633 = vadd.f32 %v1632, 1.1283791
      %v1634 = vmul.f32 %v537, %v1633
      %v1635 = vmul.f32 %v1623, 3.8918573e-05
      %v1636 = vadd.f32 %v1635, 0.001143296
      %v1637 = vmul.f32 %v1623, %v1636
      %v1638 = vadd.f32 %v1637, 0.014752088
      %v1639 = vmul.f32 %v1623, %v1638
      %v1640 = vadd.f32 %v1639, 0.112945676
      %v1641 = vmul.f32 %v1623, %v1640
      %v1642 = vadd.f32 %v1641, 0.4994258
      %v1643 = vmul.f32 %v1623, %v1642
      %v1644 = vadd.f32 %v1643, 1.0
      %v1645 = vrcp.pop %v1644
      %v1646 = vmul.f32 %v1644, %v1645
      %v1647 = vsub.f32 1.0, %v1646
      %v1648 = vmul.f32 %v1645, %v1647
      %v1649 = vadd.f32 %v1645, %v1648
      %vm1650 = vweird.f32 %v1644
      %vm1651 = vweird.f32 %v1645
      %vm1652 = vmor %vm1650, %vm1651
      %v1653 = vsel %vm1652, %v1645, %v1649
      %v1654 = vand.u32 2147483647, %v1644
      %vm1655 = vcmp.eq.f32.partialorder %v1654, 8.507059e+37
      %v1656 = vand.u32 %v1644, 2147483648
      %v1657 = vor.u32 1.1754944e-38, %v1656
      %v1658 = vsel %vm1655, %v1657, %v1653
      %v1659 = vmul.f32 %v1634, %v1658
      %v1660 = vmin.f32 %v1659, 1.0
      %v1661 = vmax.f32 %v1660, -1.0
      %v1662 = vmul.f32 %v538, %v538
      %v1663 = vmin.f32 16.0, %v1662
      %v1664 = vmul.f32 %v1663, 2.1237322e-06
      %v1665 = vadd.f32 %v1664, 0.00028619796
      %v1666 = vmul.f32 %v1663, %v1665
      %v1667 = vadd.f32 %v1666, 0.0036580483
      %v1668 = vmul.f32 %v1663, %v1667
      %v1669 = vadd.f32 %v1668, 0.05243302
      %v1670 = vmul.f32 %v1663, %v1669
      %v1671 = vadd.f32 %v1670, 0.18741608
      %v1672 = vmul.f32 %v1663, %v1671
      %v1673 = vadd.f32 %v1672, 1.1283791
      %v1674 = vmul.f32 %v538, %v1673
      %v1675 = vmul.f32 %v1663, 3.8918573e-05
      %v1676 = vadd.f32 %v1675, 0.001143296
      %v1677 = vmul.f32 %v1663, %v1676
      %v1678 = vadd.f32 %v1677, 0.014752088
      %v1679 = vmul.f32 %v1663, %v1678
      %v1680 = vadd.f32 %v1679, 0.112945676
      %v1681 = vmul.f32 %v1663, %v1680
      %v1682 = vadd.f32 %v1681, 0.4994258
      %v1683 = vmul.f32 %v1663, %v1682
      %v1684 = vadd.f32 %v1683, 1.0
      %v1685 = vrcp.pop %v1684
      %v1686 = vmul.f32 %v1684, %v1685
      %v1687 = vsub.f32 1.0, %v1686
      %v1688 = vmul.f32 %v1685, %v1687
      %v1689 = vadd.f32 %v1685, %v1688
      %vm1690 = vweird.f32 %v1684
      %vm1691 = vweird.f32 %v1685
      %vm1692 = vmor %vm1690, %vm1691
      %v1693 = vsel %vm1692, %v1685, %v1689
      %v1694 = vand.u32 2147483647, %v1684
      %vm1695 = vcmp.eq.f32.partialorder %v1694, 8.507059e+37
      %v1696 = vand.u32 %v1684, 2147483648
      %v1697 = vor.u32 1.1754944e-38, %v1696
      %v1698 = vsel %vm1695, %v1697, %v1693
      %v1699 = vmul.f32 %v1674, %v1698
      %v1700 = vmin.f32 %v1699, 1.0
      %v1701 = vmax.f32 %v1700, -1.0
      %v1702 = vmul.f32 %v539, %v539
      %v1703 = vmin.f32 16.0, %v1702
      %v1704 = vmul.f32 %v1703, 2.1237322e-06
      %v1705 = vadd.f32 %v1704, 0.00028619796
      %v1706 = vmul.f32 %v1703, %v1705
      %v1707 = vadd.f32 %v1706, 0.0036580483
      %v1708 = vmul.f32 %v1703, %v1707
      %v1709 = vadd.f32 %v1708, 0.05243302
      %v1710 = vmul.f32 %v1703, %v1709
      %v1711 = vadd.f32 %v1710, 0.18741608
      %v1712 = vmul.f32 %v1703, %v1711
      %v1713 = vadd.f32 %v1712, 1.1283791
      %v1714 = vmul.f32 %v539, %v1713
      %v1715 = vmul.f32 %v1703, 3.8918573e-05
      %v1716 = vadd.f32 %v1715, 0.001143296
      %v1717 = vmul.f32 %v1703, %v1716
      %v1718 = vadd.f32 %v1717, 0.014752088
      %v1719 = vmul.f32 %v1703, %v1718
      %v1720 = vadd.f32 %v1719, 0.112945676
      %v1721 = vmul.f32 %v1703, %v1720
      %v1722 = vadd.f32 %v1721, 0.4994258
      %v1723 = vmul.f32 %v1703, %v1722
      %v1724 = vadd.f32 %v1723, 1.0
      %v1725 = vrcp.pop %v1724
      %v1726 = vmul.f32 %v1724, %v1725
      %v1727 = vsub.f32 1.0, %v1726
      %v1728 = vmul.f32 %v1725, %v1727
      %v1729 = vadd.f32 %v1725, %v1728
      %vm1730 = vweird.f32 %v1724
      %vm1731 = vweird.f32 %v1725
      %vm1732 = vmor %vm1730, %vm1731
      %v1733 = vsel %vm1732, %v1725, %v1729
      %v1734 = vand.u32 2147483647, %v1724
      %vm1735 = vcmp.eq.f32.partialorder %v1734, 8.507059e+37
      %v1736 = vand.u32 %v1724, 2147483648
      %v1737 = vor.u32 1.1754944e-38, %v1736
      %v1738 = vsel %vm1735, %v1737, %v1733
      %v1739 = vmul.f32 %v1714, %v1738
      %v1740 = vmin.f32 %v1739, 1.0
      %v1741 = vmax.f32 %v1740, -1.0
      %v1742 = vmul.f32 %v540, %v540
      %v1743 = vmin.f32 16.0, %v1742
      %v1744 = vmul.f32 %v1743, 2.1237322e-06
      %v1745 = vadd.f32 %v1744, 0.00028619796
      %v1746 = vmul.f32 %v1743, %v1745
      %v1747 = vadd.f32 %v1746, 0.0036580483
      %v1748 = vmul.f32 %v1743, %v1747
      %v1749 = vadd.f32 %v1748, 0.05243302
      %v1750 = vmul.f32 %v1743, %v1749
      %v1751 = vadd.f32 %v1750, 0.18741608
      %v1752 = vmul.f32 %v1743, %v1751
      %v1753 = vadd.f32 %v1752, 1.1283791
      %v1754 = vmul.f32 %v540, %v1753
      %v1755 = vmul.f32 %v1743, 3.8918573e-05
      %v1756 = vadd.f32 %v1755, 0.001143296
      %v1757 = vmul.f32 %v1743, %v1756
      %v1758 = vadd.f32 %v1757, 0.014752088
      %v1759 = vmul.f32 %v1743, %v1758
      %v1760 = vadd.f32 %v1759, 0.112945676
      %v1761 = vmul.f32 %v1743, %v1760
      %v1762 = vadd.f32 %v1761, 0.4994258
      %v1763 = vmul.f32 %v1743, %v1762
      %v1764 = vadd.f32 %v1763, 1.0
      %v1765 = vrcp.pop %v1764
      %v1766 = vmul.f32 %v1764, %v1765
      %v1767 = vsub.f32 1.0, %v1766
      %v1768 = vmul.f32 %v1765, %v1767
      %v1769 = vadd.f32 %v1765, %v1768
      %vm1770 = vweird.f32 %v1764
      %vm1771 = vweird.f32 %v1765
      %vm1772 = vmor %vm1770, %vm1771
      %v1773 = vsel %vm1772, %v1765, %v1769
      %v1774 = vand.u32 2147483647, %v1764
      %vm1775 = vcmp.eq.f32.partialorder %v1774, 8.507059e+37
      %v1776 = vand.u32 %v1764, 2147483648
      %v1777 = vor.u32 1.1754944e-38, %v1776
      %v1778 = vsel %vm1775, %v1777, %v1773
      %v1779 = vmul.f32 %v1754, %v1778
      %v1780 = vmin.f32 %v1779, 1.0
      %v1781 = vmax.f32 %v1780, -1.0
      %v1782 = vmul.f32 %v541, %v541
      %v1783 = vmin.f32 16.0, %v1782
      %v1784 = vmul.f32 %v1783, 2.1237322e-06
      %v1785 = vadd.f32 %v1784, 0.00028619796
      %v1786 = vmul.f32 %v1783, %v1785
      %v1787 = vadd.f32 %v1786, 0.0036580483
      %v1788 = vmul.f32 %v1783, %v1787
      %v1789 = vadd.f32 %v1788, 0.05243302
      %v1790 = vmul.f32 %v1783, %v1789
      %v1791 = vadd.f32 %v1790, 0.18741608
      %v1792 = vmul.f32 %v1783, %v1791
      %v1793 = vadd.f32 %v1792, 1.1283791
      %v1794 = vmul.f32 %v541, %v1793
      %v1795 = vmul.f32 %v1783, 3.8918573e-05
      %v1796 = vadd.f32 %v1795, 0.001143296
      %v1797 = vmul.f32 %v1783, %v1796
      %v1798 = vadd.f32 %v1797, 0.014752088
      %v1799 = vmul.f32 %v1783, %v1798
      %v1800 = vadd.f32 %v1799, 0.112945676
      %v1801 = vmul.f32 %v1783, %v1800
      %v1802 = vadd.f32 %v1801, 0.4994258
      %v1803 = vmul.f32 %v1783, %v1802
      %v1804 = vadd.f32 %v1803, 1.0
      %v1805 = vrcp.pop %v1804
      %v1806 = vmul.f32 %v1804, %v1805
      %v1807 = vsub.f32 1.0, %v1806
      %v1808 = vmul.f32 %v1805, %v1807
      %v1809 = vadd.f32 %v1805, %v1808
      %vm1810 = vweird.f32 %v1804
      %vm1811 = vweird.f32 %v1805
      %vm1812 = vmor %vm1810, %vm1811
      %v1813 = vsel %vm1812, %v1805, %v1809
      %v1814 = vand.u32 2147483647, %v1804
      %vm1815 = vcmp.eq.f32.partialorder %v1814, 8.507059e+37
      %v1816 = vand.u32 %v1804, 2147483648
      %v1817 = vor.u32 1.1754944e-38, %v1816
      %v1818 = vsel %vm1815, %v1817, %v1813
      %v1819 = vmul.f32 %v1794, %v1818
      %v1820 = vmin.f32 %v1819, 1.0
      %v1821 = vmax.f32 %v1820, -1.0
      %v1822 = vadd.f32 %v581, 1.0
      %v1823 = vadd.f32 %v621, 1.0
      %v1824 = vadd.f32 %v661, 1.0
      %v1825 = vadd.f32 %v701, 1.0
      %v1826 = vadd.f32 %v741, 1.0
      %v1827 = vadd.f32 %v781, 1.0
      %v1828 = vadd.f32 %v821, 1.0
      %v1829 = vadd.f32 %v861, 1.0
      %v1830 = vadd.f32 %v901, 1.0
      %v1831 = vadd.f32 %v941, 1.0
      %v1832 = vadd.f32 %v981, 1.0
      %v1833 = vadd.f32 %v1021, 1.0
      %v1834 = vadd.f32 %v1061, 1.0
      %v1835 = vadd.f32 %v1101, 1.0
      %v1836 = vadd.f32 %v1141, 1.0
      %v1837 = vadd.f32 %v1181, 1.0
      %v1838 = vadd.f32 %v1221, 1.0
      %v1839 = vadd.f32 %v1261, 1.0
      %v1840 = vadd.f32 %v1301, 1.0
      %v1841 = vadd.f32 %v1341, 1.0
      %v1842 = vadd.f32 %v1381, 1.0
      %v1843 = vadd.f32 %v1421, 1.0
      %v1844 = vadd.f32 %v1461, 1.0
      %v1845 = vadd.f32 %v1501, 1.0
      %v1846 = vadd.f32 %v1541, 1.0
      %v1847 = vadd.f32 %v1581, 1.0
      %v1848 = vadd.f32 %v1621, 1.0
      %v1849 = vadd.f32 %v1661, 1.0
      %v1850 = vadd.f32 %v1701, 1.0
      %v1851 = vadd.f32 %v1741, 1.0
      %v1852 = vadd.f32 %v1781, 1.0
      %v1853 = vadd.f32 %v1821, 1.0
      %v1854 = vmul.f32 %v478, %v1822
      %v1855 = vmul.f32 %v479, %v1823
      %v1856 = vmul.f32 %v480, %v1824
      %v1857 = vmul.f32 %v481, %v1825
      %v1858 = vmul.f32 %v482, %v1826
      %v1859 = vmul.f32 %v483, %v1827
      %v1860 = vmul.f32 %v484, %v1828
      %v1861 = vmul.f32 %v485, %v1829
      %v1862 = vmul.f32 %v486, %v1830
      %v1863 = vmul.f32 %v487, %v1831
      %v1864 = vmul.f32 %v488, %v1832
      %v1865 = vmul.f32 %v489, %v1833
      %v1866 = vmul.f32 %v490, %v1834
      %v1867 = vmul.f32 %v491, %v1835
      %v1868 = vmul.f32 %v492, %v1836
      %v1869 = vmul.f32 %v493, %v1837
      %v1870 = vmul.f32 %v494, %v1838
      %v1871 = vmul.f32 %v495, %v1839
      %v1872 = vmul.f32 %v496, %v1840
      %v1873 = vmul.f32 %v497, %v1841
      %v1874 = vmul.f32 %v498, %v1842
      %v1875 = vmul.f32 %v499, %v1843
      %v1876 = vmul.f32 %v500, %v1844
      %v1877 = vmul.f32 %v501, %v1845
      %v1878 = vmul.f32 %v502, %v1846
      %v1879 = vmul.f32 %v503, %v1847
      %v1880 = vmul.f32 %v504, %v1848
      %v1881 = vmul.f32 %v505, %v1849
      %v1882 = vmul.f32 %v506, %v1850
      %v1883 = vmul.f32 %v507, %v1851
      %v1884 = vmul.f32 %v508, %v1852
      %v1885 = vmul.f32 %v509, %v1853
      %v1886 = vld [vmem:[%s3] sm:$0xff]
      %v1887 = vld [vmem:[%s3 + $0x8] sm:$0xff]
      %v1888 = vld [vmem:[%s3 + $0x10] sm:$0xff]
      %v1889 = vld [vmem:[%s3 + $0x18] sm:$0xff]
      %v1890 = vld [vmem:[%s3 + $0x20] sm:$0xff]
      %v1891 = vld [vmem:[%s3 + $0x28] sm:$0xff]
      %v1892 = vld [vmem:[%s3 + $0x30] sm:$0xff]
      %v1893 = vld [vmem:[%s3 + $0x38] sm:$0xff]
      %v1894 = vld [vmem:[%s3 + $0x40] sm:$0xff]
      %v1895 = vld [vmem:[%s3 + $0x48] sm:$0xff]
      %v1896 = vld [vmem:[%s3 + $0x50] sm:$0xff]
      %v1897 = vld [vmem:[%s3 + $0x58] sm:$0xff]
      %v1898 = vld [vmem:[%s3 + $0x60] sm:$0xff]
      %v1899 = vld [vmem:[%s3 + $0x68] sm:$0xff]
      %v1900 = vld [vmem:[%s3 + $0x70] sm:$0xff]
      %v1901 = vld [vmem:[%s3 + $0x78] sm:$0xff]
      %1902 = vmatpush.msra.mxu0 %v1901
      %1903 = vmatpush.msra.mxu0 %v1900
      %1904 = vmatpush.msra.mxu0 %v1899
      %1905 = vmatpush.msra.mxu0 %v1898
      %1906 = vmatpush.msra.mxu0 %v1897
      %1907 = vmatpush.msra.mxu0 %v1896
      %1908 = vmatpush.msra.mxu0 %v1895
      %1909 = vmatpush.msra.mxu0 %v1894
      %1910 = vmatpush.msra.mxu0 %v1893
      %1911 = vmatpush.msra.mxu0 %v1892
      %1912 = vmatpush.msra.mxu0 %v1891
      %1913 = vmatpush.msra.mxu0 %v1890
      %1914 = vmatpush.msra.mxu0 %v1889
      %1915 = vmatpush.msra.mxu0 %v1888
      %1916 = vmatpush.msra.mxu0 %v1887
      %1917 = vmatpush.msra.mxu0 %v1886
      %1918 = vmatmul.f32.gmra.mxu0 %v1854
      %v1919 = vpop.f32.mrf.mxu0
      %v1920 = vadd.f32 0.0, %v1919
      %1921 = vmatmul.f32.gmra.mxu0 %v1855
      %v1922 = vpop.f32.mrf.mxu0
      %v1923 = vadd.f32 0.0, %v1922
      %1924 = vmatmul.f32.gmra.mxu0 %v1856
      %v1925 = vpop.f32.mrf.mxu0
      %v1926 = vadd.f32 0.0, %v1925
      %1927 = vmatmul.f32.gmra.mxu0 %v1857
      %v1928 = vpop.f32.mrf.mxu0
      %v1929 = vadd.f32 0.0, %v1928
      %1930 = vmatmul.f32.gmra.mxu0 %v1858
      %v1931 = vpop.f32.mrf.mxu0
      %v1932 = vadd.f32 0.0, %v1931
      %1933 = vmatmul.f32.gmra.mxu0 %v1859
      %v1934 = vpop.f32.mrf.mxu0
      %v1935 = vadd.f32 0.0, %v1934
      %1936 = vmatmul.f32.gmra.mxu0 %v1860
      %v1937 = vpop.f32.mrf.mxu0
      %v1938 = vadd.f32 0.0, %v1937
      %1939 = vmatmul.f32.gmra.mxu0 %v1861
      %v1940 = vpop.f32.mrf.mxu0
      %v1941 = vadd.f32 0.0, %v1940
      %1942 = vmatmul.f32.gmra.mxu0 %v1862
      %v1943 = vpop.f32.mrf.mxu0
      %v1944 = vadd.f32 0.0, %v1943
      %1945 = vmatmul.f32.gmra.mxu0 %v1863
      %v1946 = vpop.f32.mrf.mxu0
      %v1947 = vadd.f32 0.0, %v1946
      %1948 = vmatmul.f32.gmra.mxu0 %v1864
      %v1949 = vpop.f32.mrf.mxu0
      %v1950 = vadd.f32 0.0, %v1949
      %1951 = vmatmul.f32.gmra.mxu0 %v1865
      %v1952 = vpop.f32.mrf.mxu0
      %v1953 = vadd.f32 0.0, %v1952
      %1954 = vmatmul.f32.gmra.mxu0 %v1866
      %v1955 = vpop.f32.mrf.mxu0
      %v1956 = vadd.f32 0.0, %v1955
      %1957 = vmatmul.f32.gmra.mxu0 %v1867
      %v1958 = vpop.f32.mrf.mxu0
      %v1959 = vadd.f32 0.0, %v1958
      %1960 = vmatmul.f32.gmra.mxu0 %v1868
      %v1961 = vpop.f32.mrf.mxu0
      %v1962 = vadd.f32 0.0, %v1961
      %1963 = vmatmul.f32.gmra.mxu0 %v1869
      %v1964 = vpop.f32.mrf.mxu0
      %v1965 = vadd.f32 0.0, %v1964
      %1966 = vmatmul.f32.gmra.mxu0 %v1870
      %v1967 = vpop.f32.mrf.mxu0
      %v1968 = vadd.f32 0.0, %v1967
      %1969 = vmatmul.f32.gmra.mxu0 %v1871
      %v1970 = vpop.f32.mrf.mxu0
      %v1971 = vadd.f32 0.0, %v1970
      %1972 = vmatmul.f32.gmra.mxu0 %v1872
      %v1973 = vpop.f32.mrf.mxu0
      %v1974 = vadd.f32 0.0, %v1973
      %1975 = vmatmul.f32.gmra.mxu0 %v1873
      %v1976 = vpop.f32.mrf.mxu0
      %v1977 = vadd.f32 0.0, %v1976
      %1978 = vmatmul.f32.gmra.mxu0 %v1874
      %v1979 = vpop.f32.mrf.mxu0
      %v1980 = vadd.f32 0.0, %v1979
      %1981 = vmatmul.f32.gmra.mxu0 %v1875
      %v1982 = vpop.f32.mrf.mxu0
      %v1983 = vadd.f32 0.0, %v1982
      %1984 = vmatmul.f32.gmra.mxu0 %v1876
      %v1985 = vpop.f32.mrf.mxu0
      %v1986 = vadd.f32 0.0, %v1985
      %1987 = vmatmul.f32.gmra.mxu0 %v1877
      %v1988 = vpop.f32.mrf.mxu0
      %v1989 = vadd.f32 0.0, %v1988
      %1990 = vmatmul.f32.gmra.mxu0 %v1878
      %v1991 = vpop.f32.mrf.mxu0
      %v1992 = vadd.f32 0.0, %v1991
      %1993 = vmatmul.f32.gmra.mxu0 %v1879
      %v1994 = vpop.f32.mrf.mxu0
      %v1995 = vadd.f32 0.0, %v1994
      %1996 = vmatmul.f32.gmra.mxu0 %v1880
      %v1997 = vpop.f32.mrf.mxu0
      %v1998 = vadd.f32 0.0, %v1997
      %1999 = vmatmul.f32.gmra.mxu0 %v1881
      %v2000 = vpop.f32.mrf.mxu0
      %v2001 = vadd.f32 0.0, %v2000
      %2002 = vmatmul.f32.gmra.mxu0 %v1882
      %v2003 = vpop.f32.mrf.mxu0
      %v2004 = vadd.f32 0.0, %v2003
      %2005 = vmatmul.f32.gmra.mxu0 %v1883
      %v2006 = vpop.f32.mrf.mxu0
      %v2007 = vadd.f32 0.0, %v2006
      %2008 = vmatmul.f32.gmra.mxu0 %v1884
      %v2009 = vpop.f32.mrf.mxu0
      %v2010 = vadd.f32 0.0, %v2009
      %2011 = vmatmul.f32.gmra.mxu0 %v1885
      %v2012 = vpop.f32.mrf.mxu0
      %v2013 = vadd.f32 0.0, %v2012
      %2014 = vdwg.mxu0
      %v2015 = vadd.f32 %v228, %v1920
      %v2016 = vadd.f32 %v229, %v1923
      %v2017 = vadd.f32 %v230, %v1926
      %v2018 = vadd.f32 %v231, %v1929
      %v2019 = vadd.f32 %v232, %v1932
      %v2020 = vadd.f32 %v233, %v1935
      %v2021 = vadd.f32 %v234, %v1938
      %v2022 = vadd.f32 %v235, %v1941
      %v2023 = vadd.f32 %v236, %v1944
      %v2024 = vadd.f32 %v237, %v1947
      %v2025 = vadd.f32 %v238, %v1950
      %v2026 = vadd.f32 %v239, %v1953
      %v2027 = vadd.f32 %v240, %v1956
      %v2028 = vadd.f32 %v241, %v1959
      %v2029 = vadd.f32 %v242, %v1962
      %v2030 = vadd.f32 %v243, %v1965
      %v2031 = vadd.f32 %v244, %v1968
      %v2032 = vadd.f32 %v245, %v1971
      %v2033 = vadd.f32 %v246, %v1974
      %v2034 = vadd.f32 %v247, %v1977
      %v2035 = vadd.f32 %v248, %v1980
      %v2036 = vadd.f32 %v249, %v1983
      %v2037 = vadd.f32 %v250, %v1986
      %v2038 = vadd.f32 %v251, %v1989
      %v2039 = vadd.f32 %v252, %v1992
      %v2040 = vadd.f32 %v253, %v1995
      %v2041 = vadd.f32 %v254, %v1998
      %v2042 = vadd.f32 %v255, %v2001
      %v2043 = vadd.f32 %v256, %v2004
      %v2044 = vadd.f32 %v257, %v2007
      %v2045 = vadd.f32 %v258, %v2010
      %v2046 = vadd.f32 %v259, %v2013
      %v2047 = vld [vmem:[%s4] sm:$0x1]
      %v2049 = vperm.slane %v2047, 0
      %v2051 = vadd.f32 %v2015, %v2049
      %v2052 = vadd.f32 %v2016, %v2049
      %v2053 = vadd.f32 %v2017, %v2049
      %v2054 = vadd.f32 %v2018, %v2049
      %v2055 = vadd.f32 %v2019, %v2049
      %v2056 = vadd.f32 %v2020, %v2049
      %v2057 = vadd.f32 %v2021, %v2049
      %v2058 = vadd.f32 %v2022, %v2049
      %v2059 = vadd.f32 %v2023, %v2049
      %v2060 = vadd.f32 %v2024, %v2049
      %v2061 = vadd.f32 %v2025, %v2049
      %v2062 = vadd.f32 %v2026, %v2049
      %v2063 = vadd.f32 %v2027, %v2049
      %v2064 = vadd.f32 %v2028, %v2049
      %v2065 = vadd.f32 %v2029, %v2049
      %v2066 = vadd.f32 %v2030, %v2049
      %v2067 = vadd.f32 %v2031, %v2049
      %v2068 = vadd.f32 %v2032, %v2049
      %v2069 = vadd.f32 %v2033, %v2049
      %v2070 = vadd.f32 %v2034, %v2049
      %v2071 = vadd.f32 %v2035, %v2049
      %v2072 = vadd.f32 %v2036, %v2049
      %v2073 = vadd.f32 %v2037, %v2049
      %v2074 = vadd.f32 %v2038, %v2049
      %v2075 = vadd.f32 %v2039, %v2049
      %v2076 = vadd.f32 %v2040, %v2049
      %v2077 = vadd.f32 %v2041, %v2049
      %v2078 = vadd.f32 %v2042, %v2049
      %v2079 = vadd.f32 %v2043, %v2049
      %v2080 = vadd.f32 %v2044, %v2049
      %v2081 = vadd.f32 %v2045, %v2049
      %v2082 = vadd.f32 %v2046, %v2049
      %2083 = vst.msk [vmem:[%s226] sm:$0xff] %vm268, %v2051
      %2084 = vst.msk [vmem:[%s226 + $0x8] sm:$0xff] %vm268, %v2052
      %2085 = vst.msk [vmem:[%s226 + $0x10] sm:$0xff] %vm268, %v2053
      %2086 = vst.msk [vmem:[%s226 + $0x18] sm:$0xff] %vm268, %v2054
      %2087 = vst.msk [vmem:[%s226 + $0x20] sm:$0xff] %vm268, %v2055
      %2088 = vst.msk [vmem:[%s226 + $0x28] sm:$0xff] %vm268, %v2056
      %2089 = vst.msk [vmem:[%s226 + $0x30] sm:$0xff] %vm268, %v2057
      %2090 = vst.msk [vmem:[%s226 + $0x38] sm:$0xff] %vm268, %v2058
      %2091 = vst.msk [vmem:[%s226 + $0x40] sm:$0xff] %vm268, %v2059
      %2092 = vst.msk [vmem:[%s226 + $0x48] sm:$0xff] %vm268, %v2060
      %2093 = vst.msk [vmem:[%s226 + $0x50] sm:$0xff] %vm268, %v2061
      %2094 = vst.msk [vmem:[%s226 + $0x58] sm:$0xff] %vm268, %v2062
      %2095 = vst.msk [vmem:[%s226 + $0x60] sm:$0xff] %vm268, %v2063
      %2096 = vst.msk [vmem:[%s226 + $0x68] sm:$0xff] %vm268, %v2064
      %2097 = vst.msk [vmem:[%s226 + $0x70] sm:$0xff] %vm268, %v2065
      %2098 = vst.msk [vmem:[%s226 + $0x78] sm:$0xff] %vm268, %v2066
      %2099 = vst.msk [vmem:[%s226 + $0x80] sm:$0xff] %vm268, %v2067
      %2100 = vst.msk [vmem:[%s226 + $0x88] sm:$0xff] %vm268, %v2068
      %2101 = vst.msk [vmem:[%s226 + $0x90] sm:$0xff] %vm268, %v2069
      %2102 = vst.msk [vmem:[%s226 + $0x98] sm:$0xff] %vm268, %v2070
      %2103 = vst.msk [vmem:[%s226 + $0xa0] sm:$0xff] %vm268, %v2071
      %2104 = vst.msk [vmem:[%s226 + $0xa8] sm:$0xff] %vm268, %v2072
      %2105 = vst.msk [vmem:[%s226 + $0xb0] sm:$0xff] %vm268, %v2073
      %2106 = vst.msk [vmem:[%s226 + $0xb8] sm:$0xff] %vm268, %v2074
      %2107 = vst.msk [vmem:[%s226 + $0xc0] sm:$0xff] %vm268, %v2075
      %2108 = vst.msk [vmem:[%s226 + $0xc8] sm:$0xff] %vm268, %v2076
      %2109 = vst.msk [vmem:[%s226 + $0xd0] sm:$0xff] %vm268, %v2077
      %2110 = vst.msk [vmem:[%s226 + $0xd8] sm:$0xff] %vm268, %v2078
      %2111 = vst.msk [vmem:[%s226 + $0xe0] sm:$0xff] %vm268, %v2079
      %2112 = vst.msk [vmem:[%s226 + $0xe8] sm:$0xff] %vm268, %v2080
      %2113 = vst.msk [vmem:[%s226 + $0xf0] sm:$0xff] %vm268, %v2081
      %2114 = vst.msk [vmem:[%s226 + $0xf8] sm:$0xff] %vm268, %v2082
      %s2115 = smul.u32 32, %s16
      %p2116 = scmp.lt.s32.totalorder %s2115, 63
      %s2117 = scalar_select %p2116, %s2115, 63
      %s2118 = smul.addr %s2117, 8
      %s2119 = scalar_lea.vmem %s5, %s2118
      // Predicated region
      $region41: #{swin_encoder_block.8} parent=39 // pred_check
        %p2120 = pneg %p144
      $region42: #{swin_encoder_block.8} parent=39 // pred_check_branch
        %2122 = sbr.rel (%p2120) target = $region44
      $region43: #{swin_encoder_block.8} parent=39 // pred_region
        %s2123 = smul.u32 32, %s16
      $region44: #{swin_encoder_block.8} parent=39 // pred_fallthru
        _
    $region40: #{swin_encoder_block.8} parent=5 // pred_fallthru
      _
    %p2124 = scmp.le.s32.totalorder 2, %s11
    // Predicated region
    $region45: #{swin_encoder_block.8} parent=5 // pred_check
      %p2125 = pneg %p2124
    $region46: #{swin_encoder_block.8} parent=5 // pred_check_branch
      %2127 = sbr.rel (%p2125) target = $region48
    $region47: #{swin_encoder_block.8} parent=5 // pred_region
      %s2128 = ssub.s32 %s11, 2
      // Predicated region
      $region49: #{swin_encoder_block.8} parent=47 // pred_check
        %p2129 = pneg %p150
      $region50: #{swin_encoder_block.8} parent=47 // pred_check_branch
        %2131 = sbr.rel (%p2129) target = $region52
      $region51: #{swin_encoder_block.8} parent=47 // pred_region
        %s2132 = smul.u32 32, %s17
        %p2133 = scmp.lt.s32.totalorder %s2132, 63
        %s2134 = scalar_select %p2133, %s2132, 63
        %s2135 = smul.addr %s2134, 8
        %s2136 = scalar_lea.vmem %s5, %s2135
      $region52: #{swin_encoder_block.8} parent=47 // pred_fallthru
        _
    $region48: #{swin_encoder_block.8} parent=5 // pred_fallthru
      _
  $region6: #{swin_encoder_block.8} parent=0 // loop_footer
    %s15 = sadd.s32 1, %s11
  $region7: #{swin_encoder_block.8} parent=0 // loop_footer_branch
    %10 = sbr.rel target = $region3
  $region8: #{swin_encoder_block.8} parent=0 // loop_exit
    _

</llo_original>
